<compile_context>
chip_gen: v6e
topology: v6e:2x2x1
jax: 0.10.0
libtpu: 0.0.40
codegen_flags: <defaults>
</compile_context>

<pallas_src>
import jax
import jax.numpy as jnp
from jax.experimental import pallas as pl
from jax.experimental.pallas import tpu as pltpu


def _round_up(v, m):
    return ((v + m - 1) // m) * m


# ---------------------------------------------------------------------------
# XLA glue: channel-major, phase-major im2col patches
# ---------------------------------------------------------------------------
def _build_patches_t(x_nchw, kp, qp):
    """(N, C, H, W) -> (Kp, N*4*Qp) bf16 patches.

    Row k (< 9*C) is conv tap (k // C) and input channel (k % C); rows are
    zero-padded up to Kp.  Columns are ordered (image, pool-phase, pooled
    pixel y2*W2 + x2), each per-phase slab zero-padded to Qp columns.
    """
    n, c, h, w = x_nchw.shape
    h2, w2 = h // 2, w // 2
    q = h2 * w2
    xp = jnp.pad(x_nchw.astype(jnp.bfloat16), ((0, 0), (0, 0), (1, 1), (1, 1)))
    slabs = []
    for dy in range(3):
        for dx in range(3):
            s = xp[:, :, dy:dy + h, dx:dx + w]            # (N, C, H, W)
            s = s.reshape(n, c, h2, 2, w2, 2)             # (n, c, y2, py, x2, px)
            s = jnp.transpose(s, (1, 0, 3, 5, 2, 4))      # (c, n, py, px, y2, x2)
            slabs.append(s.reshape(c, n, 4, q))           # phase = 2*py + px
    p = jnp.stack(slabs, axis=0)                          # (9, C, N, 4, Q)
    if qp > q:
        p = jnp.pad(p, ((0, 0), (0, 0), (0, 0), (0, 0), (0, qp - q)))
    p = p.reshape(9 * c, n * 4 * qp)
    if kp > 9 * c:
        p = jnp.pad(p, ((0, kp - 9 * c), (0, 0)))
    return p


# ---------------------------------------------------------------------------
# Fused Conv2d(3x3) + BatchNorm(eval) + LeakyReLU(0.01) + MaxPool2d(2,2)
# ---------------------------------------------------------------------------
def _conv_bn_lrelu_pool_kernel(p_ref, w_ref, shift_ref, o_ref):
    # p_ref: (Kp, 4*Qp) bf16   w_ref: (Cout, Kp) bf16 (BN scale folded in)
    # shift_ref: (Cout, 1) f32   o_ref: (Cout, Qp) f32 (lane-dense, Qp % 128 == 0)
    acc = jnp.dot(w_ref[...], p_ref[...], preferred_element_type=jnp.float32)
    y = acc + shift_ref[...]                      # conv bias + BN affine (folded)
    y = jnp.where(y > 0, y, 0.01 * y)             # LeakyReLU(negative_slope=0.01)
    qp = o_ref.shape[-1]
    pooled = jnp.maximum(
        jnp.maximum(y[:, 0 * qp:1 * qp], y[:, 1 * qp:2 * qp]),
        jnp.maximum(y[:, 2 * qp:3 * qp], y[:, 3 * qp:4 * qp]),
    )                                             # 2x2 max over the 4 phase slabs
    o_ref[...] = pooled.astype(o_ref.dtype)


def conv_bn_lrelu_pool(x_nchw, w_t, shift):
    n, c, h, w = x_nchw.shape
    cout, kp = w_t.shape
    h2, w2 = h // 2, w // 2
    q = h2 * w2
    qp = _round_up(q, 128)
    patches = _build_patches_t(x_nchw, kp, qp)            # (Kp, N*4*Qp) bf16

    out = pl.pallas_call(
        _conv_bn_lrelu_pool_kernel,
        out_shape=jax.ShapeDtypeStruct((n * cout, qp), jnp.float32),
        grid=(n,),                                         # one image per step
        in_specs=[
            pl.BlockSpec((kp, 4 * qp), lambda i: (0, i)),  # this image's patches
            pl.BlockSpec((cout, kp), lambda i: (0, 0)),    # weights (resident)
            pl.BlockSpec((cout, 1), lambda i: (0, 0)),     # shift (resident)
        ],
        out_specs=pl.BlockSpec((cout, qp), lambda i: (i, 0)),
        compiler_params=pltpu.CompilerParams(
            dimension_semantics=("parallel",)),            # >=2 steps -> v7x 2 TCs
    )(patches, w_t, shift)

    # (N*Cout, Qp) -> drop lane padding -> pooled NCHW map for the next layer.
    return out.reshape(n, cout, qp)[:, :, :q].reshape(n, cout, h2, w2)


# ---------------------------------------------------------------------------
# Fused fc1 + fc2 + fc3 (Dropout = identity in eval mode)
# ---------------------------------------------------------------------------
def _mlp_kernel(x_ref, w1_ref, b1_ref, w2_ref, b2_ref, w3_ref, b3_ref, o_ref):
    h1 = jnp.dot(x_ref[...], w1_ref[...],
                 preferred_element_type=jnp.float32) + b1_ref[...]
    h2 = jnp.dot(h1.astype(w2_ref.dtype), w2_ref[...],
                 preferred_element_type=jnp.float32) + b2_ref[...]
    o_ref[...] = (jnp.dot(h2.astype(w3_ref.dtype), w3_ref[...],
                          preferred_element_type=jnp.float32)
                  + b3_ref[...]).astype(o_ref.dtype)


def fused_mlp(feat, w1, b1, w2, b2, w3, b3):
    n = feat.shape[0]
    out_c = w3.shape[1]
    # No grid: all operands live fully in VMEM (weights total < 0.5 MiB).
    return pl.pallas_call(
        _mlp_kernel,
        out_shape=jax.ShapeDtypeStruct((n, out_c), jnp.float32),
    )(feat.astype(jnp.bfloat16), w1, b1, w2, b2, w3, b3)


# ---------------------------------------------------------------------------
# Parameter init (deterministic, synthetic)
# ---------------------------------------------------------------------------
def _init_conv_block(key, cin, cout):
    kw, kb, kg, kbt = jax.random.split(key, 4)
    w9 = jax.random.normal(kw, (9, cin, cout), jnp.float32) / jnp.sqrt(9.0 * cin)
    bias = 0.1 * jax.random.normal(kb, (cout,), jnp.float32)
    gamma = 1.0 + 0.1 * jax.random.normal(kg, (cout,), jnp.float32)
    beta = 0.1 * jax.random.normal(kbt, (cout,), jnp.float32)
    # BatchNorm eval mode, default running stats (mean=0, var=1, eps=1e-5);
    # conv bias folded into the affine shift, BN scale folded into the weights.
    eps = 1e-5
    running_mean = jnp.zeros((cout,), jnp.float32)
    running_var = jnp.ones((cout,), jnp.float32)
    scale = gamma / jnp.sqrt(running_var + eps)
    shift = beta + (bias - running_mean) * scale
    k = 9 * cin
    kp = _round_up(k, 16)                                  # aligned K for bf16 MXU
    w_t = jnp.transpose(w9, (2, 0, 1)).reshape(cout, k)    # K order = (tap, cin)
    w_t = w_t * scale[:, None]
    if kp > k:
        w_t = jnp.pad(w_t, ((0, 0), (0, kp - k)))
    return {"w_t": w_t.astype(jnp.bfloat16),
            "shift": shift.reshape(cout, 1).astype(jnp.float32)}


def _init_linear(key, fin, fout):
    kw, kb = jax.random.split(key)
    w = (jax.random.normal(kw, (fin, fout), jnp.float32)
         / jnp.sqrt(float(fin))).astype(jnp.bfloat16)
    b = 0.1 * jax.random.normal(kb, (1, fout), jnp.float32)
    return w, b


def init_params(key, in_c, c1, c2, c3, n1, n2, out_c):
    ks = jax.random.split(key, 6)
    return {
        "conv": [
            _init_conv_block(ks[0], in_c, c1),
            _init_conv_block(ks[1], c1, c2),
            _init_conv_block(ks[2], c2, c3),
        ],
        "fc1": _init_linear(ks[3], c3 * 10 * 9, n1),
        "fc2": _init_linear(ks[4], n1, n2),
        "fc3": _init_linear(ks[5], n2, out_c),
    }


# ---------------------------------------------------------------------------
# Forward pass
# ---------------------------------------------------------------------------
@jax.jit
def picture_net_forward(params, x_nchw):
    x = x_nchw.astype(jnp.float32)                        # NCHW (PyTorch layout)
    for layer in params["conv"]:
        x = conv_bn_lrelu_pool(x, layer["w_t"], layer["shift"])
    n, c3, hp, wp = x.shape                               # (N, C3, 10, 9)
    feat = x.reshape(n, c3 * hp * wp)                     # NCHW flatten == PyTorch
    # Dropout(p=0.5) after fc1/fc2 is the identity in eval mode.
    # TODO(synk): training-mode Dropout masks / BatchNorm batch statistics are
    # not implemented (eval-mode semantics used).
    (w1, b1), (w2, b2), (w3, b3) = params["fc1"], params["fc2"], params["fc3"]
    return fused_mlp(feat, w1, b1, w2, b2, w3, b3)


# ---------------------------------------------------------------------------
# main
# ---------------------------------------------------------------------------
if __name__ == "__main__":
    key = jax.random.PRNGKey(0)
    in_c, c1, c2, c3, n1, n2, out_c = 3, 8, 16, 32, 64, 32, 10
    params = init_params(key, in_c, c1, c2, c3, n1, n2, out_c)

    # Spatial size must be 80 x 72 so that three 2x2 maxpools yield 10 x 9,
    # matching nn.Linear(channel_3 * 10 * 9, node_1) in fc1.
    x = jax.random.normal(jax.random.fold_in(key, 123), (2, in_c, 80, 72),
                          jnp.float32)

    scores = jax.block_until_ready(picture_net_forward(params, x))
    assert scores.shape == (2, out_c), scores.shape
    assert bool(jnp.all(jnp.isfinite(scores)))
    print("KERNEL_OK")
</pallas_src>

<mosaic_0001>
module attributes {stable_mosaic.version = 11 : i64} {
  func.func @_conv_bn_lrelu_pool_kernel(%arg0: i32, %arg1: memref<32x6144xbf16, #tpu.memory_space<vmem>>, %arg2: memref<8x32xbf16, #tpu.memory_space<vmem>>, %arg3: memref<8x1xf32, #tpu.memory_space<vmem>>, %arg4: memref<8x1536xf32, #tpu.memory_space<vmem>>) attributes {dimension_semantics = [#tpu.dimension_semantics<parallel>], iteration_bounds = array<i64: 2>, scalar_prefetch = 0 : i64, scratch_operands = 0 : i64, tpu.core_type = #tpu.core_type<tc>, window_params = [{transform_indices = @transform_0, window_bounds = array<i64: 32, 6144>}, {pipeline_mode = #tpu.pipeline_mode<synchronous>, transform_indices = @transform_1, window_bounds = array<i64: 8, 32>}, {pipeline_mode = #tpu.pipeline_mode<synchronous>, transform_indices = @transform_2, window_bounds = array<i64: 8, 1>}, {transform_indices = @transform_3, window_bounds = array<i64: 8, 1536>}]} {
    %c0 = arith.constant 0 : index
    %c0_0 = arith.constant 0 : index
    %0 = vector.load %arg2[%c0, %c0_0] : memref<8x32xbf16, #tpu.memory_space<vmem>>, vector<8x32xbf16>
    %c0_1 = arith.constant 0 : index
    %c0_2 = arith.constant 0 : index
    %1 = vector.load %arg1[%c0_1, %c0_2] : memref<32x6144xbf16, #tpu.memory_space<vmem>>, vector<32x6144xbf16>
    %cst = arith.constant dense<0.000000e+00> : vector<8x6144xf32>
    %2 = tpu.matmul %0, %1, %cst {dimension_numbers = #tpu.dot_dimension_numbers<[1], [0], [0], [1], [0, 0, 1, 1], [], []>} : vector<8x32xbf16>, vector<32x6144xbf16>, vector<8x6144xf32> -> vector<8x6144xf32>
    %c0_3 = arith.constant 0 : index
    %c0_4 = arith.constant 0 : index
    %3 = vector.load %arg3[%c0_3, %c0_4] : memref<8x1xf32, #tpu.memory_space<vmem>>, vector<8x1xf32>
    %4 = vector.broadcast %3 : vector<8x1xf32> to vector<8x6144xf32>
    %5 = arith.addf %2, %4 : vector<8x6144xf32>
    %cst_5 = arith.constant 0.000000e+00 : f32
    %6 = vector.broadcast %cst_5 : f32 to vector<8x6144xf32>
    %7 = arith.cmpf ogt, %5, %6 : vector<8x6144xf32>
    %cst_6 = arith.constant 0.00999999977 : f32
    %8 = vector.broadcast %cst_6 : f32 to vector<8x6144xf32>
    %9 = arith.mulf %8, %5 : vector<8x6144xf32>
    %10 = arith.select %7, %5, %9 : vector<8x6144xi1>, vector<8x6144xf32>
    %11 = vector.extract_strided_slice %10 {offsets = [0, 0], sizes = [8, 1536], strides = [1, 1]} : vector<8x6144xf32> to vector<8x1536xf32>
    %12 = vector.extract_strided_slice %10 {offsets = [0, 1536], sizes = [8, 1536], strides = [1, 1]} : vector<8x6144xf32> to vector<8x1536xf32>
    %13 = arith.maximumf %11, %12 : vector<8x1536xf32>
    %14 = vector.extract_strided_slice %10 {offsets = [0, 3072], sizes = [8, 1536], strides = [1, 1]} : vector<8x6144xf32> to vector<8x1536xf32>
    %15 = vector.extract_strided_slice %10 {offsets = [0, 4608], sizes = [8, 1536], strides = [1, 1]} : vector<8x6144xf32> to vector<8x1536xf32>
    %16 = arith.maximumf %14, %15 : vector<8x1536xf32>
    %17 = arith.maximumf %13, %16 : vector<8x1536xf32>
    %c0_7 = arith.constant 0 : index
    %c0_8 = arith.constant 0 : index
    %18 = vector.load %arg4[%c0_7, %c0_8] : memref<8x1536xf32, #tpu.memory_space<vmem>>, vector<8x1536xf32>
    tpu.vector_store %arg4[%c0_7, %c0_8], %17 {strides = array<i32>} : memref<8x1536xf32, #tpu.memory_space<vmem>>, vector<8x1536xf32>,
    return
  }
  func.func @transform_0(%arg0: i32) -> (i32, i32) {
    %c0_i32 = arith.constant 0 : i32
    %c0_i32_0 = arith.constant 0 : i32
    return %c0_i32, %arg0 : i32, i32
  }
  func.func @transform_1(%arg0: i32) -> (i32, i32) {
    %c0_i32 = arith.constant 0 : i32
    %c0_i32_0 = arith.constant 0 : i32
    %c0_i32_1 = arith.constant 0 : i32
    return %c0_i32, %c0_i32_0 : i32, i32
  }
  func.func @transform_2(%arg0: i32) -> (i32, i32) {
    %c0_i32 = arith.constant 0 : i32
    %c0_i32_0 = arith.constant 0 : i32
    %c0_i32_1 = arith.constant 0 : i32
    return %c0_i32, %c0_i32_0 : i32, i32
  }
  func.func @transform_3(%arg0: i32) -> (i32, i32) {
    %c0_i32 = arith.constant 0 : i32
    %c0_i32_0 = arith.constant 0 : i32
    return %arg0, %c0_i32 : i32, i32
  }
}

module attributes {stable_mosaic.version = 11 : i64} {
  func.func @_conv_bn_lrelu_pool_kernel(%arg0: i32, %arg1: memref<80x1536xbf16, #tpu.memory_space<vmem>>, %arg2: memref<16x80xbf16, #tpu.memory_space<vmem>>, %arg3: memref<16x1xf32, #tpu.memory_space<vmem>>, %arg4: memref<16x384xf32, #tpu.memory_space<vmem>>) attributes {dimension_semantics = [#tpu.dimension_semantics<parallel>], iteration_bounds = array<i64: 2>, scalar_prefetch = 0 : i64, scratch_operands = 0 : i64, tpu.core_type = #tpu.core_type<tc>, window_params = [{transform_indices = @transform_0, window_bounds = array<i64: 80, 1536>}, {pipeline_mode = #tpu.pipeline_mode<synchronous>, transform_indices = @transform_1, window_bounds = array<i64: 16, 80>}, {pipeline_mode = #tpu.pipeline_mode<synchronous>, transform_indices = @transform_2, window_bounds = array<i64: 16, 1>}, {transform_indices = @transform_3, window_bounds = array<i64: 16, 384>}]} {
    %c0 = arith.constant 0 : index
    %c0_0 = arith.constant 0 : index
    %0 = vector.load %arg2[%c0, %c0_0] : memref<16x80xbf16, #tpu.memory_space<vmem>>, vector<16x80xbf16>
    %c0_1 = arith.constant 0 : index
    %c0_2 = arith.constant 0 : index
    %1 = vector.load %arg1[%c0_1, %c0_2] : memref<80x1536xbf16, #tpu.memory_space<vmem>>, vector<80x1536xbf16>
    %cst = arith.constant dense<0.000000e+00> : vector<16x1536xf32>
    %2 = tpu.matmul %0, %1, %cst {dimension_numbers = #tpu.dot_dimension_numbers<[1], [0], [0], [1], [0, 0, 1, 1], [], []>} : vector<16x80xbf16>, vector<80x1536xbf16>, vector<16x1536xf32> -> vector<16x1536xf32>
    %c0_3 = arith.constant 0 : index
    %c0_4 = arith.constant 0 : index
    %3 = vector.load %arg3[%c0_3, %c0_4] : memref<16x1xf32, #tpu.memory_space<vmem>>, vector<16x1xf32>
    %4 = vector.broadcast %3 : vector<16x1xf32> to vector<16x1536xf32>
    %5 = arith.addf %2, %4 : vector<16x1536xf32>
    %cst_5 = arith.constant 0.000000e+00 : f32
    %6 = vector.broadcast %cst_5 : f32 to vector<16x1536xf32>
    %7 = arith.cmpf ogt, %5, %6 : vector<16x1536xf32>
    %cst_6 = arith.constant 0.00999999977 : f32
    %8 = vector.broadcast %cst_6 : f32 to vector<16x1536xf32>
    %9 = arith.mulf %8, %5 : vector<16x1536xf32>
    %10 = arith.select %7, %5, %9 : vector<16x1536xi1>, vector<16x1536xf32>
    %11 = vector.extract_strided_slice %10 {offsets = [0, 0], sizes = [16, 384], strides = [1, 1]} : vector<16x1536xf32> to vector<16x384xf32>
    %12 = vector.extract_strided_slice %10 {offsets = [0, 384], sizes = [16, 384], strides = [1, 1]} : vector<16x1536xf32> to vector<16x384xf32>
    %13 = arith.maximumf %11, %12 : vector<16x384xf32>
    %14 = vector.extract_strided_slice %10 {offsets = [0, 768], sizes = [16, 384], strides = [1, 1]} : vector<16x1536xf32> to vector<16x384xf32>
    %15 = vector.extract_strided_slice %10 {offsets = [0, 1152], sizes = [16, 384], strides = [1, 1]} : vector<16x1536xf32> to vector<16x384xf32>
    %16 = arith.maximumf %14, %15 : vector<16x384xf32>
    %17 = arith.maximumf %13, %16 : vector<16x384xf32>
    %c0_7 = arith.constant 0 : index
    %c0_8 = arith.constant 0 : index
    %18 = vector.load %arg4[%c0_7, %c0_8] : memref<16x384xf32, #tpu.memory_space<vmem>>, vector<16x384xf32>
    tpu.vector_store %arg4[%c0_7, %c0_8], %17 {strides = array<i32>} : memref<16x384xf32, #tpu.memory_space<vmem>>, vector<16x384xf32>,
    return
  }
  func.func @transform_0(%arg0: i32) -> (i32, i32) {
    %c0_i32 = arith.constant 0 : i32
    %c0_i32_0 = arith.constant 0 : i32
    return %c0_i32, %arg0 : i32, i32
  }
  func.func @transform_1(%arg0: i32) -> (i32, i32) {
    %c0_i32 = arith.constant 0 : i32
    %c0_i32_0 = arith.constant 0 : i32
    %c0_i32_1 = arith.constant 0 : i32
    return %c0_i32, %c0_i32_0 : i32, i32
  }
  func.func @transform_2(%arg0: i32) -> (i32, i32) {
    %c0_i32 = arith.constant 0 : i32
    %c0_i32_0 = arith.constant 0 : i32
    %c0_i32_1 = arith.constant 0 : i32
    return %c0_i32, %c0_i32_0 : i32, i32
  }
  func.func @transform_3(%arg0: i32) -> (i32, i32) {
    %c0_i32 = arith.constant 0 : i32
    %c0_i32_0 = arith.constant 0 : i32
    return %arg0, %c0_i32 : i32, i32
  }
}

module attributes {stable_mosaic.version = 11 : i64} {
  func.func @_conv_bn_lrelu_pool_kernel(%arg0: i32, %arg1: memref<144x512xbf16, #tpu.memory_space<vmem>>, %arg2: memref<32x144xbf16, #tpu.memory_space<vmem>>, %arg3: memref<32x1xf32, #tpu.memory_space<vmem>>, %arg4: memref<32x128xf32, #tpu.memory_space<vmem>>) attributes {dimension_semantics = [#tpu.dimension_semantics<parallel>], iteration_bounds = array<i64: 2>, scalar_prefetch = 0 : i64, scratch_operands = 0 : i64, tpu.core_type = #tpu.core_type<tc>, window_params = [{transform_indices = @transform_0, window_bounds = array<i64: 144, 512>}, {pipeline_mode = #tpu.pipeline_mode<synchronous>, transform_indices = @transform_1, window_bounds = array<i64: 32, 144>}, {pipeline_mode = #tpu.pipeline_mode<synchronous>, transform_indices = @transform_2, window_bounds = array<i64: 32, 1>}, {transform_indices = @transform_3, window_bounds = array<i64: 32, 128>}]} {
    %c0 = arith.constant 0 : index
    %c0_0 = arith.constant 0 : index
    %0 = vector.load %arg2[%c0, %c0_0] : memref<32x144xbf16, #tpu.memory_space<vmem>>, vector<32x144xbf16>
    %c0_1 = arith.constant 0 : index
    %c0_2 = arith.constant 0 : index
    %1 = vector.load %arg1[%c0_1, %c0_2] : memref<144x512xbf16, #tpu.memory_space<vmem>>, vector<144x512xbf16>
    %cst = arith.constant dense<0.000000e+00> : vector<32x512xf32>
    %2 = tpu.matmul %0, %1, %cst {dimension_numbers = #tpu.dot_dimension_numbers<[1], [0], [0], [1], [0, 0, 1, 1], [], []>} : vector<32x144xbf16>, vector<144x512xbf16>, vector<32x512xf32> -> vector<32x512xf32>
    %c0_3 = arith.constant 0 : index
    %c0_4 = arith.constant 0 : index
    %3 = vector.load %arg3[%c0_3, %c0_4] : memref<32x1xf32, #tpu.memory_space<vmem>>, vector<32x1xf32>
    %4 = vector.broadcast %3 : vector<32x1xf32> to vector<32x512xf32>
    %5 = arith.addf %2, %4 : vector<32x512xf32>
    %cst_5 = arith.constant 0.000000e+00 : f32
    %6 = vector.broadcast %cst_5 : f32 to vector<32x512xf32>
    %7 = arith.cmpf ogt, %5, %6 : vector<32x512xf32>
    %cst_6 = arith.constant 0.00999999977 : f32
    %8 = vector.broadcast %cst_6 : f32 to vector<32x512xf32>
    %9 = arith.mulf %8, %5 : vector<32x512xf32>
    %10 = arith.select %7, %5, %9 : vector<32x512xi1>, vector<32x512xf32>
    %11 = vector.extract_strided_slice %10 {offsets = [0, 0], sizes = [32, 128], strides = [1, 1]} : vector<32x512xf32> to vector<32x128xf32>
    %12 = vector.extract_strided_slice %10 {offsets = [0, 128], sizes = [32, 128], strides = [1, 1]} : vector<32x512xf32> to vector<32x128xf32>
    %13 = arith.maximumf %11, %12 : vector<32x128xf32>
    %14 = vector.extract_strided_slice %10 {offsets = [0, 256], sizes = [32, 128], strides = [1, 1]} : vector<32x512xf32> to vector<32x128xf32>
    %15 = vector.extract_strided_slice %10 {offsets = [0, 384], sizes = [32, 128], strides = [1, 1]} : vector<32x512xf32> to vector<32x128xf32>
    %16 = arith.maximumf %14, %15 : vector<32x128xf32>
    %17 = arith.maximumf %13, %16 : vector<32x128xf32>
    %c0_7 = arith.constant 0 : index
    %c0_8 = arith.constant 0 : index
    %18 = vector.load %arg4[%c0_7, %c0_8] : memref<32x128xf32, #tpu.memory_space<vmem>>, vector<32x128xf32>
    tpu.vector_store %arg4[%c0_7, %c0_8], %17 {strides = array<i32>} : memref<32x128xf32, #tpu.memory_space<vmem>>, vector<32x128xf32>,
    return
  }
  func.func @transform_0(%arg0: i32) -> (i32, i32) {
    %c0_i32 = arith.constant 0 : i32
    %c0_i32_0 = arith.constant 0 : i32
    return %c0_i32, %arg0 : i32, i32
  }
  func.func @transform_1(%arg0: i32) -> (i32, i32) {
    %c0_i32 = arith.constant 0 : i32
    %c0_i32_0 = arith.constant 0 : i32
    %c0_i32_1 = arith.constant 0 : i32
    return %c0_i32, %c0_i32_0 : i32, i32
  }
  func.func @transform_2(%arg0: i32) -> (i32, i32) {
    %c0_i32 = arith.constant 0 : i32
    %c0_i32_0 = arith.constant 0 : i32
    %c0_i32_1 = arith.constant 0 : i32
    return %c0_i32, %c0_i32_0 : i32, i32
  }
  func.func @transform_3(%arg0: i32) -> (i32, i32) {
    %c0_i32 = arith.constant 0 : i32
    %c0_i32_0 = arith.constant 0 : i32
    return %arg0, %c0_i32 : i32, i32
  }
}

module attributes {stable_mosaic.version = 11 : i64} {
  func.func @_mlp_kernel(%arg0: memref<2x2880xbf16, #tpu.memory_space<vmem>>, %arg1: memref<2880x64xbf16, #tpu.memory_space<vmem>>, %arg2: memref<1x64xf32, #tpu.memory_space<vmem>>, %arg3: memref<64x32xbf16, #tpu.memory_space<vmem>>, %arg4: memref<1x32xf32, #tpu.memory_space<vmem>>, %arg5: memref<32x10xbf16, #tpu.memory_space<vmem>>, %arg6: memref<1x10xf32, #tpu.memory_space<vmem>>, %arg7: memref<2x10xf32, #tpu.memory_space<vmem>>) attributes {dimension_semantics = [], scalar_prefetch = 0 : i64, scratch_operands = 0 : i64, tpu.core_type = #tpu.core_type<tc>} {
    %c0 = arith.constant 0 : index
    %c0_0 = arith.constant 0 : index
    %0 = vector.load %arg0[%c0, %c0_0] : memref<2x2880xbf16, #tpu.memory_space<vmem>>, vector<2x2880xbf16>
    %c0_1 = arith.constant 0 : index
    %c0_2 = arith.constant 0 : index
    %1 = vector.load %arg1[%c0_1, %c0_2] : memref<2880x64xbf16, #tpu.memory_space<vmem>>, vector<2880x64xbf16>
    %cst = arith.constant dense<0.000000e+00> : vector<2x64xf32>
    %2 = tpu.matmul %0, %1, %cst {dimension_numbers = #tpu.dot_dimension_numbers<[1], [0], [0], [1], [0, 0, 1, 1], [], []>} : vector<2x2880xbf16>, vector<2880x64xbf16>, vector<2x64xf32> -> vector<2x64xf32>
    %c0_3 = arith.constant 0 : index
    %c0_4 = arith.constant 0 : index
    %3 = vector.load %arg2[%c0_3, %c0_4] : memref<1x64xf32, #tpu.memory_space<vmem>>, vector<1x64xf32>
    %4 = vector.broadcast %3 : vector<1x64xf32> to vector<2x64xf32>
    %5 = arith.addf %2, %4 : vector<2x64xf32>
    %6 = arith.truncf %5 : vector<2x64xf32> to vector<2x64xbf16>
    %c0_5 = arith.constant 0 : index
    %c0_6 = arith.constant 0 : index
    %7 = vector.load %arg3[%c0_5, %c0_6] : memref<64x32xbf16, #tpu.memory_space<vmem>>, vector<64x32xbf16>
    %cst_7 = arith.constant dense<0.000000e+00> : vector<2x32xf32>
    %8 = tpu.matmul %6, %7, %cst_7 {dimension_numbers = #tpu.dot_dimension_numbers<[1], [0], [0], [1], [0, 0, 1, 1], [], []>} : vector<2x64xbf16>, vector<64x32xbf16>, vector<2x32xf32> -> vector<2x32xf32>
    %c0_8 = arith.constant 0 : index
    %c0_9 = arith.constant 0 : index
    %9 = vector.load %arg4[%c0_8, %c0_9] : memref<1x32xf32, #tpu.memory_space<vmem>>, vector<1x32xf32>
    %10 = vector.broadcast %9 : vector<1x32xf32> to vector<2x32xf32>
    %11 = arith.addf %8, %10 : vector<2x32xf32>
    %12 = arith.truncf %11 : vector<2x32xf32> to vector<2x32xbf16>
    %c0_10 = arith.constant 0 : index
    %c0_11 = arith.constant 0 : index
    %13 = vector.load %arg5[%c0_10, %c0_11] : memref<32x10xbf16, #tpu.memory_space<vmem>>, vector<32x10xbf16>
    %cst_12 = arith.constant dense<0.000000e+00> : vector<2x10xf32>
    %14 = tpu.matmul %12, %13, %cst_12 {dimension_numbers = #tpu.dot_dimension_numbers<[1], [0], [0], [1], [0, 0, 1, 1], [], []>} : vector<2x32xbf16>, vector<32x10xbf16>, vector<2x10xf32> -> vector<2x10xf32>
    %c0_13 = arith.constant 0 : index
    %c0_14 = arith.constant 0 : index
    %15 = vector.load %arg6[%c0_13, %c0_14] : memref<1x10xf32, #tpu.memory_space<vmem>>, vector<1x10xf32>
    %16 = vector.broadcast %15 : vector<1x10xf32> to vector<2x10xf32>
    %17 = arith.addf %14, %16 : vector<2x10xf32>
    %c0_15 = arith.constant 0 : index
    %c0_16 = arith.constant 0 : index
    %18 = vector.load %arg7[%c0_15, %c0_16] : memref<2x10xf32, #tpu.memory_space<vmem>>, vector<2x10xf32>
    tpu.vector_store %arg7[%c0_15, %c0_16], %17 {strides = array<i32>} : memref<2x10xf32, #tpu.memory_space<vmem>>, vector<2x10xf32>,
    return
  }
}

</mosaic_0001>

<llo_original>
// kernel: picture_net_forward.4
$region0: #{picture_net_forward.4}
  #allocation0 [shape = 'u32[]', space=smem, size = 0x4, offset = 0x4, fixed_abs, tag = 'smem constant byte address 0x4 - core index']
  #allocation1 [shape = 'u32[144,128]{1,0:T(1,128)}', space=vmem, size = 0x12000, scoped, tag = 'internal scratch']
  %s0 = inlined_call_operand.vmem [shape: bf16[32,12288], index: 0, kind: input, shape index: {}]
  %s1 = inlined_call_operand.vmem [shape: bf16[8,32], index: 1, kind: input, shape index: {}]
  %s2 = inlined_call_operand.vmem [shape: f32[8,1], index: 2, kind: input, shape index: {}]
  %s3 = inlined_call_operand.vmem [shape: f32[16,1536], index: 3, kind: output, shape index: {}]
  %s4 = sld [smem:[#allocation0]]
  $region68: #{picture_net_forward.4} parent=0
    _
  %s6 = ssub.s32 1, %s4
  %s7 = scalar_select 0, %s6, %s4
  $region1: #{picture_net_forward.4} parent=0
    #allocation2 [shape = 'u8[786432]{0}', space=vmem, size = 0xc0000, scoped, tag = 'input window, operand 0']
    loop: start=0, step=1, limit=4
    $region2: #{picture_net_forward.4} parent=1 // loop_pre_header
      _
    $region3: #{picture_net_forward.4} parent=1 // loop_header
      %s9 = sphi 0, %s13
      %p10 = scmp.ge.s32.totalorder %s9, 4
      %s19 = sphi 0, %s21
      %s22 = sphi 0, %s19
      %s23 = sphi 0, %s22
      %s39 = sphi 0, %s23
      %s43 = sphi 0, %s43
      %s45 = sphi 0, %s43
      %s46 = sphi 0, %s45
      %s60 = sphi 0, %s46
      %s64 = sphi 0, %s64
      %s66 = sphi 0, %s64
      %s67 = sphi 0, %s66
      %s81 = sphi 0, %s67
      %s87 = sphi 0, %s89
      %s90 = sphi 0, %s87
      %s91 = sphi 0, %s90
      %s107 = sphi 0, %s91
    $region4: #{picture_net_forward.4} parent=1 // loop_header_branch
      %12 = sbr.rel (%p10) target = $region8
    $region5: #{picture_net_forward.4} parent=1 // loop_body
      %s14 = ssub.s32 %s9, 1
      %s15 = ssub.s32 %s9, 2
      %s16 = sadd.s32 %s9, 1
      %s17 = ssub.s32 %s9, %s16
      %p18 = scmp.eq.s32.totalorder %s17, 0
      %s20 = sadd.s32 %s19, 1
      %s21 = scalar_select %p18, %s19, %s20
      %p24 = pneg %p18
      %p25 = scmp.eq.s32.totalorder %s9, 1
      %p26 = por %p24, %p25
      %p27 = scmp.ne.s32.totalorder %s19, %s22
      %p28 = scmp.eq.s32.totalorder %s9, 0
      %p29 = por %p27, %p28
      %p30 = scmp.ne.s32.totalorder %s19, %s22
      %p31 = scmp.eq.s32.totalorder %s14, 1
      %p32 = por %p30, %p31
      %p33 = scmp.ne.s32.totalorder %s22, %s23
      %p34 = scmp.eq.s32.totalorder %s14, 0
      %p35 = por %p33, %p34
      %p36 = scmp.ne.s32.totalorder %s22, %s23
      %p37 = scmp.eq.s32.totalorder %s15, 1
      %p38 = por %p36, %p37
      %p40 = scmp.ne.s32.totalorder %s23, %s39
      %p41 = scmp.eq.s32.totalorder %s15, 0
      %p42 = por %p40, %p41
      %s44 = sadd.s32 %s43, 1
      %p47 = scmp.eq.s32.totalorder %s9, 1
      %p48 = scmp.ne.s32.totalorder %s43, %s45
      %p49 = scmp.eq.s32.totalorder %s9, 0
      %p50 = por %p48, %p49
      %p51 = scmp.ne.s32.totalorder %s43, %s45
      %p52 = scmp.eq.s32.totalorder %s14, 1
      %p53 = por %p51, %p52
      %p54 = scmp.ne.s32.totalorder %s45, %s46
      %p55 = scmp.eq.s32.totalorder %s14, 0
      %p56 = por %p54, %p55
      %p57 = scmp.ne.s32.totalorder %s45, %s46
      %p58 = scmp.eq.s32.totalorder %s15, 1
      %p59 = por %p57, %p58
      %p61 = scmp.ne.s32.totalorder %s46, %s60
      %p62 = scmp.eq.s32.totalorder %s15, 0
      %p63 = por %p61, %p62
      %s65 = sadd.s32 %s64, 1
      %p68 = scmp.eq.s32.totalorder %s9, 1
      %p69 = scmp.ne.s32.totalorder %s64, %s66
      %p70 = scmp.eq.s32.totalorder %s9, 0
      %p71 = por %p69, %p70
      %p72 = scmp.ne.s32.totalorder %s64, %s66
      %p73 = scmp.eq.s32.totalorder %s14, 1
      %p74 = por %p72, %p73
      %p75 = scmp.ne.s32.totalorder %s66, %s67
      %p76 = scmp.eq.s32.totalorder %s14, 0
      %p77 = por %p75, %p76
      %p78 = scmp.ne.s32.totalorder %s66, %s67
      %p79 = scmp.eq.s32.totalorder %s15, 1
      %p80 = por %p78, %p79
      %p82 = scmp.ne.s32.totalorder %s67, %s81
      %p83 = scmp.eq.s32.totalorder %s15, 0
      %p84 = por %p82, %p83
      %s85 = ssub.s32 %s9, %s16
      %p86 = scmp.eq.s32.totalorder %s85, 0
      %s88 = sadd.s32 %s87, 1
      %s89 = scalar_select %p86, %s87, %s88
      %p92 = pneg %p86
      %p93 = scmp.eq.s32.totalorder %s9, 1
      %p94 = por %p92, %p93
      %p95 = scmp.ne.s32.totalorder %s87, %s90
      %p96 = scmp.eq.s32.totalorder %s9, 0
      %p97 = por %p95, %p96
      %p98 = scmp.ne.s32.totalorder %s87, %s90
      %p99 = scmp.eq.s32.totalorder %s14, 1
      %p100 = por %p98, %p99
      %p101 = scmp.ne.s32.totalorder %s90, %s91
      %p102 = scmp.eq.s32.totalorder %s14, 0
      %p103 = por %p101, %p102
      %p104 = scmp.ne.s32.totalorder %s90, %s91
      %p105 = scmp.eq.s32.totalorder %s15, 1
      %p106 = por %p104, %p105
      %p108 = scmp.ne.s32.totalorder %s91, %s107
      %p109 = scmp.eq.s32.totalorder %s15, 0
      %p110 = por %p108, %p109
      %p111 = scmp.le.s32.totalorder 1, %s9
      %p112 = scmp.lt.s32.totalorder %s9, 3
      %p113 = pnand %p111, %p112
      %p114 = pneg %p113
      // Predicated region
      $region9: #{picture_net_forward.4} parent=5 // pred_check
        _
      $region10: #{picture_net_forward.4} parent=5 // pred_check_branch
        %116 = sbr.rel (%p113) target = $region12
      $region11: #{picture_net_forward.4} parent=5 // pred_region
        %s117 = ssub.s32 %s9, 1
        // Predicated region
        $region13: #{picture_net_forward.4} parent=11 // pred_check
          %p118 = pneg %p56
        $region14: #{picture_net_forward.4} parent=11 // pred_check_branch
          %120 = sbr.rel (%p118) target = $region16
        $region15: #{picture_net_forward.4} parent=11 // pred_region
          _
        $region16: #{picture_net_forward.4} parent=11 // pred_fallthru
          _
        // Predicated region
        $region17: #{picture_net_forward.4} parent=11 // pred_check
          %p121 = pneg %p77
        $region18: #{picture_net_forward.4} parent=11 // pred_check_branch
          %123 = sbr.rel (%p121) target = $region20
        $region19: #{picture_net_forward.4} parent=11 // pred_region
          _
        $region20: #{picture_net_forward.4} parent=11 // pred_fallthru
          _
      $region12: #{picture_net_forward.4} parent=5 // pred_fallthru
        _
      %p124 = scmp.lt.s32.totalorder %s9, 2
      // Predicated region
      $region21: #{picture_net_forward.4} parent=5 // pred_check
        %p125 = pneg %p124
      $region22: #{picture_net_forward.4} parent=5 // pred_check_branch
        %127 = sbr.rel (%p125) target = $region24
      $region23: #{picture_net_forward.4} parent=5 // pred_region
        // Predicated region
        $region25: #{picture_net_forward.4} parent=23 // pred_check
          %p128 = pneg %p29
        $region26: #{picture_net_forward.4} parent=23 // pred_check_branch
          %130 = sbr.rel (%p128) target = $region28
        $region27: #{picture_net_forward.4} parent=23 // pred_region
          %s131 = sand.u32 %s19, 1
          %s132 = sand.u32 %s19, 1
          %s133 = smul.addr %s132, 768
          %s134 = scalar_lea.vmem [#allocation2], %s133
          %s135 = smul.u32 48, %s9
          %s136 = smul.addr %s135, 4
          %s137 = scalar_lea.vmem %s0, %s136
          // Predicated region
          $region29: #{picture_net_forward.4} parent=27 // pred_check
            _
          $region30: #{picture_net_forward.4} parent=27 // pred_check_branch
            %139 = sbr.rel (0) target = $region32
          $region31: #{picture_net_forward.4} parent=27 // pred_region
            // Predicated region
            $region33: #{picture_net_forward.4} parent=31 // pred_check
              _
            $region34: #{picture_net_forward.4} parent=31 // pred_check_branch
              %141 = sbr.rel (0) target = $region36
            $region35: #{picture_net_forward.4} parent=31 // pred_region
              loop: start=0, step=1, limit=1
              $region37: #{picture_net_forward.4} parent=35 // loop_pre_header
                _
              $region38: #{picture_net_forward.4} parent=35 // loop_header
                %s143 = sphi 0, %s147
                %p144 = scmp.ge.s32.totalorder %s143, 1
                %s148 = sphi %s137, %s137
                %s149 = sphi %s134, %s134
              $region39: #{picture_net_forward.4} parent=35 // loop_header_branch
                %146 = sbr.rel (%p144) target = $region43
              $region40: #{picture_net_forward.4} parent=35 // loop_body
                %v150 = vld [vmem:[%s148] sm:$0xff]
                %151 = vst [vmem:[%s149] sm:$0xff] %v150
                %v152 = vld [vmem:[%s148 + $0x8] sm:$0xff]
                %153 = vst [vmem:[%s149 + $0x8] sm:$0xff] %v152
                %v154 = vld [vmem:[%s148 + $0x10] sm:$0xff]
                %155 = vst [vmem:[%s149 + $0x10] sm:$0xff] %v154
                %v156 = vld [vmem:[%s148 + $0x18] sm:$0xff]
                %157 = vst [vmem:[%s149 + $0x18] sm:$0xff] %v156
                %v158 = vld [vmem:[%s148 + $0x20] sm:$0xff]
                %159 = vst [vmem:[%s149 + $0x20] sm:$0xff] %v158
                %v160 = vld [vmem:[%s148 + $0x28] sm:$0xff]
                %161 = vst [vmem:[%s149 + $0x28] sm:$0xff] %v160
                %v162 = vld [vmem:[%s148 + $0x30] sm:$0xff]
                %163 = vst [vmem:[%s149 + $0x30] sm:$0xff] %v162
                %v164 = vld [vmem:[%s148 + $0x38] sm:$0xff]
                %165 = vst [vmem:[%s149 + $0x38] sm:$0xff] %v164
                %v166 = vld [vmem:[%s148 + $0x40] sm:$0xff]
                %167 = vst [vmem:[%s149 + $0x40] sm:$0xff] %v166
                %v168 = vld [vmem:[%s148 + $0x48] sm:$0xff]
                %169 = vst [vmem:[%s149 + $0x48] sm:$0xff] %v168
                %v170 = vld [vmem:[%s148 + $0x50] sm:$0xff]
                %171 = vst [vmem:[%s149 + $0x50] sm:$0xff] %v170
                %v172 = vld [vmem:[%s148 + $0x58] sm:$0xff]
                %173 = vst [vmem:[%s149 + $0x58] sm:$0xff] %v172
                %v174 = vld [vmem:[%s148 + $0x60] sm:$0xff]
                %175 = vst [vmem:[%s149 + $0x60] sm:$0xff] %v174
                %v176 = vld [vmem:[%s148 + $0x68] sm:$0xff]
                %177 = vst [vmem:[%s149 + $0x68] sm:$0xff] %v176
                %v178 = vld [vmem:[%s148 + $0x70] sm:$0xff]
                %179 = vst [vmem:[%s149 + $0x70] sm:$0xff] %v178
                %v180 = vld [vmem:[%s148 + $0x78] sm:$0xff]
                %181 = vst [vmem:[%s149 + $0x78] sm:$0xff] %v180
                %v182 = vld [vmem:[%s148 + $0x80] sm:$0xff]
                %183 = vst [vmem:[%s149 + $0x80] sm:$0xff] %v182
                %v184 = vld [vmem:[%s148 + $0x88] sm:$0xff]
                %185 = vst [vmem:[%s149 + $0x88] sm:$0xff] %v184
                %v186 = vld [vmem:[%s148 + $0x90] sm:$0xff]
                %187 = vst [vmem:[%s149 + $0x90] sm:$0xff] %v186
                %v188 = vld [vmem:[%s148 + $0x98] sm:$0xff]
                %189 = vst [vmem:[%s149 + $0x98] sm:$0xff] %v188
                %v190 = vld [vmem:[%s148 + $0xa0] sm:$0xff]
                %191 = vst [vmem:[%s149 + $0xa0] sm:$0xff] %v190
                %v192 = vld [vmem:[%s148 + $0xa8] sm:$0xff]
                %193 = vst [vmem:[%s149 + $0xa8] sm:$0xff] %v192
                %v194 = vld [vmem:[%s148 + $0xb0] sm:$0xff]
                %195 = vst [vmem:[%s149 + $0xb0] sm:$0xff] %v194
                %v196 = vld [vmem:[%s148 + $0xb8] sm:$0xff]
                %197 = vst [vmem:[%s149 + $0xb8] sm:$0xff] %v196
                %v198 = vld [vmem:[%s148 + $0x180] sm:$0xff]
                %199 = vst [vmem:[%s149 + $0xc0] sm:$0xff] %v198
                %v200 = vld [vmem:[%s148 + $0x188] sm:$0xff]
                %201 = vst [vmem:[%s149 + $0xc8] sm:$0xff] %v200
                %v202 = vld [vmem:[%s148 + $0x190] sm:$0xff]
                %203 = vst [vmem:[%s149 + $0xd0] sm:$0xff] %v202
                %v204 = vld [vmem:[%s148 + $0x198] sm:$0xff]
                %205 = vst [vmem:[%s149 + $0xd8] sm:$0xff] %v204
                %v206 = vld [vmem:[%s148 + $0x1a0] sm:$0xff]
                %207 = vst [vmem:[%s149 + $0xe0] sm:$0xff] %v206
                %v208 = vld [vmem:[%s148 + $0x1a8] sm:$0xff]
                %209 = vst [vmem:[%s149 + $0xe8] sm:$0xff] %v208
                %v210 = vld [vmem:[%s148 + $0x1b0] sm:$0xff]
                %211 = vst [vmem:[%s149 + $0xf0] sm:$0xff] %v210
                %v212 = vld [vmem:[%s148 + $0x1b8] sm:$0xff]
                %213 = vst [vmem:[%s149 + $0xf8] sm:$0xff] %v212
                %v214 = vld [vmem:[%s148 + $0x1c0] sm:$0xff]
                %215 = vst [vmem:[%s149 + $0x100] sm:$0xff] %v214
                %v216 = vld [vmem:[%s148 + $0x1c8] sm:$0xff]
                %217 = vst [vmem:[%s149 + $0x108] sm:$0xff] %v216
                %v218 = vld [vmem:[%s148 + $0x1d0] sm:$0xff]
                %219 = vst [vmem:[%s149 + $0x110] sm:$0xff] %v218
                %v220 = vld [vmem:[%s148 + $0x1d8] sm:$0xff]
                %221 = vst [vmem:[%s149 + $0x118] sm:$0xff] %v220
                %v222 = vld [vmem:[%s148 + $0x1e0] sm:$0xff]
                %223 = vst [vmem:[%s149 + $0x120] sm:$0xff] %v222
                %v224 = vld [vmem:[%s148 + $0x1e8] sm:$0xff]
                %225 = vst [vmem:[%s149 + $0x128] sm:$0xff] %v224
                %v226 = vld [vmem:[%s148 + $0x1f0] sm:$0xff]
                %227 = vst [vmem:[%s149 + $0x130] sm:$0xff] %v226
                %v228 = vld [vmem:[%s148 + $0x1f8] sm:$0xff]
                %229 = vst [vmem:[%s149 + $0x138] sm:$0xff] %v228
                %v230 = vld [vmem:[%s148 + $0x200] sm:$0xff]
                %231 = vst [vmem:[%s149 + $0x140] sm:$0xff] %v230
                %v232 = vld [vmem:[%s148 + $0x208] sm:$0xff]
                %233 = vst [vmem:[%s149 + $0x148] sm:$0xff] %v232
                %v234 = vld [vmem:[%s148 + $0x210] sm:$0xff]
                %235 = vst [vmem:[%s149 + $0x150] sm:$0xff] %v234
                %v236 = vld [vmem:[%s148 + $0x218] sm:$0xff]
                %237 = vst [vmem:[%s149 + $0x158] sm:$0xff] %v236
                %v238 = vld [vmem:[%s148 + $0x220] sm:$0xff]
                %239 = vst [vmem:[%s149 + $0x160] sm:$0xff] %v238
                %v240 = vld [vmem:[%s148 + $0x228] sm:$0xff]
                %241 = vst [vmem:[%s149 + $0x168] sm:$0xff] %v240
                %v242 = vld [vmem:[%s148 + $0x230] sm:$0xff]
                %243 = vst [vmem:[%s149 + $0x170] sm:$0xff] %v242
                %v244 = vld [vmem:[%s148 + $0x238] sm:$0xff]
                %245 = vst [vmem:[%s149 + $0x178] sm:$0xff] %v244
                %v246 = vld [vmem:[%s148 + $0x300] sm:$0xff]
                %247 = vst [vmem:[%s149 + $0x180] sm:$0xff] %v246
                %v248 = vld [vmem:[%s148 + $0x308] sm:$0xff]
                %249 = vst [vmem:[%s149 + $0x188] sm:$0xff] %v248
                %v250 = vld [vmem:[%s148 + $0x310] sm:$0xff]
                %251 = vst [vmem:[%s149 + $0x190] sm:$0xff] %v250
                %v252 = vld [vmem:[%s148 + $0x318] sm:$0xff]
                %253 = vst [vmem:[%s149 + $0x198] sm:$0xff] %v252
                %v254 = vld [vmem:[%s148 + $0x320] sm:$0xff]
                %255 = vst [vmem:[%s149 + $0x1a0] sm:$0xff] %v254
                %v256 = vld [vmem:[%s148 + $0x328] sm:$0xff]
                %257 = vst [vmem:[%s149 + $0x1a8] sm:$0xff] %v256
                %v258 = vld [vmem:[%s148 + $0x330] sm:$0xff]
                %259 = vst [vmem:[%s149 + $0x1b0] sm:$0xff] %v258
                %v260 = vld [vmem:[%s148 + $0x338] sm:$0xff]
                %261 = vst [vmem:[%s149 + $0x1b8] sm:$0xff] %v260
                %v262 = vld [vmem:[%s148 + $0x340] sm:$0xff]
                %263 = vst [vmem:[%s149 + $0x1c0] sm:$0xff] %v262
                %v264 = vld [vmem:[%s148 + $0x348] sm:$0xff]
                %265 = vst [vmem:[%s149 + $0x1c8] sm:$0xff] %v264
                %v266 = vld [vmem:[%s148 + $0x350] sm:$0xff]
                %267 = vst [vmem:[%s149 + $0x1d0] sm:$0xff] %v266
                %v268 = vld [vmem:[%s148 + $0x358] sm:$0xff]
                %269 = vst [vmem:[%s149 + $0x1d8] sm:$0xff] %v268
                %v270 = vld [vmem:[%s148 + $0x360] sm:$0xff]
                %271 = vst [vmem:[%s149 + $0x1e0] sm:$0xff] %v270
                %v272 = vld [vmem:[%s148 + $0x368] sm:$0xff]
                %273 = vst [vmem:[%s149 + $0x1e8] sm:$0xff] %v272
                %v274 = vld [vmem:[%s148 + $0x370] sm:$0xff]
                %275 = vst [vmem:[%s149 + $0x1f0] sm:$0xff] %v274
                %v276 = vld [vmem:[%s148 + $0x378] sm:$0xff]
                %277 = vst [vmem:[%s149 + $0x1f8] sm:$0xff] %v276
                %v278 = vld [vmem:[%s148 + $0x380] sm:$0xff]
                %279 = vst [vmem:[%s149 + $0x200] sm:$0xff] %v278
                %v280 = vld [vmem:[%s148 + $0x388] sm:$0xff]
                %281 = vst [vmem:[%s149 + $0x208] sm:$0xff] %v280
                %v282 = vld [vmem:[%s148 + $0x390] sm:$0xff]
                %283 = vst [vmem:[%s149 + $0x210] sm:$0xff] %v282
                %v284 = vld [vmem:[%s148 + $0x398] sm:$0xff]
                %285 = vst [vmem:[%s149 + $0x218] sm:$0xff] %v284
                %v286 = vld [vmem:[%s148 + $0x3a0] sm:$0xff]
                %287 = vst [vmem:[%s149 + $0x220] sm:$0xff] %v286
                %v288 = vld [vmem:[%s148 + $0x3a8] sm:$0xff]
                %289 = vst [vmem:[%s149 + $0x228] sm:$0xff] %v288
                %v290 = vld [vmem:[%s148 + $0x3b0] sm:$0xff]
                %291 = vst [vmem:[%s149 + $0x230] sm:$0xff] %v290
                %v292 = vld [vmem:[%s148 + $0x3b8] sm:$0xff]
                %293 = vst [vmem:[%s149 + $0x238] sm:$0xff] %v292
                %v294 = vld [vmem:[%s148 + $0x480] sm:$0xff]
                %295 = vst [vmem:[%s149 + $0x240] sm:$0xff] %v294
                %v296 = vld [vmem:[%s148 + $0x488] sm:$0xff]
                %297 = vst [vmem:[%s149 + $0x248] sm:$0xff] %v296
                %v298 = vld [vmem:[%s148 + $0x490] sm:$0xff]
                %299 = vst [vmem:[%s149 + $0x250] sm:$0xff] %v298
                %v300 = vld [vmem:[%s148 + $0x498] sm:$0xff]
                %301 = vst [vmem:[%s149 + $0x258] sm:$0xff] %v300
                %v302 = vld [vmem:[%s148 + $0x4a0] sm:$0xff]
                %303 = vst [vmem:[%s149 + $0x260] sm:$0xff] %v302
                %v304 = vld [vmem:[%s148 + $0x4a8] sm:$0xff]
                %305 = vst [vmem:[%s149 + $0x268] sm:$0xff] %v304
                %v306 = vld [vmem:[%s148 + $0x4b0] sm:$0xff]
                %307 = vst [vmem:[%s149 + $0x270] sm:$0xff] %v306
                %v308 = vld [vmem:[%s148 + $0x4b8] sm:$0xff]
                %309 = vst [vmem:[%s149 + $0x278] sm:$0xff] %v308
                %v310 = vld [vmem:[%s148 + $0x4c0] sm:$0xff]
                %311 = vst [vmem:[%s149 + $0x280] sm:$0xff] %v310
                %v312 = vld [vmem:[%s148 + $0x4c8] sm:$0xff]
                %313 = vst [vmem:[%s149 + $0x288] sm:$0xff] %v312
                %v314 = vld [vmem:[%s148 + $0x4d0] sm:$0xff]
                %315 = vst [vmem:[%s149 + $0x290] sm:$0xff] %v314
                %v316 = vld [vmem:[%s148 + $0x4d8] sm:$0xff]
                %317 = vst [vmem:[%s149 + $0x298] sm:$0xff] %v316
                %v318 = vld [vmem:[%s148 + $0x4e0] sm:$0xff]
                %319 = vst [vmem:[%s149 + $0x2a0] sm:$0xff] %v318
                %v320 = vld [vmem:[%s148 + $0x4e8] sm:$0xff]
                %321 = vst [vmem:[%s149 + $0x2a8] sm:$0xff] %v320
                %v322 = vld [vmem:[%s148 + $0x4f0] sm:$0xff]
                %323 = vst [vmem:[%s149 + $0x2b0] sm:$0xff] %v322
                %v324 = vld [vmem:[%s148 + $0x4f8] sm:$0xff]
                %325 = vst [vmem:[%s149 + $0x2b8] sm:$0xff] %v324
                %v326 = vld [vmem:[%s148 + $0x500] sm:$0xff]
                %327 = vst [vmem:[%s149 + $0x2c0] sm:$0xff] %v326
                %v328 = vld [vmem:[%s148 + $0x508] sm:$0xff]
                %329 = vst [vmem:[%s149 + $0x2c8] sm:$0xff] %v328
                %v330 = vld [vmem:[%s148 + $0x510] sm:$0xff]
                %331 = vst [vmem:[%s149 + $0x2d0] sm:$0xff] %v330
                %v332 = vld [vmem:[%s148 + $0x518] sm:$0xff]
                %333 = vst [vmem:[%s149 + $0x2d8] sm:$0xff] %v332
                %v334 = vld [vmem:[%s148 + $0x520] sm:$0xff]
                %335 = vst [vmem:[%s149 + $0x2e0] sm:$0xff] %v334
                %v336 = vld [vmem:[%s148 + $0x528] sm:$0xff]
                %337 = vst [vmem:[%s149 + $0x2e8] sm:$0xff] %v336
                %v338 = vld [vmem:[%s148 + $0x530] sm:$0xff]
                %339 = vst [vmem:[%s149 + $0x2f0] sm:$0xff] %v338
                %v340 = vld [vmem:[%s148 + $0x538] sm:$0xff]
                %341 = vst [vmem:[%s149 + $0x2f8] sm:$0xff] %v340
              $region41: #{picture_net_forward.4} parent=35 // loop_footer
                %s147 = sadd.s32 1, %s143
              $region42: #{picture_net_forward.4} parent=35 // loop_footer_branch
                %142 = sbr.rel target = $region38
              $region43: #{picture_net_forward.4} parent=35 // loop_exit
                _
            $region36: #{picture_net_forward.4} parent=31 // pred_fallthru
              _
            // Predicated region
            $region44: #{picture_net_forward.4} parent=31 // pred_check
              _
            $region45: #{picture_net_forward.4} parent=31 // pred_check_branch
              %343 = sbr.rel target = $region47
            $region46: #{picture_net_forward.4} parent=31 // pred_region
              _
            $region47: #{picture_net_forward.4} parent=31 // pred_fallthru
              _
          $region32: #{picture_net_forward.4} parent=27 // pred_fallthru
            _
          %344 = vnop
        $region28: #{picture_net_forward.4} parent=23 // pred_fallthru
          _
      $region24: #{picture_net_forward.4} parent=5 // pred_fallthru
        _
      %p345 = scmp.le.s32.totalorder 1, %s9
      %p346 = scmp.lt.s32.totalorder %s9, 3
      %p347 = pnand %p345, %p346
      %p348 = pneg %p347
      // Predicated region
      $region48: #{picture_net_forward.4} parent=5 // pred_check
        _
      $region49: #{picture_net_forward.4} parent=5 // pred_check_branch
        %350 = sbr.rel (%p347) target = $region51
      $region50: #{picture_net_forward.4} parent=5 // pred_region
        %s351 = ssub.s32 %s9, 1
        %s352 = sand.u32 %s22, 1
        %s353 = sand.u32 %s22, 1
        %s354 = smul.addr %s353, 768
        %s355 = scalar_lea.vmem [#allocation2], %s354
        // Predicated region
        $region52: #{picture_net_forward.4} parent=50 // pred_check
          %p356 = pneg %p35
        $region53: #{picture_net_forward.4} parent=50 // pred_check_branch
          %358 = sbr.rel (%p356) target = $region55
        $region54: #{picture_net_forward.4} parent=50 // pred_region
          _
        $region55: #{picture_net_forward.4} parent=50 // pred_fallthru
          _
        %s359 = sand.u32 %s22, 1
        %s360 = sand.u32 %s22, 1
        %s361 = smul.addr %s360, 768
        %s362 = scalar_lea.vmem [#allocation2], %s361
        %p363 = pneg %p35
        %p364 = pneg %p32
        %p365 = pneg %p56
        %p366 = pneg %p53
        %p367 = pneg %p77
        %p368 = pneg %p74
        %p369 = pneg %p103
        %p370 = pneg %p100
        %p371 = scmp.lt.s32.totalorder %s14, 1
        %s372 = scalar_select %p371, %s14, 1
        %s373 = smul.addr %s372, 12
        %s374 = smul.addr %s373, 8
        %s375 = scalar_lea.vmem %s3, %s374
        %s376 = smul.u32 48, %s14
        %p377 = scmp.lt.s32.totalorder %s14, 1
        %s378 = scalar_select %p377, %s14, 1
        %s379 = smul.addr %s378, 12
        %s380 = smul.addr %s379, 8
        %s381 = scalar_lea.vmem %s3, %s380
        %v383 = vld [vmem:[%s1] sm:$0xf]
        %v384 = vld [vmem:[%s355] sm:$0xff]
        %v385 = vld [vmem:[%s355 + $0x8] sm:$0xff]
        %v386 = vld [vmem:[%s355 + $0x10] sm:$0xff]
        %v387 = vld [vmem:[%s355 + $0x18] sm:$0xff]
        %v388 = vld [vmem:[%s355 + $0x20] sm:$0xff]
        %v389 = vld [vmem:[%s355 + $0x28] sm:$0xff]
        %v390 = vld [vmem:[%s355 + $0x30] sm:$0xff]
        %v391 = vld [vmem:[%s355 + $0x38] sm:$0xff]
        %v392 = vld [vmem:[%s355 + $0x40] sm:$0xff]
        %v393 = vld [vmem:[%s355 + $0x48] sm:$0xff]
        %v394 = vld [vmem:[%s355 + $0x50] sm:$0xff]
        %v395 = vld [vmem:[%s355 + $0x58] sm:$0xff]
        %v396 = vld [vmem:[%s355 + $0x60] sm:$0xff]
        %v397 = vld [vmem:[%s355 + $0x68] sm:$0xff]
        %v398 = vld [vmem:[%s355 + $0x70] sm:$0xff]
        %v399 = vld [vmem:[%s355 + $0x78] sm:$0xff]
        %v400 = vld [vmem:[%s355 + $0x80] sm:$0xff]
        %v401 = vld [vmem:[%s355 + $0x88] sm:$0xff]
        %v402 = vld [vmem:[%s355 + $0x90] sm:$0xff]
        %v403 = vld [vmem:[%s355 + $0x98] sm:$0xff]
        %v404 = vld [vmem:[%s355 + $0xa0] sm:$0xff]
        %v405 = vld [vmem:[%s355 + $0xa8] sm:$0xff]
        %v406 = vld [vmem:[%s355 + $0xb0] sm:$0xff]
        %v407 = vld [vmem:[%s355 + $0xb8] sm:$0xff]
        %v408 = vld [vmem:[%s355 + $0xc0] sm:$0xff]
        %v409 = vld [vmem:[%s355 + $0xc8] sm:$0xff]
        %v410 = vld [vmem:[%s355 + $0xd0] sm:$0xff]
        %v411 = vld [vmem:[%s355 + $0xd8] sm:$0xff]
        %v412 = vld [vmem:[%s355 + $0xe0] sm:$0xff]
        %v413 = vld [vmem:[%s355 + $0xe8] sm:$0xff]
        %v414 = vld [vmem:[%s355 + $0xf0] sm:$0xff]
        %v415 = vld [vmem:[%s355 + $0xf8] sm:$0xff]
        %v416 = vld [vmem:[%s355 + $0x100] sm:$0xff]
        %v417 = vld [vmem:[%s355 + $0x108] sm:$0xff]
        %v418 = vld [vmem:[%s355 + $0x110] sm:$0xff]
        %v419 = vld [vmem:[%s355 + $0x118] sm:$0xff]
        %v420 = vld [vmem:[%s355 + $0x120] sm:$0xff]
        %v421 = vld [vmem:[%s355 + $0x128] sm:$0xff]
        %v422 = vld [vmem:[%s355 + $0x130] sm:$0xff]
        %v423 = vld [vmem:[%s355 + $0x138] sm:$0xff]
        %v424 = vld [vmem:[%s355 + $0x140] sm:$0xff]
        %v425 = vld [vmem:[%s355 + $0x148] sm:$0xff]
        %v426 = vld [vmem:[%s355 + $0x150] sm:$0xff]
        %v427 = vld [vmem:[%s355 + $0x158] sm:$0xff]
        %v428 = vld [vmem:[%s355 + $0x160] sm:$0xff]
        %v429 = vld [vmem:[%s355 + $0x168] sm:$0xff]
        %v430 = vld [vmem:[%s355 + $0x170] sm:$0xff]
        %v431 = vld [vmem:[%s355 + $0x178] sm:$0xff]
        %v432 = vld [vmem:[%s355 + $0x180] sm:$0xff]
        %v433 = vld [vmem:[%s355 + $0x188] sm:$0xff]
        %v434 = vld [vmem:[%s355 + $0x190] sm:$0xff]
        %v435 = vld [vmem:[%s355 + $0x198] sm:$0xff]
        %v436 = vld [vmem:[%s355 + $0x1a0] sm:$0xff]
        %v437 = vld [vmem:[%s355 + $0x1a8] sm:$0xff]
        %v438 = vld [vmem:[%s355 + $0x1b0] sm:$0xff]
        %v439 = vld [vmem:[%s355 + $0x1b8] sm:$0xff]
        %v440 = vld [vmem:[%s355 + $0x1c0] sm:$0xff]
        %v441 = vld [vmem:[%s355 + $0x1c8] sm:$0xff]
        %v442 = vld [vmem:[%s355 + $0x1d0] sm:$0xff]
        %v443 = vld [vmem:[%s355 + $0x1d8] sm:$0xff]
        %v444 = vld [vmem:[%s355 + $0x1e0] sm:$0xff]
        %v445 = vld [vmem:[%s355 + $0x1e8] sm:$0xff]
        %v446 = vld [vmem:[%s355 + $0x1f0] sm:$0xff]
        %v447 = vld [vmem:[%s355 + $0x1f8] sm:$0xff]
        %v448 = vld [vmem:[%s355 + $0x200] sm:$0xff]
        %v449 = vld [vmem:[%s355 + $0x208] sm:$0xff]
        %v450 = vld [vmem:[%s355 + $0x210] sm:$0xff]
        %v451 = vld [vmem:[%s355 + $0x218] sm:$0xff]
        %v452 = vld [vmem:[%s355 + $0x220] sm:$0xff]
        %v453 = vld [vmem:[%s355 + $0x228] sm:$0xff]
        %v454 = vld [vmem:[%s355 + $0x230] sm:$0xff]
        %v455 = vld [vmem:[%s355 + $0x238] sm:$0xff]
        %v456 = vld [vmem:[%s355 + $0x240] sm:$0xff]
        %v457 = vld [vmem:[%s355 + $0x248] sm:$0xff]
        %v458 = vld [vmem:[%s355 + $0x250] sm:$0xff]
        %v459 = vld [vmem:[%s355 + $0x258] sm:$0xff]
        %v460 = vld [vmem:[%s355 + $0x260] sm:$0xff]
        %v461 = vld [vmem:[%s355 + $0x268] sm:$0xff]
        %v462 = vld [vmem:[%s355 + $0x270] sm:$0xff]
        %v463 = vld [vmem:[%s355 + $0x278] sm:$0xff]
        %v464 = vld [vmem:[%s355 + $0x280] sm:$0xff]
        %v465 = vld [vmem:[%s355 + $0x288] sm:$0xff]
        %v466 = vld [vmem:[%s355 + $0x290] sm:$0xff]
        %v467 = vld [vmem:[%s355 + $0x298] sm:$0xff]
        %v468 = vld [vmem:[%s355 + $0x2a0] sm:$0xff]
        %v469 = vld [vmem:[%s355 + $0x2a8] sm:$0xff]
        %v470 = vld [vmem:[%s355 + $0x2b0] sm:$0xff]
        %v471 = vld [vmem:[%s355 + $0x2b8] sm:$0xff]
        %v472 = vld [vmem:[%s355 + $0x2c0] sm:$0xff]
        %v473 = vld [vmem:[%s355 + $0x2c8] sm:$0xff]
        %v474 = vld [vmem:[%s355 + $0x2d0] sm:$0xff]
        %v475 = vld [vmem:[%s355 + $0x2d8] sm:$0xff]
        %v476 = vld [vmem:[%s355 + $0x2e0] sm:$0xff]
        %v477 = vld [vmem:[%s355 + $0x2e8] sm:$0xff]
        %v478 = vld [vmem:[%s355 + $0x2f0] sm:$0xff]
        %v479 = vld [vmem:[%s355 + $0x2f8] sm:$0xff]
        %v480 = vld [vmem:[%s2] sm:$0xff]
        %482 = vset.pattern.permute.xlu0 0
        %483 = vperm.xlu0 %482, %v480
        %v484 = vpop.permute.xlu0 %483
        %v582 = vunpack.c.l.b16 %v384
        %v583 = vunpack.c.h.b16 %v384
        %v584 = vunpack.c.l.b16 %v385
        %v585 = vunpack.c.h.b16 %v385
        %v586 = vunpack.c.l.b16 %v386
        %v587 = vunpack.c.h.b16 %v386
        %v588 = vunpack.c.l.b16 %v387
        %v589 = vunpack.c.h.b16 %v387
        %v590 = vunpack.c.l.b16 %v388
        %v591 = vunpack.c.h.b16 %v388
        %v592 = vunpack.c.l.b16 %v389
        %v593 = vunpack.c.h.b16 %v389
        %v594 = vunpack.c.l.b16 %v390
        %v595 = vunpack.c.h.b16 %v390
        %v596 = vunpack.c.l.b16 %v391
        %v597 = vunpack.c.h.b16 %v391
        %v598 = vunpack.c.l.b16 %v392
        %v599 = vunpack.c.h.b16 %v392
        %v600 = vunpack.c.l.b16 %v393
        %v601 = vunpack.c.h.b16 %v393
        %v602 = vunpack.c.l.b16 %v394
        %v603 = vunpack.c.h.b16 %v394
        %v604 = vunpack.c.l.b16 %v395
        %v605 = vunpack.c.h.b16 %v395
        %v606 = vunpack.c.l.b16 %v396
        %v607 = vunpack.c.h.b16 %v396
        %v608 = vunpack.c.l.b16 %v397
        %v609 = vunpack.c.h.b16 %v397
        %v610 = vunpack.c.l.b16 %v398
        %v611 = vunpack.c.h.b16 %v398
        %v612 = vunpack.c.l.b16 %v399
        %v613 = vunpack.c.h.b16 %v399
        %v614 = vunpack.c.l.b16 %v400
        %v615 = vunpack.c.h.b16 %v400
        %v616 = vunpack.c.l.b16 %v401
        %v617 = vunpack.c.h.b16 %v401
        %v618 = vunpack.c.l.b16 %v402
        %v619 = vunpack.c.h.b16 %v402
        %v620 = vunpack.c.l.b16 %v403
        %v621 = vunpack.c.h.b16 %v403
        %v622 = vunpack.c.l.b16 %v404
        %v623 = vunpack.c.h.b16 %v404
        %v624 = vunpack.c.l.b16 %v405
        %v625 = vunpack.c.h.b16 %v405
        %v626 = vunpack.c.l.b16 %v406
        %v627 = vunpack.c.h.b16 %v406
        %v628 = vunpack.c.l.b16 %v407
        %v629 = vunpack.c.h.b16 %v407
        %v630 = vunpack.c.l.b16 %v408
        %v631 = vunpack.c.h.b16 %v408
        %v632 = vunpack.c.l.b16 %v409
        %v633 = vunpack.c.h.b16 %v409
        %v634 = vunpack.c.l.b16 %v410
        %v635 = vunpack.c.h.b16 %v410
        %v636 = vunpack.c.l.b16 %v411
        %v637 = vunpack.c.h.b16 %v411
        %v638 = vunpack.c.l.b16 %v412
        %v639 = vunpack.c.h.b16 %v412
        %v640 = vunpack.c.l.b16 %v413
        %v641 = vunpack.c.h.b16 %v413
        %v642 = vunpack.c.l.b16 %v414
        %v643 = vunpack.c.h.b16 %v414
        %v644 = vunpack.c.l.b16 %v415
        %v645 = vunpack.c.h.b16 %v415
        %v646 = vunpack.c.l.b16 %v416
        %v647 = vunpack.c.h.b16 %v416
        %v648 = vunpack.c.l.b16 %v417
        %v649 = vunpack.c.h.b16 %v417
        %v650 = vunpack.c.l.b16 %v418
        %v651 = vunpack.c.h.b16 %v418
        %v652 = vunpack.c.l.b16 %v419
        %v653 = vunpack.c.h.b16 %v419
        %v654 = vunpack.c.l.b16 %v420
        %v655 = vunpack.c.h.b16 %v420
        %v656 = vunpack.c.l.b16 %v421
        %v657 = vunpack.c.h.b16 %v421
        %v658 = vunpack.c.l.b16 %v422
        %v659 = vunpack.c.h.b16 %v422
        %v660 = vunpack.c.l.b16 %v423
        %v661 = vunpack.c.h.b16 %v423
        %v662 = vunpack.c.l.b16 %v424
        %v663 = vunpack.c.h.b16 %v424
        %v664 = vunpack.c.l.b16 %v425
        %v665 = vunpack.c.h.b16 %v425
        %v666 = vunpack.c.l.b16 %v426
        %v667 = vunpack.c.h.b16 %v426
        %v668 = vunpack.c.l.b16 %v427
        %v669 = vunpack.c.h.b16 %v427
        %v670 = vunpack.c.l.b16 %v428
        %v671 = vunpack.c.h.b16 %v428
        %v672 = vunpack.c.l.b16 %v429
        %v673 = vunpack.c.h.b16 %v429
        %v674 = vunpack.c.l.b16 %v430
        %v675 = vunpack.c.h.b16 %v430
        %v676 = vunpack.c.l.b16 %v431
        %v677 = vunpack.c.h.b16 %v431
        %v678 = vunpack.c.l.b16 %v432
        %v679 = vunpack.c.h.b16 %v432
        %v680 = vunpack.c.l.b16 %v433
        %v681 = vunpack.c.h.b16 %v433
        %v682 = vunpack.c.l.b16 %v434
        %v683 = vunpack.c.h.b16 %v434
        %v684 = vunpack.c.l.b16 %v435
        %v685 = vunpack.c.h.b16 %v435
        %v686 = vunpack.c.l.b16 %v436
        %v687 = vunpack.c.h.b16 %v436
        %v688 = vunpack.c.l.b16 %v437
        %v689 = vunpack.c.h.b16 %v437
        %v690 = vunpack.c.l.b16 %v438
        %v691 = vunpack.c.h.b16 %v438
        %v692 = vunpack.c.l.b16 %v439
        %v693 = vunpack.c.h.b16 %v439
        %v694 = vunpack.c.l.b16 %v440
        %v695 = vunpack.c.h.b16 %v440
        %v696 = vunpack.c.l.b16 %v441
        %v697 = vunpack.c.h.b16 %v441
        %v698 = vunpack.c.l.b16 %v442
        %v699 = vunpack.c.h.b16 %v442
        %v700 = vunpack.c.l.b16 %v443
        %v701 = vunpack.c.h.b16 %v443
        %v702 = vunpack.c.l.b16 %v444
        %v703 = vunpack.c.h.b16 %v444
        %v704 = vunpack.c.l.b16 %v445
        %v705 = vunpack.c.h.b16 %v445
        %v706 = vunpack.c.l.b16 %v446
        %v707 = vunpack.c.h.b16 %v446
        %v708 = vunpack.c.l.b16 %v447
        %v709 = vunpack.c.h.b16 %v447
        %v710 = vunpack.c.l.b16 %v448
        %v711 = vunpack.c.h.b16 %v448
        %v712 = vunpack.c.l.b16 %v449
        %v713 = vunpack.c.h.b16 %v449
        %v714 = vunpack.c.l.b16 %v450
        %v715 = vunpack.c.h.b16 %v450
        %v716 = vunpack.c.l.b16 %v451
        %v717 = vunpack.c.h.b16 %v451
        %v718 = vunpack.c.l.b16 %v452
        %v719 = vunpack.c.h.b16 %v452
        %v720 = vunpack.c.l.b16 %v453
        %v721 = vunpack.c.h.b16 %v453
        %v722 = vunpack.c.l.b16 %v454
        %v723 = vunpack.c.h.b16 %v454
        %v724 = vunpack.c.l.b16 %v455
        %v725 = vunpack.c.h.b16 %v455
        %v726 = vunpack.c.l.b16 %v456
        %v727 = vunpack.c.h.b16 %v456
        %v728 = vunpack.c.l.b16 %v457
        %v729 = vunpack.c.h.b16 %v457
        %v730 = vunpack.c.l.b16 %v458
        %v731 = vunpack.c.h.b16 %v458
        %v732 = vunpack.c.l.b16 %v459
        %v733 = vunpack.c.h.b16 %v459
        %v734 = vunpack.c.l.b16 %v460
        %v735 = vunpack.c.h.b16 %v460
        %v736 = vunpack.c.l.b16 %v461
        %v737 = vunpack.c.h.b16 %v461
        %v738 = vunpack.c.l.b16 %v462
        %v739 = vunpack.c.h.b16 %v462
        %v740 = vunpack.c.l.b16 %v463
        %v741 = vunpack.c.h.b16 %v463
        %v742 = vunpack.c.l.b16 %v464
        %v743 = vunpack.c.h.b16 %v464
        %v744 = vunpack.c.l.b16 %v465
        %v745 = vunpack.c.h.b16 %v465
        %v746 = vunpack.c.l.b16 %v466
        %v747 = vunpack.c.h.b16 %v466
        %v748 = vunpack.c.l.b16 %v467
        %v749 = vunpack.c.h.b16 %v467
        %v750 = vunpack.c.l.b16 %v468
        %v751 = vunpack.c.h.b16 %v468
        %v752 = vunpack.c.l.b16 %v469
        %v753 = vunpack.c.h.b16 %v469
        %v754 = vunpack.c.l.b16 %v470
        %v755 = vunpack.c.h.b16 %v470
        %v756 = vunpack.c.l.b16 %v471
        %v757 = vunpack.c.h.b16 %v471
        %v758 = vunpack.c.l.b16 %v472
        %v759 = vunpack.c.h.b16 %v472
        %v760 = vunpack.c.l.b16 %v473
        %v761 = vunpack.c.h.b16 %v473
        %v762 = vunpack.c.l.b16 %v474
        %v763 = vunpack.c.h.b16 %v474
        %v764 = vunpack.c.l.b16 %v475
        %v765 = vunpack.c.h.b16 %v475
        %v766 = vunpack.c.l.b16 %v476
        %v767 = vunpack.c.h.b16 %v476
        %v768 = vunpack.c.l.b16 %v477
        %v769 = vunpack.c.h.b16 %v477
        %v770 = vunpack.c.l.b16 %v478
        %v771 = vunpack.c.h.b16 %v478
        %v772 = vunpack.c.l.b16 %v479
        %v773 = vunpack.c.h.b16 %v479
        %v774 = vpack.c.b16 %v630, %v582
        %v775 = vpack.c.b16 %v631, %v583
        %v776 = vpack.c.b16 %v632, %v584
        %v777 = vpack.c.b16 %v633, %v585
        %v778 = vpack.c.b16 %v634, %v586
        %v779 = vpack.c.b16 %v635, %v587
        %v780 = vpack.c.b16 %v636, %v588
        %v781 = vpack.c.b16 %v637, %v589
        %v782 = vpack.c.b16 %v638, %v590
        %v783 = vpack.c.b16 %v639, %v591
        %v784 = vpack.c.b16 %v640, %v592
        %v785 = vpack.c.b16 %v641, %v593
        %v786 = vpack.c.b16 %v642, %v594
        %v787 = vpack.c.b16 %v643, %v595
        %v788 = vpack.c.b16 %v644, %v596
        %v789 = vpack.c.b16 %v645, %v597
        %v790 = vpack.c.b16 %v646, %v598
        %v791 = vpack.c.b16 %v647, %v599
        %v792 = vpack.c.b16 %v648, %v600
        %v793 = vpack.c.b16 %v649, %v601
        %v794 = vpack.c.b16 %v650, %v602
        %v795 = vpack.c.b16 %v651, %v603
        %v796 = vpack.c.b16 %v652, %v604
        %v797 = vpack.c.b16 %v653, %v605
        %v798 = vpack.c.b16 %v654, %v606
        %v799 = vpack.c.b16 %v655, %v607
        %v800 = vpack.c.b16 %v656, %v608
        %v801 = vpack.c.b16 %v657, %v609
        %v802 = vpack.c.b16 %v658, %v610
        %v803 = vpack.c.b16 %v659, %v611
        %v804 = vpack.c.b16 %v660, %v612
        %v805 = vpack.c.b16 %v661, %v613
        %v806 = vpack.c.b16 %v662, %v614
        %v807 = vpack.c.b16 %v663, %v615
        %v808 = vpack.c.b16 %v664, %v616
        %v809 = vpack.c.b16 %v665, %v617
        %v810 = vpack.c.b16 %v666, %v618
        %v811 = vpack.c.b16 %v667, %v619
        %v812 = vpack.c.b16 %v668, %v620
        %v813 = vpack.c.b16 %v669, %v621
        %v814 = vpack.c.b16 %v670, %v622
        %v815 = vpack.c.b16 %v671, %v623
        %v816 = vpack.c.b16 %v672, %v624
        %v817 = vpack.c.b16 %v673, %v625
        %v818 = vpack.c.b16 %v674, %v626
        %v819 = vpack.c.b16 %v675, %v627
        %v820 = vpack.c.b16 %v676, %v628
        %v821 = vpack.c.b16 %v677, %v629
        %v822 = vpack.c.b16 %v726, %v678
        %v823 = vpack.c.b16 %v727, %v679
        %v824 = vpack.c.b16 %v728, %v680
        %v825 = vpack.c.b16 %v729, %v681
        %v826 = vpack.c.b16 %v730, %v682
        %v827 = vpack.c.b16 %v731, %v683
        %v828 = vpack.c.b16 %v732, %v684
        %v829 = vpack.c.b16 %v733, %v685
        %v830 = vpack.c.b16 %v734, %v686
        %v831 = vpack.c.b16 %v735, %v687
        %v832 = vpack.c.b16 %v736, %v688
        %v833 = vpack.c.b16 %v737, %v689
        %v834 = vpack.c.b16 %v738, %v690
        %v835 = vpack.c.b16 %v739, %v691
        %v836 = vpack.c.b16 %v740, %v692
        %v837 = vpack.c.b16 %v741, %v693
        %v838 = vpack.c.b16 %v742, %v694
        %v839 = vpack.c.b16 %v743, %v695
        %v840 = vpack.c.b16 %v744, %v696
        %v841 = vpack.c.b16 %v745, %v697
        %v842 = vpack.c.b16 %v746, %v698
        %v843 = vpack.c.b16 %v747, %v699
        %v844 = vpack.c.b16 %v748, %v700
        %v845 = vpack.c.b16 %v749, %v701
        %v846 = vpack.c.b16 %v750, %v702
        %v847 = vpack.c.b16 %v751, %v703
        %v848 = vpack.c.b16 %v752, %v704
        %v849 = vpack.c.b16 %v753, %v705
        %v850 = vpack.c.b16 %v754, %v706
        %v851 = vpack.c.b16 %v755, %v707
        %v852 = vpack.c.b16 %v756, %v708
        %v853 = vpack.c.b16 %v757, %v709
        %v854 = vpack.c.b16 %v758, %v710
        %v855 = vpack.c.b16 %v759, %v711
        %v856 = vpack.c.b16 %v760, %v712
        %v857 = vpack.c.b16 %v761, %v713
        %v858 = vpack.c.b16 %v762, %v714
        %v859 = vpack.c.b16 %v763, %v715
        %v860 = vpack.c.b16 %v764, %v716
        %v861 = vpack.c.b16 %v765, %v717
        %v862 = vpack.c.b16 %v766, %v718
        %v863 = vpack.c.b16 %v767, %v719
        %v864 = vpack.c.b16 %v768, %v720
        %v865 = vpack.c.b16 %v769, %v721
        %v866 = vpack.c.b16 %v770, %v722
        %v867 = vpack.c.b16 %v771, %v723
        %v868 = vpack.c.b16 %v772, %v724
        %v869 = vpack.c.b16 %v773, %v725
        %vm966 = vcmask 261120
        %v968 = vsel %vm966, %v383, 0
        %970 = vmatprep.subr.bf16.mxu0 0
        %971 = vmatpush1.bf16.msra.mxu0 0
        %972 = vmatprep.subr.bf16.mxu0 0
        %973 = vmatpush1.bf16.msra.mxu0 0
        %974 = vmatprep.subr.bf16.mxu0 0
        %975 = vmatpush1.bf16.msra.mxu0 0
        %976 = vmatprep.subr.bf16.mxu0 0
        %977 = vmatpush1.bf16.msra.mxu0 0
        %978 = vmatprep.subr.bf16.mxu0 0
        %979 = vmatpush1.bf16.msra.mxu0 0
        %980 = vmatprep.subr.bf16.mxu0 0
        %981 = vmatpush1.bf16.msra.mxu0 0
        %982 = vmatprep.subr.bf16.mxu0 %v823
        %983 = vmatpush1.bf16.msra.mxu0 %v822
        %984 = vmatprep.subr.bf16.mxu0 %v775
        %985 = vmatpush1.bf16.msra.mxu0 %v774
        %986 = vmatprep.subr.bf16.mxu0 0
        %987 = vmatpush2.bf16.msra.mxu0 0
        %988 = vmatprep.subr.bf16.mxu0 0
        %989 = vmatpush2.bf16.msra.mxu0 0
        %990 = vmatprep.subr.bf16.mxu0 0
        %991 = vmatpush2.bf16.msra.mxu0 0
        %992 = vmatprep.subr.bf16.mxu0 0
        %993 = vmatpush2.bf16.msra.mxu0 0
        %994 = vmatprep.subr.bf16.mxu0 0
        %995 = vmatpush2.bf16.msra.mxu0 0
        %996 = vmatprep.subr.bf16.mxu0 0
        %997 = vmatpush2.bf16.msra.mxu0 0
        %998 = vmatprep.subr.bf16.mxu0 0
        %999 = vmatpush2.bf16.msra.mxu0 0
        %1000 = vmatprep.subr.bf16.mxu0 0
        %1001 = vmatpush2.bf16.msra.mxu0 0
        %1002 = vmatprep.mubr.bf16.mxu0 0
        %1003 = vmatmul.mubr.bf16.gmra.mxu0 %v968
        %v1004 = vpop.f32.mrf.mxu0
        %v1005 = vadd.f32 %v484, %v1004
        %v1006 = vpop.f32.mrf.mxu0
        %v1007 = vadd.f32 %v484, %v1006
        %v1008 = vpop.f32.mrf.mxu0
        %v1009 = vpop.f32.mrf.mxu0
        %1010 = vdwg.mxu0
        %1011 = vmatprep.subr.bf16.mxu0 0
        %1012 = vmatpush1.bf16.msra.mxu0 0
        %1013 = vmatprep.subr.bf16.mxu0 0
        %1014 = vmatpush1.bf16.msra.mxu0 0
        %1015 = vmatprep.subr.bf16.mxu0 0
        %1016 = vmatpush1.bf16.msra.mxu0 0
        %1017 = vmatprep.subr.bf16.mxu0 0
        %1018 = vmatpush1.bf16.msra.mxu0 0
        %1019 = vmatprep.subr.bf16.mxu0 0
        %1020 = vmatpush1.bf16.msra.mxu0 0
        %1021 = vmatprep.subr.bf16.mxu0 0
        %1022 = vmatpush1.bf16.msra.mxu0 0
        %1023 = vmatprep.subr.bf16.mxu0 %v825
        %1024 = vmatpush1.bf16.msra.mxu0 %v824
        %1025 = vmatprep.subr.bf16.mxu0 %v777
        %1026 = vmatpush1.bf16.msra.mxu0 %v776
        %1027 = vmatprep.subr.bf16.mxu0 0
        %1028 = vmatpush2.bf16.msra.mxu0 0
        %1029 = vmatprep.subr.bf16.mxu0 0
        %1030 = vmatpush2.bf16.msra.mxu0 0
        %1031 = vmatprep.subr.bf16.mxu0 0
        %1032 = vmatpush2.bf16.msra.mxu0 0
        %1033 = vmatprep.subr.bf16.mxu0 0
        %1034 = vmatpush2.bf16.msra.mxu0 0
        %1035 = vmatprep.subr.bf16.mxu0 0
        %1036 = vmatpush2.bf16.msra.mxu0 0
        %1037 = vmatprep.subr.bf16.mxu0 0
        %1038 = vmatpush2.bf16.msra.mxu0 0
        %1039 = vmatprep.subr.bf16.mxu0 0
        %1040 = vmatpush2.bf16.msra.mxu0 0
        %1041 = vmatprep.subr.bf16.mxu0 0
        %1042 = vmatpush2.bf16.msra.mxu0 0
        %1043 = vmatprep.mubr.bf16.mxu0 0
        %1044 = vmatmul.mubr.bf16.gmra.mxu0 %v968
        %v1045 = vpop.f32.mrf.mxu0
        %v1046 = vadd.f32 %v484, %v1045
        %v1047 = vpop.f32.mrf.mxu0
        %v1048 = vadd.f32 %v484, %v1047
        %v1049 = vpop.f32.mrf.mxu0
        %v1050 = vpop.f32.mrf.mxu0
        %1051 = vdwg.mxu0
        %1052 = vmatprep.subr.bf16.mxu0 0
        %1053 = vmatpush1.bf16.msra.mxu0 0
        %1054 = vmatprep.subr.bf16.mxu0 0
        %1055 = vmatpush1.bf16.msra.mxu0 0
        %1056 = vmatprep.subr.bf16.mxu0 0
        %1057 = vmatpush1.bf16.msra.mxu0 0
        %1058 = vmatprep.subr.bf16.mxu0 0
        %1059 = vmatpush1.bf16.msra.mxu0 0
        %1060 = vmatprep.subr.bf16.mxu0 0
        %1061 = vmatpush1.bf16.msra.mxu0 0
        %1062 = vmatprep.subr.bf16.mxu0 0
        %1063 = vmatpush1.bf16.msra.mxu0 0
        %1064 = vmatprep.subr.bf16.mxu0 %v827
        %1065 = vmatpush1.bf16.msra.mxu0 %v826
        %1066 = vmatprep.subr.bf16.mxu0 %v779
        %1067 = vmatpush1.bf16.msra.mxu0 %v778
        %1068 = vmatprep.subr.bf16.mxu0 0
        %1069 = vmatpush2.bf16.msra.mxu0 0
        %1070 = vmatprep.subr.bf16.mxu0 0
        %1071 = vmatpush2.bf16.msra.mxu0 0
        %1072 = vmatprep.subr.bf16.mxu0 0
        %1073 = vmatpush2.bf16.msra.mxu0 0
        %1074 = vmatprep.subr.bf16.mxu0 0
        %1075 = vmatpush2.bf16.msra.mxu0 0
        %1076 = vmatprep.subr.bf16.mxu0 0
        %1077 = vmatpush2.bf16.msra.mxu0 0
        %1078 = vmatprep.subr.bf16.mxu0 0
        %1079 = vmatpush2.bf16.msra.mxu0 0
        %1080 = vmatprep.subr.bf16.mxu0 0
        %1081 = vmatpush2.bf16.msra.mxu0 0
        %1082 = vmatprep.subr.bf16.mxu0 0
        %1083 = vmatpush2.bf16.msra.mxu0 0
        %1084 = vmatprep.mubr.bf16.mxu0 0
        %1085 = vmatmul.mubr.bf16.gmra.mxu0 %v968
        %v1086 = vpop.f32.mrf.mxu0
        %v1087 = vadd.f32 %v484, %v1086
        %v1088 = vpop.f32.mrf.mxu0
        %v1089 = vadd.f32 %v484, %v1088
        %v1090 = vpop.f32.mrf.mxu0
        %v1091 = vpop.f32.mrf.mxu0
        %1092 = vdwg.mxu0
        %1093 = vmatprep.subr.bf16.mxu0 0
        %1094 = vmatpush1.bf16.msra.mxu0 0
        %1095 = vmatprep.subr.bf16.mxu0 0
        %1096 = vmatpush1.bf16.msra.mxu0 0
        %1097 = vmatprep.subr.bf16.mxu0 0
        %1098 = vmatpush1.bf16.msra.mxu0 0
        %1099 = vmatprep.subr.bf16.mxu0 0
        %1100 = vmatpush1.bf16.msra.mxu0 0
        %1101 = vmatprep.subr.bf16.mxu0 0
        %1102 = vmatpush1.bf16.msra.mxu0 0
        %1103 = vmatprep.subr.bf16.mxu0 0
        %1104 = vmatpush1.bf16.msra.mxu0 0
        %1105 = vmatprep.subr.bf16.mxu0 %v829
        %1106 = vmatpush1.bf16.msra.mxu0 %v828
        %1107 = vmatprep.subr.bf16.mxu0 %v781
        %1108 = vmatpush1.bf16.msra.mxu0 %v780
        %1109 = vmatprep.subr.bf16.mxu0 0
        %1110 = vmatpush2.bf16.msra.mxu0 0
        %1111 = vmatprep.subr.bf16.mxu0 0
        %1112 = vmatpush2.bf16.msra.mxu0 0
        %1113 = vmatprep.subr.bf16.mxu0 0
        %1114 = vmatpush2.bf16.msra.mxu0 0
        %1115 = vmatprep.subr.bf16.mxu0 0
        %1116 = vmatpush2.bf16.msra.mxu0 0
        %1117 = vmatprep.subr.bf16.mxu0 0
        %1118 = vmatpush2.bf16.msra.mxu0 0
        %1119 = vmatprep.subr.bf16.mxu0 0
        %1120 = vmatpush2.bf16.msra.mxu0 0
        %1121 = vmatprep.subr.bf16.mxu0 0
        %1122 = vmatpush2.bf16.msra.mxu0 0
        %1123 = vmatprep.subr.bf16.mxu0 0
        %1124 = vmatpush2.bf16.msra.mxu0 0
        %1125 = vmatprep.mubr.bf16.mxu0 0
        %1126 = vmatmul.mubr.bf16.gmra.mxu0 %v968
        %v1127 = vpop.f32.mrf.mxu0
        %v1128 = vadd.f32 %v484, %v1127
        %v1129 = vpop.f32.mrf.mxu0
        %v1130 = vadd.f32 %v484, %v1129
        %v1131 = vpop.f32.mrf.mxu0
        %v1132 = vpop.f32.mrf.mxu0
        %1133 = vdwg.mxu0
        %1134 = vmatprep.subr.bf16.mxu0 0
        %1135 = vmatpush1.bf16.msra.mxu0 0
        %1136 = vmatprep.subr.bf16.mxu0 0
        %1137 = vmatpush1.bf16.msra.mxu0 0
        %1138 = vmatprep.subr.bf16.mxu0 0
        %1139 = vmatpush1.bf16.msra.mxu0 0
        %1140 = vmatprep.subr.bf16.mxu0 0
        %1141 = vmatpush1.bf16.msra.mxu0 0
        %1142 = vmatprep.subr.bf16.mxu0 0
        %1143 = vmatpush1.bf16.msra.mxu0 0
        %1144 = vmatprep.subr.bf16.mxu0 0
        %1145 = vmatpush1.bf16.msra.mxu0 0
        %1146 = vmatprep.subr.bf16.mxu0 %v831
        %1147 = vmatpush1.bf16.msra.mxu0 %v830
        %1148 = vmatprep.subr.bf16.mxu0 %v783
        %1149 = vmatpush1.bf16.msra.mxu0 %v782
        %1150 = vmatprep.subr.bf16.mxu0 0
        %1151 = vmatpush2.bf16.msra.mxu0 0
        %1152 = vmatprep.subr.bf16.mxu0 0
        %1153 = vmatpush2.bf16.msra.mxu0 0
        %1154 = vmatprep.subr.bf16.mxu0 0
        %1155 = vmatpush2.bf16.msra.mxu0 0
        %1156 = vmatprep.subr.bf16.mxu0 0
        %1157 = vmatpush2.bf16.msra.mxu0 0
        %1158 = vmatprep.subr.bf16.mxu0 0
        %1159 = vmatpush2.bf16.msra.mxu0 0
        %1160 = vmatprep.subr.bf16.mxu0 0
        %1161 = vmatpush2.bf16.msra.mxu0 0
        %1162 = vmatprep.subr.bf16.mxu0 0
        %1163 = vmatpush2.bf16.msra.mxu0 0
        %1164 = vmatprep.subr.bf16.mxu0 0
        %1165 = vmatpush2.bf16.msra.mxu0 0
        %1166 = vmatprep.mubr.bf16.mxu0 0
        %1167 = vmatmul.mubr.bf16.gmra.mxu0 %v968
        %v1168 = vpop.f32.mrf.mxu0
        %v1169 = vadd.f32 %v484, %v1168
        %v1170 = vpop.f32.mrf.mxu0
        %v1171 = vadd.f32 %v484, %v1170
        %v1172 = vpop.f32.mrf.mxu0
        %v1173 = vpop.f32.mrf.mxu0
        %1174 = vdwg.mxu0
        %1175 = vmatprep.subr.bf16.mxu0 0
        %1176 = vmatpush1.bf16.msra.mxu0 0
        %1177 = vmatprep.subr.bf16.mxu0 0
        %1178 = vmatpush1.bf16.msra.mxu0 0
        %1179 = vmatprep.subr.bf16.mxu0 0
        %1180 = vmatpush1.bf16.msra.mxu0 0
        %1181 = vmatprep.subr.bf16.mxu0 0
        %1182 = vmatpush1.bf16.msra.mxu0 0
        %1183 = vmatprep.subr.bf16.mxu0 0
        %1184 = vmatpush1.bf16.msra.mxu0 0
        %1185 = vmatprep.subr.bf16.mxu0 0
        %1186 = vmatpush1.bf16.msra.mxu0 0
        %1187 = vmatprep.subr.bf16.mxu0 %v833
        %1188 = vmatpush1.bf16.msra.mxu0 %v832
        %1189 = vmatprep.subr.bf16.mxu0 %v785
        %1190 = vmatpush1.bf16.msra.mxu0 %v784
        %1191 = vmatprep.subr.bf16.mxu0 0
        %1192 = vmatpush2.bf16.msra.mxu0 0
        %1193 = vmatprep.subr.bf16.mxu0 0
        %1194 = vmatpush2.bf16.msra.mxu0 0
        %1195 = vmatprep.subr.bf16.mxu0 0
        %1196 = vmatpush2.bf16.msra.mxu0 0
        %1197 = vmatprep.subr.bf16.mxu0 0
        %1198 = vmatpush2.bf16.msra.mxu0 0
        %1199 = vmatprep.subr.bf16.mxu0 0
        %1200 = vmatpush2.bf16.msra.mxu0 0
        %1201 = vmatprep.subr.bf16.mxu0 0
        %1202 = vmatpush2.bf16.msra.mxu0 0
        %1203 = vmatprep.subr.bf16.mxu0 0
        %1204 = vmatpush2.bf16.msra.mxu0 0
        %1205 = vmatprep.subr.bf16.mxu0 0
        %1206 = vmatpush2.bf16.msra.mxu0 0
        %1207 = vmatprep.mubr.bf16.mxu0 0
        %1208 = vmatmul.mubr.bf16.gmra.mxu0 %v968
        %v1209 = vpop.f32.mrf.mxu0
        %v1210 = vadd.f32 %v484, %v1209
        %v1211 = vpop.f32.mrf.mxu0
        %v1212 = vadd.f32 %v484, %v1211
        %v1213 = vpop.f32.mrf.mxu0
        %v1214 = vpop.f32.mrf.mxu0
        %1215 = vdwg.mxu0
        %1216 = vmatprep.subr.bf16.mxu0 0
        %1217 = vmatpush1.bf16.msra.mxu0 0
        %1218 = vmatprep.subr.bf16.mxu0 0
        %1219 = vmatpush1.bf16.msra.mxu0 0
        %1220 = vmatprep.subr.bf16.mxu0 0
        %1221 = vmatpush1.bf16.msra.mxu0 0
        %1222 = vmatprep.subr.bf16.mxu0 0
        %1223 = vmatpush1.bf16.msra.mxu0 0
        %1224 = vmatprep.subr.bf16.mxu0 0
        %1225 = vmatpush1.bf16.msra.mxu0 0
        %1226 = vmatprep.subr.bf16.mxu0 0
        %1227 = vmatpush1.bf16.msra.mxu0 0
        %1228 = vmatprep.subr.bf16.mxu0 %v835
        %1229 = vmatpush1.bf16.msra.mxu0 %v834
        %1230 = vmatprep.subr.bf16.mxu0 %v787
        %1231 = vmatpush1.bf16.msra.mxu0 %v786
        %1232 = vmatprep.subr.bf16.mxu0 0
        %1233 = vmatpush2.bf16.msra.mxu0 0
        %1234 = vmatprep.subr.bf16.mxu0 0
        %1235 = vmatpush2.bf16.msra.mxu0 0
        %1236 = vmatprep.subr.bf16.mxu0 0
        %1237 = vmatpush2.bf16.msra.mxu0 0
        %1238 = vmatprep.subr.bf16.mxu0 0
        %1239 = vmatpush2.bf16.msra.mxu0 0
        %1240 = vmatprep.subr.bf16.mxu0 0
        %1241 = vmatpush2.bf16.msra.mxu0 0
        %1242 = vmatprep.subr.bf16.mxu0 0
        %1243 = vmatpush2.bf16.msra.mxu0 0
        %1244 = vmatprep.subr.bf16.mxu0 0
        %1245 = vmatpush2.bf16.msra.mxu0 0
        %1246 = vmatprep.subr.bf16.mxu0 0
        %1247 = vmatpush2.bf16.msra.mxu0 0
        %1248 = vmatprep.mubr.bf16.mxu0 0
        %1249 = vmatmul.mubr.bf16.gmra.mxu0 %v968
        %v1250 = vpop.f32.mrf.mxu0
        %v1251 = vadd.f32 %v484, %v1250
        %v1252 = vpop.f32.mrf.mxu0
        %v1253 = vadd.f32 %v484, %v1252
        %v1254 = vpop.f32.mrf.mxu0
        %v1255 = vpop.f32.mrf.mxu0
        %1256 = vdwg.mxu0
        %1257 = vmatprep.subr.bf16.mxu0 0
        %1258 = vmatpush1.bf16.msra.mxu0 0
        %1259 = vmatprep.subr.bf16.mxu0 0
        %1260 = vmatpush1.bf16.msra.mxu0 0
        %1261 = vmatprep.subr.bf16.mxu0 0
        %1262 = vmatpush1.bf16.msra.mxu0 0
        %1263 = vmatprep.subr.bf16.mxu0 0
        %1264 = vmatpush1.bf16.msra.mxu0 0
        %1265 = vmatprep.subr.bf16.mxu0 0
        %1266 = vmatpush1.bf16.msra.mxu0 0
        %1267 = vmatprep.subr.bf16.mxu0 0
        %1268 = vmatpush1.bf16.msra.mxu0 0
        %1269 = vmatprep.subr.bf16.mxu0 %v837
        %1270 = vmatpush1.bf16.msra.mxu0 %v836
        %1271 = vmatprep.subr.bf16.mxu0 %v789
        %1272 = vmatpush1.bf16.msra.mxu0 %v788
        %1273 = vmatprep.subr.bf16.mxu0 0
        %1274 = vmatpush2.bf16.msra.mxu0 0
        %1275 = vmatprep.subr.bf16.mxu0 0
        %1276 = vmatpush2.bf16.msra.mxu0 0
        %1277 = vmatprep.subr.bf16.mxu0 0
        %1278 = vmatpush2.bf16.msra.mxu0 0
        %1279 = vmatprep.subr.bf16.mxu0 0
        %1280 = vmatpush2.bf16.msra.mxu0 0
        %1281 = vmatprep.subr.bf16.mxu0 0
        %1282 = vmatpush2.bf16.msra.mxu0 0
        %1283 = vmatprep.subr.bf16.mxu0 0
        %1284 = vmatpush2.bf16.msra.mxu0 0
        %1285 = vmatprep.subr.bf16.mxu0 0
        %1286 = vmatpush2.bf16.msra.mxu0 0
        %1287 = vmatprep.subr.bf16.mxu0 0
        %1288 = vmatpush2.bf16.msra.mxu0 0
        %1289 = vmatprep.mubr.bf16.mxu0 0
        %1290 = vmatmul.mubr.bf16.gmra.mxu0 %v968
        %v1291 = vpop.f32.mrf.mxu0
        %v1292 = vadd.f32 %v484, %v1291
        %v1293 = vpop.f32.mrf.mxu0
        %v1294 = vadd.f32 %v484, %v1293
        %v1295 = vpop.f32.mrf.mxu0
        %v1296 = vpop.f32.mrf.mxu0
        %1297 = vdwg.mxu0
        %1298 = vmatprep.subr.bf16.mxu0 0
        %1299 = vmatpush1.bf16.msra.mxu0 0
        %1300 = vmatprep.subr.bf16.mxu0 0
        %1301 = vmatpush1.bf16.msra.mxu0 0
        %1302 = vmatprep.subr.bf16.mxu0 0
        %1303 = vmatpush1.bf16.msra.mxu0 0
        %1304 = vmatprep.subr.bf16.mxu0 0
        %1305 = vmatpush1.bf16.msra.mxu0 0
        %1306 = vmatprep.subr.bf16.mxu0 0
        %1307 = vmatpush1.bf16.msra.mxu0 0
        %1308 = vmatprep.subr.bf16.mxu0 0
        %1309 = vmatpush1.bf16.msra.mxu0 0
        %1310 = vmatprep.subr.bf16.mxu0 %v839
        %1311 = vmatpush1.bf16.msra.mxu0 %v838
        %1312 = vmatprep.subr.bf16.mxu0 %v791
        %1313 = vmatpush1.bf16.msra.mxu0 %v790
        %1314 = vmatprep.subr.bf16.mxu0 0
        %1315 = vmatpush2.bf16.msra.mxu0 0
        %1316 = vmatprep.subr.bf16.mxu0 0
        %1317 = vmatpush2.bf16.msra.mxu0 0
        %1318 = vmatprep.subr.bf16.mxu0 0
        %1319 = vmatpush2.bf16.msra.mxu0 0
        %1320 = vmatprep.subr.bf16.mxu0 0
        %1321 = vmatpush2.bf16.msra.mxu0 0
        %1322 = vmatprep.subr.bf16.mxu0 0
        %1323 = vmatpush2.bf16.msra.mxu0 0
        %1324 = vmatprep.subr.bf16.mxu0 0
        %1325 = vmatpush2.bf16.msra.mxu0 0
        %1326 = vmatprep.subr.bf16.mxu0 0
        %1327 = vmatpush2.bf16.msra.mxu0 0
        %1328 = vmatprep.subr.bf16.mxu0 0
        %1329 = vmatpush2.bf16.msra.mxu0 0
        %1330 = vmatprep.mubr.bf16.mxu0 0
        %1331 = vmatmul.mubr.bf16.gmra.mxu0 %v968
        %v1332 = vpop.f32.mrf.mxu0
        %v1333 = vadd.f32 %v484, %v1332
        %v1334 = vpop.f32.mrf.mxu0
        %v1335 = vadd.f32 %v484, %v1334
        %v1336 = vpop.f32.mrf.mxu0
        %v1337 = vpop.f32.mrf.mxu0
        %1338 = vdwg.mxu0
        %1339 = vmatprep.subr.bf16.mxu0 0
        %1340 = vmatpush1.bf16.msra.mxu0 0
        %1341 = vmatprep.subr.bf16.mxu0 0
        %1342 = vmatpush1.bf16.msra.mxu0 0
        %1343 = vmatprep.subr.bf16.mxu0 0
        %1344 = vmatpush1.bf16.msra.mxu0 0
        %1345 = vmatprep.subr.bf16.mxu0 0
        %1346 = vmatpush1.bf16.msra.mxu0 0
        %1347 = vmatprep.subr.bf16.mxu0 0
        %1348 = vmatpush1.bf16.msra.mxu0 0
        %1349 = vmatprep.subr.bf16.mxu0 0
        %1350 = vmatpush1.bf16.msra.mxu0 0
        %1351 = vmatprep.subr.bf16.mxu0 %v841
        %1352 = vmatpush1.bf16.msra.mxu0 %v840
        %1353 = vmatprep.subr.bf16.mxu0 %v793
        %1354 = vmatpush1.bf16.msra.mxu0 %v792
        %1355 = vmatprep.subr.bf16.mxu0 0
        %1356 = vmatpush2.bf16.msra.mxu0 0
        %1357 = vmatprep.subr.bf16.mxu0 0
        %1358 = vmatpush2.bf16.msra.mxu0 0
        %1359 = vmatprep.subr.bf16.mxu0 0
        %1360 = vmatpush2.bf16.msra.mxu0 0
        %1361 = vmatprep.subr.bf16.mxu0 0
        %1362 = vmatpush2.bf16.msra.mxu0 0
        %1363 = vmatprep.subr.bf16.mxu0 0
        %1364 = vmatpush2.bf16.msra.mxu0 0
        %1365 = vmatprep.subr.bf16.mxu0 0
        %1366 = vmatpush2.bf16.msra.mxu0 0
        %1367 = vmatprep.subr.bf16.mxu0 0
        %1368 = vmatpush2.bf16.msra.mxu0 0
        %1369 = vmatprep.subr.bf16.mxu0 0
        %1370 = vmatpush2.bf16.msra.mxu0 0
        %1371 = vmatprep.mubr.bf16.mxu0 0
        %1372 = vmatmul.mubr.bf16.gmra.mxu0 %v968
        %v1373 = vpop.f32.mrf.mxu0
        %v1374 = vadd.f32 %v484, %v1373
        %v1375 = vpop.f32.mrf.mxu0
        %v1376 = vadd.f32 %v484, %v1375
        %v1377 = vpop.f32.mrf.mxu0
        %v1378 = vpop.f32.mrf.mxu0
        %1379 = vdwg.mxu0
        %1380 = vmatprep.subr.bf16.mxu0 0
        %1381 = vmatpush1.bf16.msra.mxu0 0
        %1382 = vmatprep.subr.bf16.mxu0 0
        %1383 = vmatpush1.bf16.msra.mxu0 0
        %1384 = vmatprep.subr.bf16.mxu0 0
        %1385 = vmatpush1.bf16.msra.mxu0 0
        %1386 = vmatprep.subr.bf16.mxu0 0
        %1387 = vmatpush1.bf16.msra.mxu0 0
        %1388 = vmatprep.subr.bf16.mxu0 0
        %1389 = vmatpush1.bf16.msra.mxu0 0
        %1390 = vmatprep.subr.bf16.mxu0 0
        %1391 = vmatpush1.bf16.msra.mxu0 0
        %1392 = vmatprep.subr.bf16.mxu0 %v843
        %1393 = vmatpush1.bf16.msra.mxu0 %v842
        %1394 = vmatprep.subr.bf16.mxu0 %v795
        %1395 = vmatpush1.bf16.msra.mxu0 %v794
        %1396 = vmatprep.subr.bf16.mxu0 0
        %1397 = vmatpush2.bf16.msra.mxu0 0
        %1398 = vmatprep.subr.bf16.mxu0 0
        %1399 = vmatpush2.bf16.msra.mxu0 0
        %1400 = vmatprep.subr.bf16.mxu0 0
        %1401 = vmatpush2.bf16.msra.mxu0 0
        %1402 = vmatprep.subr.bf16.mxu0 0
        %1403 = vmatpush2.bf16.msra.mxu0 0
        %1404 = vmatprep.subr.bf16.mxu0 0
        %1405 = vmatpush2.bf16.msra.mxu0 0
        %1406 = vmatprep.subr.bf16.mxu0 0
        %1407 = vmatpush2.bf16.msra.mxu0 0
        %1408 = vmatprep.subr.bf16.mxu0 0
        %1409 = vmatpush2.bf16.msra.mxu0 0
        %1410 = vmatprep.subr.bf16.mxu0 0
        %1411 = vmatpush2.bf16.msra.mxu0 0
        %1412 = vmatprep.mubr.bf16.mxu0 0
        %1413 = vmatmul.mubr.bf16.gmra.mxu0 %v968
        %v1414 = vpop.f32.mrf.mxu0
        %v1415 = vadd.f32 %v484, %v1414
        %v1416 = vpop.f32.mrf.mxu0
        %v1417 = vadd.f32 %v484, %v1416
        %v1418 = vpop.f32.mrf.mxu0
        %v1419 = vpop.f32.mrf.mxu0
        %1420 = vdwg.mxu0
        %1421 = vmatprep.subr.bf16.mxu0 0
        %1422 = vmatpush1.bf16.msra.mxu0 0
        %1423 = vmatprep.subr.bf16.mxu0 0
        %1424 = vmatpush1.bf16.msra.mxu0 0
        %1425 = vmatprep.subr.bf16.mxu0 0
        %1426 = vmatpush1.bf16.msra.mxu0 0
        %1427 = vmatprep.subr.bf16.mxu0 0
        %1428 = vmatpush1.bf16.msra.mxu0 0
        %1429 = vmatprep.subr.bf16.mxu0 0
        %1430 = vmatpush1.bf16.msra.mxu0 0
        %1431 = vmatprep.subr.bf16.mxu0 0
        %1432 = vmatpush1.bf16.msra.mxu0 0
        %1433 = vmatprep.subr.bf16.mxu0 %v845
        %1434 = vmatpush1.bf16.msra.mxu0 %v844
        %1435 = vmatprep.subr.bf16.mxu0 %v797
        %1436 = vmatpush1.bf16.msra.mxu0 %v796
        %1437 = vmatprep.subr.bf16.mxu0 0
        %1438 = vmatpush2.bf16.msra.mxu0 0
        %1439 = vmatprep.subr.bf16.mxu0 0
        %1440 = vmatpush2.bf16.msra.mxu0 0
        %1441 = vmatprep.subr.bf16.mxu0 0
        %1442 = vmatpush2.bf16.msra.mxu0 0
        %1443 = vmatprep.subr.bf16.mxu0 0
        %1444 = vmatpush2.bf16.msra.mxu0 0
        %1445 = vmatprep.subr.bf16.mxu0 0
        %1446 = vmatpush2.bf16.msra.mxu0 0
        %1447 = vmatprep.subr.bf16.mxu0 0
        %1448 = vmatpush2.bf16.msra.mxu0 0
        %1449 = vmatprep.subr.bf16.mxu0 0
        %1450 = vmatpush2.bf16.msra.mxu0 0
        %1451 = vmatprep.subr.bf16.mxu0 0
        %1452 = vmatpush2.bf16.msra.mxu0 0
        %1453 = vmatprep.mubr.bf16.mxu0 0
        %1454 = vmatmul.mubr.bf16.gmra.mxu0 %v968
        %v1455 = vpop.f32.mrf.mxu0
        %v1456 = vadd.f32 %v484, %v1455
        %v1457 = vpop.f32.mrf.mxu0
        %v1458 = vadd.f32 %v484, %v1457
        %v1459 = vpop.f32.mrf.mxu0
        %v1460 = vpop.f32.mrf.mxu0
        %1461 = vdwg.mxu0
        %1462 = vmatprep.subr.bf16.mxu0 0
        %1463 = vmatpush1.bf16.msra.mxu0 0
        %1464 = vmatprep.subr.bf16.mxu0 0
        %1465 = vmatpush1.bf16.msra.mxu0 0
        %1466 = vmatprep.subr.bf16.mxu0 0
        %1467 = vmatpush1.bf16.msra.mxu0 0
        %1468 = vmatprep.subr.bf16.mxu0 0
        %1469 = vmatpush1.bf16.msra.mxu0 0
        %1470 = vmatprep.subr.bf16.mxu0 0
        %1471 = vmatpush1.bf16.msra.mxu0 0
        %1472 = vmatprep.subr.bf16.mxu0 0
        %1473 = vmatpush1.bf16.msra.mxu0 0
        %1474 = vmatprep.subr.bf16.mxu0 %v847
        %1475 = vmatpush1.bf16.msra.mxu0 %v846
        %1476 = vmatprep.subr.bf16.mxu0 %v799
        %1477 = vmatpush1.bf16.msra.mxu0 %v798
        %1478 = vmatprep.subr.bf16.mxu0 0
        %1479 = vmatpush2.bf16.msra.mxu0 0
        %1480 = vmatprep.subr.bf16.mxu0 0
        %1481 = vmatpush2.bf16.msra.mxu0 0
        %1482 = vmatprep.subr.bf16.mxu0 0
        %1483 = vmatpush2.bf16.msra.mxu0 0
        %1484 = vmatprep.subr.bf16.mxu0 0
        %1485 = vmatpush2.bf16.msra.mxu0 0
        %1486 = vmatprep.subr.bf16.mxu0 0
        %1487 = vmatpush2.bf16.msra.mxu0 0
        %1488 = vmatprep.subr.bf16.mxu0 0
        %1489 = vmatpush2.bf16.msra.mxu0 0
        %1490 = vmatprep.subr.bf16.mxu0 0
        %1491 = vmatpush2.bf16.msra.mxu0 0
        %1492 = vmatprep.subr.bf16.mxu0 0
        %1493 = vmatpush2.bf16.msra.mxu0 0
        %1494 = vmatprep.mubr.bf16.mxu0 0
        %1495 = vmatmul.mubr.bf16.gmra.mxu0 %v968
        %v1496 = vpop.f32.mrf.mxu0
        %v1497 = vadd.f32 %v484, %v1496
        %v1498 = vpop.f32.mrf.mxu0
        %v1499 = vadd.f32 %v484, %v1498
        %v1500 = vpop.f32.mrf.mxu0
        %v1501 = vpop.f32.mrf.mxu0
        %1502 = vdwg.mxu0
        %1503 = vmatprep.subr.bf16.mxu0 0
        %1504 = vmatpush1.bf16.msra.mxu0 0
        %1505 = vmatprep.subr.bf16.mxu0 0
        %1506 = vmatpush1.bf16.msra.mxu0 0
        %1507 = vmatprep.subr.bf16.mxu0 0
        %1508 = vmatpush1.bf16.msra.mxu0 0
        %1509 = vmatprep.subr.bf16.mxu0 0
        %1510 = vmatpush1.bf16.msra.mxu0 0
        %1511 = vmatprep.subr.bf16.mxu0 0
        %1512 = vmatpush1.bf16.msra.mxu0 0
        %1513 = vmatprep.subr.bf16.mxu0 0
        %1514 = vmatpush1.bf16.msra.mxu0 0
        %1515 = vmatprep.subr.bf16.mxu0 %v849
        %1516 = vmatpush1.bf16.msra.mxu0 %v848
        %1517 = vmatprep.subr.bf16.mxu0 %v801
        %1518 = vmatpush1.bf16.msra.mxu0 %v800
        %1519 = vmatprep.subr.bf16.mxu0 0
        %1520 = vmatpush2.bf16.msra.mxu0 0
        %1521 = vmatprep.subr.bf16.mxu0 0
        %1522 = vmatpush2.bf16.msra.mxu0 0
        %1523 = vmatprep.subr.bf16.mxu0 0
        %1524 = vmatpush2.bf16.msra.mxu0 0
        %1525 = vmatprep.subr.bf16.mxu0 0
        %1526 = vmatpush2.bf16.msra.mxu0 0
        %1527 = vmatprep.subr.bf16.mxu0 0
        %1528 = vmatpush2.bf16.msra.mxu0 0
        %1529 = vmatprep.subr.bf16.mxu0 0
        %1530 = vmatpush2.bf16.msra.mxu0 0
        %1531 = vmatprep.subr.bf16.mxu0 0
        %1532 = vmatpush2.bf16.msra.mxu0 0
        %1533 = vmatprep.subr.bf16.mxu0 0
        %1534 = vmatpush2.bf16.msra.mxu0 0
        %1535 = vmatprep.mubr.bf16.mxu0 0
        %1536 = vmatmul.mubr.bf16.gmra.mxu0 %v968
        %v1537 = vpop.f32.mrf.mxu0
        %v1538 = vadd.f32 %v484, %v1537
        %v1539 = vpop.f32.mrf.mxu0
        %v1540 = vadd.f32 %v484, %v1539
        %v1541 = vpop.f32.mrf.mxu0
        %v1542 = vpop.f32.mrf.mxu0
        %1543 = vdwg.mxu0
        %1544 = vmatprep.subr.bf16.mxu0 0
        %1545 = vmatpush1.bf16.msra.mxu0 0
        %1546 = vmatprep.subr.bf16.mxu0 0
        %1547 = vmatpush1.bf16.msra.mxu0 0
        %1548 = vmatprep.subr.bf16.mxu0 0
        %1549 = vmatpush1.bf16.msra.mxu0 0
        %1550 = vmatprep.subr.bf16.mxu0 0
        %1551 = vmatpush1.bf16.msra.mxu0 0
        %1552 = vmatprep.subr.bf16.mxu0 0
        %1553 = vmatpush1.bf16.msra.mxu0 0
        %1554 = vmatprep.subr.bf16.mxu0 0
        %1555 = vmatpush1.bf16.msra.mxu0 0
        %1556 = vmatprep.subr.bf16.mxu0 %v851
        %1557 = vmatpush1.bf16.msra.mxu0 %v850
        %1558 = vmatprep.subr.bf16.mxu0 %v803
        %1559 = vmatpush1.bf16.msra.mxu0 %v802
        %1560 = vmatprep.subr.bf16.mxu0 0
        %1561 = vmatpush2.bf16.msra.mxu0 0
        %1562 = vmatprep.subr.bf16.mxu0 0
        %1563 = vmatpush2.bf16.msra.mxu0 0
        %1564 = vmatprep.subr.bf16.mxu0 0
        %1565 = vmatpush2.bf16.msra.mxu0 0
        %1566 = vmatprep.subr.bf16.mxu0 0
        %1567 = vmatpush2.bf16.msra.mxu0 0
        %1568 = vmatprep.subr.bf16.mxu0 0
        %1569 = vmatpush2.bf16.msra.mxu0 0
        %1570 = vmatprep.subr.bf16.mxu0 0
        %1571 = vmatpush2.bf16.msra.mxu0 0
        %1572 = vmatprep.subr.bf16.mxu0 0
        %1573 = vmatpush2.bf16.msra.mxu0 0
        %1574 = vmatprep.subr.bf16.mxu0 0
        %1575 = vmatpush2.bf16.msra.mxu0 0
        %1576 = vmatprep.mubr.bf16.mxu0 0
        %1577 = vmatmul.mubr.bf16.gmra.mxu0 %v968
        %v1578 = vpop.f32.mrf.mxu0
        %v1579 = vadd.f32 %v484, %v1578
        %v1580 = vpop.f32.mrf.mxu0
        %v1581 = vadd.f32 %v484, %v1580
        %v1582 = vpop.f32.mrf.mxu0
        %v1583 = vpop.f32.mrf.mxu0
        %1584 = vdwg.mxu0
        %1585 = vmatprep.subr.bf16.mxu0 0
        %1586 = vmatpush1.bf16.msra.mxu0 0
        %1587 = vmatprep.subr.bf16.mxu0 0
        %1588 = vmatpush1.bf16.msra.mxu0 0
        %1589 = vmatprep.subr.bf16.mxu0 0
        %1590 = vmatpush1.bf16.msra.mxu0 0
        %1591 = vmatprep.subr.bf16.mxu0 0
        %1592 = vmatpush1.bf16.msra.mxu0 0
        %1593 = vmatprep.subr.bf16.mxu0 0
        %1594 = vmatpush1.bf16.msra.mxu0 0
        %1595 = vmatprep.subr.bf16.mxu0 0
        %1596 = vmatpush1.bf16.msra.mxu0 0
        %1597 = vmatprep.subr.bf16.mxu0 %v853
        %1598 = vmatpush1.bf16.msra.mxu0 %v852
        %1599 = vmatprep.subr.bf16.mxu0 %v805
        %1600 = vmatpush1.bf16.msra.mxu0 %v804
        %1601 = vmatprep.subr.bf16.mxu0 0
        %1602 = vmatpush2.bf16.msra.mxu0 0
        %1603 = vmatprep.subr.bf16.mxu0 0
        %1604 = vmatpush2.bf16.msra.mxu0 0
        %1605 = vmatprep.subr.bf16.mxu0 0
        %1606 = vmatpush2.bf16.msra.mxu0 0
        %1607 = vmatprep.subr.bf16.mxu0 0
        %1608 = vmatpush2.bf16.msra.mxu0 0
        %1609 = vmatprep.subr.bf16.mxu0 0
        %1610 = vmatpush2.bf16.msra.mxu0 0
        %1611 = vmatprep.subr.bf16.mxu0 0
        %1612 = vmatpush2.bf16.msra.mxu0 0
        %1613 = vmatprep.subr.bf16.mxu0 0
        %1614 = vmatpush2.bf16.msra.mxu0 0
        %1615 = vmatprep.subr.bf16.mxu0 0
        %1616 = vmatpush2.bf16.msra.mxu0 0
        %1617 = vmatprep.mubr.bf16.mxu0 0
        %1618 = vmatmul.mubr.bf16.gmra.mxu0 %v968
        %v1619 = vpop.f32.mrf.mxu0
        %v1620 = vadd.f32 %v484, %v1619
        %v1621 = vpop.f32.mrf.mxu0
        %v1622 = vadd.f32 %v484, %v1621
        %v1623 = vpop.f32.mrf.mxu0
        %v1624 = vpop.f32.mrf.mxu0
        %1625 = vdwg.mxu0
        %1626 = vmatprep.subr.bf16.mxu0 0
        %1627 = vmatpush1.bf16.msra.mxu0 0
        %1628 = vmatprep.subr.bf16.mxu0 0
        %1629 = vmatpush1.bf16.msra.mxu0 0
        %1630 = vmatprep.subr.bf16.mxu0 0
        %1631 = vmatpush1.bf16.msra.mxu0 0
        %1632 = vmatprep.subr.bf16.mxu0 0
        %1633 = vmatpush1.bf16.msra.mxu0 0
        %1634 = vmatprep.subr.bf16.mxu0 0
        %1635 = vmatpush1.bf16.msra.mxu0 0
        %1636 = vmatprep.subr.bf16.mxu0 0
        %1637 = vmatpush1.bf16.msra.mxu0 0
        %1638 = vmatprep.subr.bf16.mxu0 %v855
        %1639 = vmatpush1.bf16.msra.mxu0 %v854
        %1640 = vmatprep.subr.bf16.mxu0 %v807
        %1641 = vmatpush1.bf16.msra.mxu0 %v806
        %1642 = vmatprep.subr.bf16.mxu0 0
        %1643 = vmatpush2.bf16.msra.mxu0 0
        %1644 = vmatprep.subr.bf16.mxu0 0
        %1645 = vmatpush2.bf16.msra.mxu0 0
        %1646 = vmatprep.subr.bf16.mxu0 0
        %1647 = vmatpush2.bf16.msra.mxu0 0
        %1648 = vmatprep.subr.bf16.mxu0 0
        %1649 = vmatpush2.bf16.msra.mxu0 0
        %1650 = vmatprep.subr.bf16.mxu0 0
        %1651 = vmatpush2.bf16.msra.mxu0 0
        %1652 = vmatprep.subr.bf16.mxu0 0
        %1653 = vmatpush2.bf16.msra.mxu0 0
        %1654 = vmatprep.subr.bf16.mxu0 0
        %1655 = vmatpush2.bf16.msra.mxu0 0
        %1656 = vmatprep.subr.bf16.mxu0 0
        %1657 = vmatpush2.bf16.msra.mxu0 0
        %1658 = vmatprep.mubr.bf16.mxu0 0
        %1659 = vmatmul.mubr.bf16.gmra.mxu0 %v968
        %v1660 = vpop.f32.mrf.mxu0
        %v1661 = vadd.f32 %v484, %v1660
        %v1662 = vpop.f32.mrf.mxu0
        %v1663 = vadd.f32 %v484, %v1662
        %v1664 = vpop.f32.mrf.mxu0
        %v1665 = vpop.f32.mrf.mxu0
        %1666 = vdwg.mxu0
        %1667 = vmatprep.subr.bf16.mxu0 0
        %1668 = vmatpush1.bf16.msra.mxu0 0
        %1669 = vmatprep.subr.bf16.mxu0 0
        %1670 = vmatpush1.bf16.msra.mxu0 0
        %1671 = vmatprep.subr.bf16.mxu0 0
        %1672 = vmatpush1.bf16.msra.mxu0 0
        %1673 = vmatprep.subr.bf16.mxu0 0
        %1674 = vmatpush1.bf16.msra.mxu0 0
        %1675 = vmatprep.subr.bf16.mxu0 0
        %1676 = vmatpush1.bf16.msra.mxu0 0
        %1677 = vmatprep.subr.bf16.mxu0 0
        %1678 = vmatpush1.bf16.msra.mxu0 0
        %1679 = vmatprep.subr.bf16.mxu0 %v857
        %1680 = vmatpush1.bf16.msra.mxu0 %v856
        %1681 = vmatprep.subr.bf16.mxu0 %v809
        %1682 = vmatpush1.bf16.msra.mxu0 %v808
        %1683 = vmatprep.subr.bf16.mxu0 0
        %1684 = vmatpush2.bf16.msra.mxu0 0
        %1685 = vmatprep.subr.bf16.mxu0 0
        %1686 = vmatpush2.bf16.msra.mxu0 0
        %1687 = vmatprep.subr.bf16.mxu0 0
        %1688 = vmatpush2.bf16.msra.mxu0 0
        %1689 = vmatprep.subr.bf16.mxu0 0
        %1690 = vmatpush2.bf16.msra.mxu0 0
        %1691 = vmatprep.subr.bf16.mxu0 0
        %1692 = vmatpush2.bf16.msra.mxu0 0
        %1693 = vmatprep.subr.bf16.mxu0 0
        %1694 = vmatpush2.bf16.msra.mxu0 0
        %1695 = vmatprep.subr.bf16.mxu0 0
        %1696 = vmatpush2.bf16.msra.mxu0 0
        %1697 = vmatprep.subr.bf16.mxu0 0
        %1698 = vmatpush2.bf16.msra.mxu0 0
        %1699 = vmatprep.mubr.bf16.mxu0 0
        %1700 = vmatmul.mubr.bf16.gmra.mxu0 %v968
        %v1701 = vpop.f32.mrf.mxu0
        %v1702 = vadd.f32 %v484, %v1701
        %v1703 = vpop.f32.mrf.mxu0
        %v1704 = vadd.f32 %v484, %v1703
        %v1705 = vpop.f32.mrf.mxu0
        %v1706 = vpop.f32.mrf.mxu0
        %1707 = vdwg.mxu0
        %1708 = vmatprep.subr.bf16.mxu0 0
        %1709 = vmatpush1.bf16.msra.mxu0 0
        %1710 = vmatprep.subr.bf16.mxu0 0
        %1711 = vmatpush1.bf16.msra.mxu0 0
        %1712 = vmatprep.subr.bf16.mxu0 0
        %1713 = vmatpush1.bf16.msra.mxu0 0
        %1714 = vmatprep.subr.bf16.mxu0 0
        %1715 = vmatpush1.bf16.msra.mxu0 0
        %1716 = vmatprep.subr.bf16.mxu0 0
        %1717 = vmatpush1.bf16.msra.mxu0 0
        %1718 = vmatprep.subr.bf16.mxu0 0
        %1719 = vmatpush1.bf16.msra.mxu0 0
        %1720 = vmatprep.subr.bf16.mxu0 %v859
        %1721 = vmatpush1.bf16.msra.mxu0 %v858
        %1722 = vmatprep.subr.bf16.mxu0 %v811
        %1723 = vmatpush1.bf16.msra.mxu0 %v810
        %1724 = vmatprep.subr.bf16.mxu0 0
        %1725 = vmatpush2.bf16.msra.mxu0 0
        %1726 = vmatprep.subr.bf16.mxu0 0
        %1727 = vmatpush2.bf16.msra.mxu0 0
        %1728 = vmatprep.subr.bf16.mxu0 0
        %1729 = vmatpush2.bf16.msra.mxu0 0
        %1730 = vmatprep.subr.bf16.mxu0 0
        %1731 = vmatpush2.bf16.msra.mxu0 0
        %1732 = vmatprep.subr.bf16.mxu0 0
        %1733 = vmatpush2.bf16.msra.mxu0 0
        %1734 = vmatprep.subr.bf16.mxu0 0
        %1735 = vmatpush2.bf16.msra.mxu0 0
        %1736 = vmatprep.subr.bf16.mxu0 0
        %1737 = vmatpush2.bf16.msra.mxu0 0
        %1738 = vmatprep.subr.bf16.mxu0 0
        %1739 = vmatpush2.bf16.msra.mxu0 0
        %1740 = vmatprep.mubr.bf16.mxu0 0
        %1741 = vmatmul.mubr.bf16.gmra.mxu0 %v968
        %v1742 = vpop.f32.mrf.mxu0
        %v1743 = vadd.f32 %v484, %v1742
        %v1744 = vpop.f32.mrf.mxu0
        %v1745 = vadd.f32 %v484, %v1744
        %v1746 = vpop.f32.mrf.mxu0
        %v1747 = vpop.f32.mrf.mxu0
        %1748 = vdwg.mxu0
        %1749 = vmatprep.subr.bf16.mxu0 0
        %1750 = vmatpush1.bf16.msra.mxu0 0
        %1751 = vmatprep.subr.bf16.mxu0 0
        %1752 = vmatpush1.bf16.msra.mxu0 0
        %1753 = vmatprep.subr.bf16.mxu0 0
        %1754 = vmatpush1.bf16.msra.mxu0 0
        %1755 = vmatprep.subr.bf16.mxu0 0
        %1756 = vmatpush1.bf16.msra.mxu0 0
        %1757 = vmatprep.subr.bf16.mxu0 0
        %1758 = vmatpush1.bf16.msra.mxu0 0
        %1759 = vmatprep.subr.bf16.mxu0 0
        %1760 = vmatpush1.bf16.msra.mxu0 0
        %1761 = vmatprep.subr.bf16.mxu0 %v861
        %1762 = vmatpush1.bf16.msra.mxu0 %v860
        %1763 = vmatprep.subr.bf16.mxu0 %v813
        %1764 = vmatpush1.bf16.msra.mxu0 %v812
        %1765 = vmatprep.subr.bf16.mxu0 0
        %1766 = vmatpush2.bf16.msra.mxu0 0
        %1767 = vmatprep.subr.bf16.mxu0 0
        %1768 = vmatpush2.bf16.msra.mxu0 0
        %1769 = vmatprep.subr.bf16.mxu0 0
        %1770 = vmatpush2.bf16.msra.mxu0 0
        %1771 = vmatprep.subr.bf16.mxu0 0
        %1772 = vmatpush2.bf16.msra.mxu0 0
        %1773 = vmatprep.subr.bf16.mxu0 0
        %1774 = vmatpush2.bf16.msra.mxu0 0
        %1775 = vmatprep.subr.bf16.mxu0 0
        %1776 = vmatpush2.bf16.msra.mxu0 0
        %1777 = vmatprep.subr.bf16.mxu0 0
        %1778 = vmatpush2.bf16.msra.mxu0 0
        %1779 = vmatprep.subr.bf16.mxu0 0
        %1780 = vmatpush2.bf16.msra.mxu0 0
        %1781 = vmatprep.mubr.bf16.mxu0 0
        %1782 = vmatmul.mubr.bf16.gmra.mxu0 %v968
        %v1783 = vpop.f32.mrf.mxu0
        %v1784 = vadd.f32 %v484, %v1783
        %v1785 = vpop.f32.mrf.mxu0
        %v1786 = vadd.f32 %v484, %v1785
        %v1787 = vpop.f32.mrf.mxu0
        %v1788 = vpop.f32.mrf.mxu0
        %1789 = vdwg.mxu0
        %1790 = vmatprep.subr.bf16.mxu0 0
        %1791 = vmatpush1.bf16.msra.mxu0 0
        %1792 = vmatprep.subr.bf16.mxu0 0
        %1793 = vmatpush1.bf16.msra.mxu0 0
        %1794 = vmatprep.subr.bf16.mxu0 0
        %1795 = vmatpush1.bf16.msra.mxu0 0
        %1796 = vmatprep.subr.bf16.mxu0 0
        %1797 = vmatpush1.bf16.msra.mxu0 0
        %1798 = vmatprep.subr.bf16.mxu0 0
        %1799 = vmatpush1.bf16.msra.mxu0 0
        %1800 = vmatprep.subr.bf16.mxu0 0
        %1801 = vmatpush1.bf16.msra.mxu0 0
        %1802 = vmatprep.subr.bf16.mxu0 %v863
        %1803 = vmatpush1.bf16.msra.mxu0 %v862
        %1804 = vmatprep.subr.bf16.mxu0 %v815
        %1805 = vmatpush1.bf16.msra.mxu0 %v814
        %1806 = vmatprep.subr.bf16.mxu0 0
        %1807 = vmatpush2.bf16.msra.mxu0 0
        %1808 = vmatprep.subr.bf16.mxu0 0
        %1809 = vmatpush2.bf16.msra.mxu0 0
        %1810 = vmatprep.subr.bf16.mxu0 0
        %1811 = vmatpush2.bf16.msra.mxu0 0
        %1812 = vmatprep.subr.bf16.mxu0 0
        %1813 = vmatpush2.bf16.msra.mxu0 0
        %1814 = vmatprep.subr.bf16.mxu0 0
        %1815 = vmatpush2.bf16.msra.mxu0 0
        %1816 = vmatprep.subr.bf16.mxu0 0
        %1817 = vmatpush2.bf16.msra.mxu0 0
        %1818 = vmatprep.subr.bf16.mxu0 0
        %1819 = vmatpush2.bf16.msra.mxu0 0
        %1820 = vmatprep.subr.bf16.mxu0 0
        %1821 = vmatpush2.bf16.msra.mxu0 0
        %1822 = vmatprep.mubr.bf16.mxu0 0
        %1823 = vmatmul.mubr.bf16.gmra.mxu0 %v968
        %v1824 = vpop.f32.mrf.mxu0
        %v1825 = vadd.f32 %v484, %v1824
        %v1826 = vpop.f32.mrf.mxu0
        %v1827 = vadd.f32 %v484, %v1826
        %v1828 = vpop.f32.mrf.mxu0
        %v1829 = vpop.f32.mrf.mxu0
        %1830 = vdwg.mxu0
        %1831 = vmatprep.subr.bf16.mxu0 0
        %1832 = vmatpush1.bf16.msra.mxu0 0
        %1833 = vmatprep.subr.bf16.mxu0 0
        %1834 = vmatpush1.bf16.msra.mxu0 0
        %1835 = vmatprep.subr.bf16.mxu0 0
        %1836 = vmatpush1.bf16.msra.mxu0 0
        %1837 = vmatprep.subr.bf16.mxu0 0
        %1838 = vmatpush1.bf16.msra.mxu0 0
        %1839 = vmatprep.subr.bf16.mxu0 0
        %1840 = vmatpush1.bf16.msra.mxu0 0
        %1841 = vmatprep.subr.bf16.mxu0 0
        %1842 = vmatpush1.bf16.msra.mxu0 0
        %1843 = vmatprep.subr.bf16.mxu0 %v865
        %1844 = vmatpush1.bf16.msra.mxu0 %v864
        %1845 = vmatprep.subr.bf16.mxu0 %v817
        %1846 = vmatpush1.bf16.msra.mxu0 %v816
        %1847 = vmatprep.subr.bf16.mxu0 0
        %1848 = vmatpush2.bf16.msra.mxu0 0
        %1849 = vmatprep.subr.bf16.mxu0 0
        %1850 = vmatpush2.bf16.msra.mxu0 0
        %1851 = vmatprep.subr.bf16.mxu0 0
        %1852 = vmatpush2.bf16.msra.mxu0 0
        %1853 = vmatprep.subr.bf16.mxu0 0
        %1854 = vmatpush2.bf16.msra.mxu0 0
        %1855 = vmatprep.subr.bf16.mxu0 0
        %1856 = vmatpush2.bf16.msra.mxu0 0
        %1857 = vmatprep.subr.bf16.mxu0 0
        %1858 = vmatpush2.bf16.msra.mxu0 0
        %1859 = vmatprep.subr.bf16.mxu0 0
        %1860 = vmatpush2.bf16.msra.mxu0 0
        %1861 = vmatprep.subr.bf16.mxu0 0
        %1862 = vmatpush2.bf16.msra.mxu0 0
        %1863 = vmatprep.mubr.bf16.mxu0 0
        %1864 = vmatmul.mubr.bf16.gmra.mxu0 %v968
        %v1865 = vpop.f32.mrf.mxu0
        %v1866 = vadd.f32 %v484, %v1865
        %v1867 = vpop.f32.mrf.mxu0
        %v1868 = vadd.f32 %v484, %v1867
        %v1869 = vpop.f32.mrf.mxu0
        %v1870 = vpop.f32.mrf.mxu0
        %1871 = vdwg.mxu0
        %1872 = vmatprep.subr.bf16.mxu0 0
        %1873 = vmatpush1.bf16.msra.mxu0 0
        %1874 = vmatprep.subr.bf16.mxu0 0
        %1875 = vmatpush1.bf16.msra.mxu0 0
        %1876 = vmatprep.subr.bf16.mxu0 0
        %1877 = vmatpush1.bf16.msra.mxu0 0
        %1878 = vmatprep.subr.bf16.mxu0 0
        %1879 = vmatpush1.bf16.msra.mxu0 0
        %1880 = vmatprep.subr.bf16.mxu0 0
        %1881 = vmatpush1.bf16.msra.mxu0 0
        %1882 = vmatprep.subr.bf16.mxu0 0
        %1883 = vmatpush1.bf16.msra.mxu0 0
        %1884 = vmatprep.subr.bf16.mxu0 %v867
        %1885 = vmatpush1.bf16.msra.mxu0 %v866
        %1886 = vmatprep.subr.bf16.mxu0 %v819
        %1887 = vmatpush1.bf16.msra.mxu0 %v818
        %1888 = vmatprep.subr.bf16.mxu0 0
        %1889 = vmatpush2.bf16.msra.mxu0 0
        %1890 = vmatprep.subr.bf16.mxu0 0
        %1891 = vmatpush2.bf16.msra.mxu0 0
        %1892 = vmatprep.subr.bf16.mxu0 0
        %1893 = vmatpush2.bf16.msra.mxu0 0
        %1894 = vmatprep.subr.bf16.mxu0 0
        %1895 = vmatpush2.bf16.msra.mxu0 0
        %1896 = vmatprep.subr.bf16.mxu0 0
        %1897 = vmatpush2.bf16.msra.mxu0 0
        %1898 = vmatprep.subr.bf16.mxu0 0
        %1899 = vmatpush2.bf16.msra.mxu0 0
        %1900 = vmatprep.subr.bf16.mxu0 0
        %1901 = vmatpush2.bf16.msra.mxu0 0
        %1902 = vmatprep.subr.bf16.mxu0 0
        %1903 = vmatpush2.bf16.msra.mxu0 0
        %1904 = vmatprep.mubr.bf16.mxu0 0
        %1905 = vmatmul.mubr.bf16.gmra.mxu0 %v968
        %v1906 = vpop.f32.mrf.mxu0
        %v1907 = vadd.f32 %v484, %v1906
        %v1908 = vpop.f32.mrf.mxu0
        %v1909 = vadd.f32 %v484, %v1908
        %v1910 = vpop.f32.mrf.mxu0
        %v1911 = vpop.f32.mrf.mxu0
        %1912 = vdwg.mxu0
        %1913 = vmatprep.subr.bf16.mxu0 0
        %1914 = vmatpush1.bf16.msra.mxu0 0
        %1915 = vmatprep.subr.bf16.mxu0 0
        %1916 = vmatpush1.bf16.msra.mxu0 0
        %1917 = vmatprep.subr.bf16.mxu0 0
        %1918 = vmatpush1.bf16.msra.mxu0 0
        %1919 = vmatprep.subr.bf16.mxu0 0
        %1920 = vmatpush1.bf16.msra.mxu0 0
        %1921 = vmatprep.subr.bf16.mxu0 0
        %1922 = vmatpush1.bf16.msra.mxu0 0
        %1923 = vmatprep.subr.bf16.mxu0 0
        %1924 = vmatpush1.bf16.msra.mxu0 0
        %1925 = vmatprep.subr.bf16.mxu0 %v869
        %1926 = vmatpush1.bf16.msra.mxu0 %v868
        %1927 = vmatprep.subr.bf16.mxu0 %v821
        %1928 = vmatpush1.bf16.msra.mxu0 %v820
        %1929 = vmatprep.subr.bf16.mxu0 0
        %1930 = vmatpush2.bf16.msra.mxu0 0
        %1931 = vmatprep.subr.bf16.mxu0 0
        %1932 = vmatpush2.bf16.msra.mxu0 0
        %1933 = vmatprep.subr.bf16.mxu0 0
        %1934 = vmatpush2.bf16.msra.mxu0 0
        %1935 = vmatprep.subr.bf16.mxu0 0
        %1936 = vmatpush2.bf16.msra.mxu0 0
        %1937 = vmatprep.subr.bf16.mxu0 0
        %1938 = vmatpush2.bf16.msra.mxu0 0
        %1939 = vmatprep.subr.bf16.mxu0 0
        %1940 = vmatpush2.bf16.msra.mxu0 0
        %1941 = vmatprep.subr.bf16.mxu0 0
        %1942 = vmatpush2.bf16.msra.mxu0 0
        %1943 = vmatprep.subr.bf16.mxu0 0
        %1944 = vmatpush2.bf16.msra.mxu0 0
        %1945 = vmatprep.mubr.bf16.mxu0 0
        %1946 = vmatmul.mubr.bf16.gmra.mxu0 %v968
        %v1947 = vpop.f32.mrf.mxu0
        %v1948 = vadd.f32 %v484, %v1947
        %v1949 = vpop.f32.mrf.mxu0
        %v1950 = vadd.f32 %v484, %v1949
        %v1951 = vpop.f32.mrf.mxu0
        %v1952 = vpop.f32.mrf.mxu0
        %1953 = vdwg.mxu0
        %vm1954 = vcmp.gt.f32.partialorder %v1005, 0.0
        %vm1955 = vcmp.gt.f32.partialorder %v1007, 0.0
        %vm1956 = vcmp.gt.f32.partialorder %v1046, 0.0
        %vm1957 = vcmp.gt.f32.partialorder %v1048, 0.0
        %vm1958 = vcmp.gt.f32.partialorder %v1087, 0.0
        %vm1959 = vcmp.gt.f32.partialorder %v1089, 0.0
        %vm1960 = vcmp.gt.f32.partialorder %v1128, 0.0
        %vm1961 = vcmp.gt.f32.partialorder %v1130, 0.0
        %vm1962 = vcmp.gt.f32.partialorder %v1169, 0.0
        %vm1963 = vcmp.gt.f32.partialorder %v1171, 0.0
        %vm1964 = vcmp.gt.f32.partialorder %v1210, 0.0
        %vm1965 = vcmp.gt.f32.partialorder %v1212, 0.0
        %vm1966 = vcmp.gt.f32.partialorder %v1251, 0.0
        %vm1967 = vcmp.gt.f32.partialorder %v1253, 0.0
        %vm1968 = vcmp.gt.f32.partialorder %v1292, 0.0
        %vm1969 = vcmp.gt.f32.partialorder %v1294, 0.0
        %vm1970 = vcmp.gt.f32.partialorder %v1333, 0.0
        %vm1971 = vcmp.gt.f32.partialorder %v1335, 0.0
        %vm1972 = vcmp.gt.f32.partialorder %v1374, 0.0
        %vm1973 = vcmp.gt.f32.partialorder %v1376, 0.0
        %vm1974 = vcmp.gt.f32.partialorder %v1415, 0.0
        %vm1975 = vcmp.gt.f32.partialorder %v1417, 0.0
        %vm1976 = vcmp.gt.f32.partialorder %v1456, 0.0
        %vm1977 = vcmp.gt.f32.partialorder %v1458, 0.0
        %vm1978 = vcmp.gt.f32.partialorder %v1497, 0.0
        %vm1979 = vcmp.gt.f32.partialorder %v1499, 0.0
        %vm1980 = vcmp.gt.f32.partialorder %v1538, 0.0
        %vm1981 = vcmp.gt.f32.partialorder %v1540, 0.0
        %vm1982 = vcmp.gt.f32.partialorder %v1579, 0.0
        %vm1983 = vcmp.gt.f32.partialorder %v1581, 0.0
        %vm1984 = vcmp.gt.f32.partialorder %v1620, 0.0
        %vm1985 = vcmp.gt.f32.partialorder %v1622, 0.0
        %vm1986 = vcmp.gt.f32.partialorder %v1661, 0.0
        %vm1987 = vcmp.gt.f32.partialorder %v1663, 0.0
        %vm1988 = vcmp.gt.f32.partialorder %v1702, 0.0
        %vm1989 = vcmp.gt.f32.partialorder %v1704, 0.0
        %vm1990 = vcmp.gt.f32.partialorder %v1743, 0.0
        %vm1991 = vcmp.gt.f32.partialorder %v1745, 0.0
        %vm1992 = vcmp.gt.f32.partialorder %v1784, 0.0
        %vm1993 = vcmp.gt.f32.partialorder %v1786, 0.0
        %vm1994 = vcmp.gt.f32.partialorder %v1825, 0.0
        %vm1995 = vcmp.gt.f32.partialorder %v1827, 0.0
        %vm1996 = vcmp.gt.f32.partialorder %v1866, 0.0
        %vm1997 = vcmp.gt.f32.partialorder %v1868, 0.0
        %vm1998 = vcmp.gt.f32.partialorder %v1907, 0.0
        %vm1999 = vcmp.gt.f32.partialorder %v1909, 0.0
        %vm2000 = vcmp.gt.f32.partialorder %v1948, 0.0
        %vm2001 = vcmp.gt.f32.partialorder %v1950, 0.0
        %v2002 = vmul.f32 %v1005, 0.01
        %v2003 = vmul.f32 %v1007, 0.01
        %v2004 = vmul.f32 %v1046, 0.01
        %v2005 = vmul.f32 %v1048, 0.01
        %v2006 = vmul.f32 %v1087, 0.01
        %v2007 = vmul.f32 %v1089, 0.01
        %v2008 = vmul.f32 %v1128, 0.01
        %v2009 = vmul.f32 %v1130, 0.01
        %v2010 = vmul.f32 %v1169, 0.01
        %v2011 = vmul.f32 %v1171, 0.01
        %v2012 = vmul.f32 %v1210, 0.01
        %v2013 = vmul.f32 %v1212, 0.01
        %v2014 = vmul.f32 %v1251, 0.01
        %v2015 = vmul.f32 %v1253, 0.01
        %v2016 = vmul.f32 %v1292, 0.01
        %v2017 = vmul.f32 %v1294, 0.01
        %v2018 = vmul.f32 %v1333, 0.01
        %v2019 = vmul.f32 %v1335, 0.01
        %v2020 = vmul.f32 %v1374, 0.01
        %v2021 = vmul.f32 %v1376, 0.01
        %v2022 = vmul.f32 %v1415, 0.01
        %v2023 = vmul.f32 %v1417, 0.01
        %v2024 = vmul.f32 %v1456, 0.01
        %v2025 = vmul.f32 %v1458, 0.01
        %v2026 = vmul.f32 %v1497, 0.01
        %v2027 = vmul.f32 %v1499, 0.01
        %v2028 = vmul.f32 %v1538, 0.01
        %v2029 = vmul.f32 %v1540, 0.01
        %v2030 = vmul.f32 %v1579, 0.01
        %v2031 = vmul.f32 %v1581, 0.01
        %v2032 = vmul.f32 %v1620, 0.01
        %v2033 = vmul.f32 %v1622, 0.01
        %v2034 = vmul.f32 %v1661, 0.01
        %v2035 = vmul.f32 %v1663, 0.01
        %v2036 = vmul.f32 %v1702, 0.01
        %v2037 = vmul.f32 %v1704, 0.01
        %v2038 = vmul.f32 %v1743, 0.01
        %v2039 = vmul.f32 %v1745, 0.01
        %v2040 = vmul.f32 %v1784, 0.01
        %v2041 = vmul.f32 %v1786, 0.01
        %v2042 = vmul.f32 %v1825, 0.01
        %v2043 = vmul.f32 %v1827, 0.01
        %v2044 = vmul.f32 %v1866, 0.01
        %v2045 = vmul.f32 %v1868, 0.01
        %v2046 = vmul.f32 %v1907, 0.01
        %v2047 = vmul.f32 %v1909, 0.01
        %v2048 = vmul.f32 %v1948, 0.01
        %v2049 = vmul.f32 %v1950, 0.01
        %v2050 = vsel %vm1954, %v1005, %v2002
        %v2051 = vsel %vm1955, %v1007, %v2003
        %v2052 = vsel %vm1956, %v1046, %v2004
        %v2053 = vsel %vm1957, %v1048, %v2005
        %v2054 = vsel %vm1958, %v1087, %v2006
        %v2055 = vsel %vm1959, %v1089, %v2007
        %v2056 = vsel %vm1960, %v1128, %v2008
        %v2057 = vsel %vm1961, %v1130, %v2009
        %v2058 = vsel %vm1962, %v1169, %v2010
        %v2059 = vsel %vm1963, %v1171, %v2011
        %v2060 = vsel %vm1964, %v1210, %v2012
        %v2061 = vsel %vm1965, %v1212, %v2013
        %v2062 = vsel %vm1966, %v1251, %v2014
        %v2063 = vsel %vm1967, %v1253, %v2015
        %v2064 = vsel %vm1968, %v1292, %v2016
        %v2065 = vsel %vm1969, %v1294, %v2017
        %v2066 = vsel %vm1970, %v1333, %v2018
        %v2067 = vsel %vm1971, %v1335, %v2019
        %v2068 = vsel %vm1972, %v1374, %v2020
        %v2069 = vsel %vm1973, %v1376, %v2021
        %v2070 = vsel %vm1974, %v1415, %v2022
        %v2071 = vsel %vm1975, %v1417, %v2023
        %v2072 = vsel %vm1976, %v1456, %v2024
        %v2073 = vsel %vm1977, %v1458, %v2025
        %v2074 = vsel %vm1978, %v1497, %v2026
        %v2075 = vsel %vm1979, %v1499, %v2027
        %v2076 = vsel %vm1980, %v1538, %v2028
        %v2077 = vsel %vm1981, %v1540, %v2029
        %v2078 = vsel %vm1982, %v1579, %v2030
        %v2079 = vsel %vm1983, %v1581, %v2031
        %v2080 = vsel %vm1984, %v1620, %v2032
        %v2081 = vsel %vm1985, %v1622, %v2033
        %v2082 = vsel %vm1986, %v1661, %v2034
        %v2083 = vsel %vm1987, %v1663, %v2035
        %v2084 = vsel %vm1988, %v1702, %v2036
        %v2085 = vsel %vm1989, %v1704, %v2037
        %v2086 = vsel %vm1990, %v1743, %v2038
        %v2087 = vsel %vm1991, %v1745, %v2039
        %v2088 = vsel %vm1992, %v1784, %v2040
        %v2089 = vsel %vm1993, %v1786, %v2041
        %v2090 = vsel %vm1994, %v1825, %v2042
        %v2091 = vsel %vm1995, %v1827, %v2043
        %v2092 = vsel %vm1996, %v1866, %v2044
        %v2093 = vsel %vm1997, %v1868, %v2045
        %v2094 = vsel %vm1998, %v1907, %v2046
        %v2095 = vsel %vm1999, %v1909, %v2047
        %v2096 = vsel %vm2000, %v1948, %v2048
        %v2097 = vsel %vm2001, %v1950, %v2049
        %v2098 = vmax.f32 %v2050, %v2062
        %v2099 = vmax.f32 %v2051, %v2063
        %v2100 = vmax.f32 %v2052, %v2064
        %v2101 = vmax.f32 %v2053, %v2065
        %v2102 = vmax.f32 %v2054, %v2066
        %v2103 = vmax.f32 %v2055, %v2067
        %v2104 = vmax.f32 %v2056, %v2068
        %v2105 = vmax.f32 %v2057, %v2069
        %v2106 = vmax.f32 %v2058, %v2070
        %v2107 = vmax.f32 %v2059, %v2071
        %v2108 = vmax.f32 %v2060, %v2072
        %v2109 = vmax.f32 %v2061, %v2073
        %v2110 = vmax.f32 %v2074, %v2086
        %v2111 = vmax.f32 %v2075, %v2087
        %v2112 = vmax.f32 %v2076, %v2088
        %v2113 = vmax.f32 %v2077, %v2089
        %v2114 = vmax.f32 %v2078, %v2090
        %v2115 = vmax.f32 %v2079, %v2091
        %v2116 = vmax.f32 %v2080, %v2092
        %v2117 = vmax.f32 %v2081, %v2093
        %v2118 = vmax.f32 %v2082, %v2094
        %v2119 = vmax.f32 %v2083, %v2095
        %v2120 = vmax.f32 %v2084, %v2096
        %v2121 = vmax.f32 %v2085, %v2097
        %v2122 = vmax.f32 %v2098, %v2110
        %v2123 = vmax.f32 %v2099, %v2111
        %v2124 = vmax.f32 %v2100, %v2112
        %v2125 = vmax.f32 %v2101, %v2113
        %v2126 = vmax.f32 %v2102, %v2114
        %v2127 = vmax.f32 %v2103, %v2115
        %v2128 = vmax.f32 %v2104, %v2116
        %v2129 = vmax.f32 %v2105, %v2117
        %v2130 = vmax.f32 %v2106, %v2118
        %v2131 = vmax.f32 %v2107, %v2119
        %v2132 = vmax.f32 %v2108, %v2120
        %v2133 = vmax.f32 %v2109, %v2121
        %2134 = vst [vmem:[%s381] sm:$0xff] %v2122
        %2135 = vst [vmem:[%s381 + $0x8] sm:$0xff] %v2123
        %2136 = vst [vmem:[%s381 + $0x10] sm:$0xff] %v2124
        %2137 = vst [vmem:[%s381 + $0x18] sm:$0xff] %v2125
        %2138 = vst [vmem:[%s381 + $0x20] sm:$0xff] %v2126
        %2139 = vst [vmem:[%s381 + $0x28] sm:$0xff] %v2127
        %2140 = vst [vmem:[%s381 + $0x30] sm:$0xff] %v2128
        %2141 = vst [vmem:[%s381 + $0x38] sm:$0xff] %v2129
        %2142 = vst [vmem:[%s381 + $0x40] sm:$0xff] %v2130
        %2143 = vst [vmem:[%s381 + $0x48] sm:$0xff] %v2131
        %2144 = vst [vmem:[%s381 + $0x50] sm:$0xff] %v2132
        %2145 = vst [vmem:[%s381 + $0x58] sm:$0xff] %v2133
        %p2146 = scmp.lt.s32.totalorder %s14, 1
        %s2147 = scalar_select %p2146, %s14, 1
        %s2148 = smul.addr %s2147, 12
        %s2149 = smul.addr %s2148, 8
        %s2150 = scalar_lea.vmem %s3, %s2149
        // Predicated region
        $region56: #{picture_net_forward.4} parent=50 // pred_check
          %p2151 = pneg %p100
        $region57: #{picture_net_forward.4} parent=50 // pred_check_branch
          %2153 = sbr.rel (%p2151) target = $region59
        $region58: #{picture_net_forward.4} parent=50 // pred_region
          _
        $region59: #{picture_net_forward.4} parent=50 // pred_fallthru
          _
      $region51: #{picture_net_forward.4} parent=5 // pred_fallthru
        _
      %p2154 = scmp.le.s32.totalorder 2, %s9
      // Predicated region
      $region60: #{picture_net_forward.4} parent=5 // pred_check
        %p2155 = pneg %p2154
      $region61: #{picture_net_forward.4} parent=5 // pred_check_branch
        %2157 = sbr.rel (%p2155) target = $region63
      $region62: #{picture_net_forward.4} parent=5 // pred_region
        %s2158 = ssub.s32 %s9, 2
        // Predicated region
        $region64: #{picture_net_forward.4} parent=62 // pred_check
          %p2159 = pneg %p106
        $region65: #{picture_net_forward.4} parent=62 // pred_check_branch
          %2161 = sbr.rel (%p2159) target = $region67
        $region66: #{picture_net_forward.4} parent=62 // pred_region
          %p2162 = scmp.lt.s32.totalorder %s15, 1
          %s2163 = scalar_select %p2162, %s15, 1
          %s2164 = smul.addr %s2163, 12
          %s2165 = smul.addr %s2164, 8
          %s2166 = scalar_lea.vmem %s3, %s2165
        $region67: #{picture_net_forward.4} parent=62 // pred_fallthru
          _
      $region63: #{picture_net_forward.4} parent=5 // pred_fallthru
        _
    $region6: #{picture_net_forward.4} parent=1 // loop_footer
      %s13 = sadd.s32 1, %s9
    $region7: #{picture_net_forward.4} parent=1 // loop_footer_branch
      %8 = sbr.rel target = $region3
    $region8: #{picture_net_forward.4} parent=1 // loop_exit
      _

// kernel: picture_net_forward.5
$region0: #{picture_net_forward.5}
  #allocation0 [shape = 'u32[]', space=smem, size = 0x4, offset = 0x4, fixed_abs, tag = 'smem constant byte address 0x4 - core index']
  #allocation1 [shape = 'u32[144,128]{1,0:T(1,128)}', space=vmem, size = 0x12000, scoped, tag = 'internal scratch']
  %s0 = inlined_call_operand.vmem [shape: bf16[80,3072], index: 0, kind: input, shape index: {}]
  %s1 = inlined_call_operand.vmem [shape: bf16[16,80], index: 1, kind: input, shape index: {}]
  %s2 = inlined_call_operand.vmem [shape: f32[16,1], index: 2, kind: input, shape index: {}]
  %s3 = inlined_call_operand.vmem [shape: f32[32,384], index: 3, kind: output, shape index: {}]
  %s4 = sld [smem:[#allocation0]]
  $region68: #{picture_net_forward.5} parent=0
    _
  %s6 = ssub.s32 1, %s4
  %s7 = scalar_select 0, %s6, %s4
  $region1: #{picture_net_forward.5} parent=0
    #allocation2 [shape = 'u8[491520]{0}', space=vmem, size = 0x78000, scoped, tag = 'input window, operand 0']
    loop: start=0, step=1, limit=4
    $region2: #{picture_net_forward.5} parent=1 // loop_pre_header
      _
    $region3: #{picture_net_forward.5} parent=1 // loop_header
      %s9 = sphi 0, %s13
      %p10 = scmp.ge.s32.totalorder %s9, 4
      %s19 = sphi 0, %s21
      %s22 = sphi 0, %s19
      %s23 = sphi 0, %s22
      %s39 = sphi 0, %s23
      %s43 = sphi 0, %s43
      %s45 = sphi 0, %s43
      %s46 = sphi 0, %s45
      %s60 = sphi 0, %s46
      %s64 = sphi 0, %s64
      %s66 = sphi 0, %s64
      %s67 = sphi 0, %s66
      %s81 = sphi 0, %s67
      %s87 = sphi 0, %s89
      %s90 = sphi 0, %s87
      %s91 = sphi 0, %s90
      %s107 = sphi 0, %s91
    $region4: #{picture_net_forward.5} parent=1 // loop_header_branch
      %12 = sbr.rel (%p10) target = $region8
    $region5: #{picture_net_forward.5} parent=1 // loop_body
      %s14 = ssub.s32 %s9, 1
      %s15 = ssub.s32 %s9, 2
      %s16 = sadd.s32 %s9, 1
      %s17 = ssub.s32 %s9, %s16
      %p18 = scmp.eq.s32.totalorder %s17, 0
      %s20 = sadd.s32 %s19, 1
      %s21 = scalar_select %p18, %s19, %s20
      %p24 = pneg %p18
      %p25 = scmp.eq.s32.totalorder %s9, 1
      %p26 = por %p24, %p25
      %p27 = scmp.ne.s32.totalorder %s19, %s22
      %p28 = scmp.eq.s32.totalorder %s9, 0
      %p29 = por %p27, %p28
      %p30 = scmp.ne.s32.totalorder %s19, %s22
      %p31 = scmp.eq.s32.totalorder %s14, 1
      %p32 = por %p30, %p31
      %p33 = scmp.ne.s32.totalorder %s22, %s23
      %p34 = scmp.eq.s32.totalorder %s14, 0
      %p35 = por %p33, %p34
      %p36 = scmp.ne.s32.totalorder %s22, %s23
      %p37 = scmp.eq.s32.totalorder %s15, 1
      %p38 = por %p36, %p37
      %p40 = scmp.ne.s32.totalorder %s23, %s39
      %p41 = scmp.eq.s32.totalorder %s15, 0
      %p42 = por %p40, %p41
      %s44 = sadd.s32 %s43, 1
      %p47 = scmp.eq.s32.totalorder %s9, 1
      %p48 = scmp.ne.s32.totalorder %s43, %s45
      %p49 = scmp.eq.s32.totalorder %s9, 0
      %p50 = por %p48, %p49
      %p51 = scmp.ne.s32.totalorder %s43, %s45
      %p52 = scmp.eq.s32.totalorder %s14, 1
      %p53 = por %p51, %p52
      %p54 = scmp.ne.s32.totalorder %s45, %s46
      %p55 = scmp.eq.s32.totalorder %s14, 0
      %p56 = por %p54, %p55
      %p57 = scmp.ne.s32.totalorder %s45, %s46
      %p58 = scmp.eq.s32.totalorder %s15, 1
      %p59 = por %p57, %p58
      %p61 = scmp.ne.s32.totalorder %s46, %s60
      %p62 = scmp.eq.s32.totalorder %s15, 0
      %p63 = por %p61, %p62
      %s65 = sadd.s32 %s64, 1
      %p68 = scmp.eq.s32.totalorder %s9, 1
      %p69 = scmp.ne.s32.totalorder %s64, %s66
      %p70 = scmp.eq.s32.totalorder %s9, 0
      %p71 = por %p69, %p70
      %p72 = scmp.ne.s32.totalorder %s64, %s66
      %p73 = scmp.eq.s32.totalorder %s14, 1
      %p74 = por %p72, %p73
      %p75 = scmp.ne.s32.totalorder %s66, %s67
      %p76 = scmp.eq.s32.totalorder %s14, 0
      %p77 = por %p75, %p76
      %p78 = scmp.ne.s32.totalorder %s66, %s67
      %p79 = scmp.eq.s32.totalorder %s15, 1
      %p80 = por %p78, %p79
      %p82 = scmp.ne.s32.totalorder %s67, %s81
      %p83 = scmp.eq.s32.totalorder %s15, 0
      %p84 = por %p82, %p83
      %s85 = ssub.s32 %s9, %s16
      %p86 = scmp.eq.s32.totalorder %s85, 0
      %s88 = sadd.s32 %s87, 1
      %s89 = scalar_select %p86, %s87, %s88
      %p92 = pneg %p86
      %p93 = scmp.eq.s32.totalorder %s9, 1
      %p94 = por %p92, %p93
      %p95 = scmp.ne.s32.totalorder %s87, %s90
      %p96 = scmp.eq.s32.totalorder %s9, 0
      %p97 = por %p95, %p96
      %p98 = scmp.ne.s32.totalorder %s87, %s90
      %p99 = scmp.eq.s32.totalorder %s14, 1
      %p100 = por %p98, %p99
      %p101 = scmp.ne.s32.totalorder %s90, %s91
      %p102 = scmp.eq.s32.totalorder %s14, 0
      %p103 = por %p101, %p102
      %p104 = scmp.ne.s32.totalorder %s90, %s91
      %p105 = scmp.eq.s32.totalorder %s15, 1
      %p106 = por %p104, %p105
      %p108 = scmp.ne.s32.totalorder %s91, %s107
      %p109 = scmp.eq.s32.totalorder %s15, 0
      %p110 = por %p108, %p109
      %p111 = scmp.le.s32.totalorder 1, %s9
      %p112 = scmp.lt.s32.totalorder %s9, 3
      %p113 = pnand %p111, %p112
      %p114 = pneg %p113
      // Predicated region
      $region9: #{picture_net_forward.5} parent=5 // pred_check
        _
      $region10: #{picture_net_forward.5} parent=5 // pred_check_branch
        %116 = sbr.rel (%p113) target = $region12
      $region11: #{picture_net_forward.5} parent=5 // pred_region
        %s117 = ssub.s32 %s9, 1
        // Predicated region
        $region13: #{picture_net_forward.5} parent=11 // pred_check
          %p118 = pneg %p56
        $region14: #{picture_net_forward.5} parent=11 // pred_check_branch
          %120 = sbr.rel (%p118) target = $region16
        $region15: #{picture_net_forward.5} parent=11 // pred_region
          _
        $region16: #{picture_net_forward.5} parent=11 // pred_fallthru
          _
        // Predicated region
        $region17: #{picture_net_forward.5} parent=11 // pred_check
          %p121 = pneg %p77
        $region18: #{picture_net_forward.5} parent=11 // pred_check_branch
          %123 = sbr.rel (%p121) target = $region20
        $region19: #{picture_net_forward.5} parent=11 // pred_region
          _
        $region20: #{picture_net_forward.5} parent=11 // pred_fallthru
          _
      $region12: #{picture_net_forward.5} parent=5 // pred_fallthru
        _
      %p124 = scmp.lt.s32.totalorder %s9, 2
      // Predicated region
      $region21: #{picture_net_forward.5} parent=5 // pred_check
        %p125 = pneg %p124
      $region22: #{picture_net_forward.5} parent=5 // pred_check_branch
        %127 = sbr.rel (%p125) target = $region24
      $region23: #{picture_net_forward.5} parent=5 // pred_region
        // Predicated region
        $region25: #{picture_net_forward.5} parent=23 // pred_check
          %p128 = pneg %p29
        $region26: #{picture_net_forward.5} parent=23 // pred_check_branch
          %130 = sbr.rel (%p128) target = $region28
        $region27: #{picture_net_forward.5} parent=23 // pred_region
          %s131 = sand.u32 %s19, 1
          %s132 = sand.u32 %s19, 1
          %s133 = smul.addr %s132, 480
          %s134 = scalar_lea.vmem [#allocation2], %s133
          %s135 = smul.u32 12, %s9
          %s136 = smul.addr %s135, 4
          %s137 = scalar_lea.vmem %s0, %s136
          // Predicated region
          $region29: #{picture_net_forward.5} parent=27 // pred_check
            _
          $region30: #{picture_net_forward.5} parent=27 // pred_check_branch
            %139 = sbr.rel (0) target = $region32
          $region31: #{picture_net_forward.5} parent=27 // pred_region
            // Predicated region
            $region33: #{picture_net_forward.5} parent=31 // pred_check
              _
            $region34: #{picture_net_forward.5} parent=31 // pred_check_branch
              %141 = sbr.rel (0) target = $region36
            $region35: #{picture_net_forward.5} parent=31 // pred_region
              loop: start=0, step=1, limit=1
              $region37: #{picture_net_forward.5} parent=35 // loop_pre_header
                _
              $region38: #{picture_net_forward.5} parent=35 // loop_header
                %s143 = sphi 0, %s147
                %p144 = scmp.ge.s32.totalorder %s143, 1
                %s148 = sphi %s137, %s137
                %s149 = sphi %s134, %s134
              $region39: #{picture_net_forward.5} parent=35 // loop_header_branch
                %146 = sbr.rel (%p144) target = $region43
              $region40: #{picture_net_forward.5} parent=35 // loop_body
                %v150 = vld [vmem:[%s148] sm:$0xff]
                %151 = vst [vmem:[%s149] sm:$0xff] %v150
                %v152 = vld [vmem:[%s148 + $0x8] sm:$0xff]
                %153 = vst [vmem:[%s149 + $0x8] sm:$0xff] %v152
                %v154 = vld [vmem:[%s148 + $0x10] sm:$0xff]
                %155 = vst [vmem:[%s149 + $0x10] sm:$0xff] %v154
                %v156 = vld [vmem:[%s148 + $0x18] sm:$0xff]
                %157 = vst [vmem:[%s149 + $0x18] sm:$0xff] %v156
                %v158 = vld [vmem:[%s148 + $0x20] sm:$0xff]
                %159 = vst [vmem:[%s149 + $0x20] sm:$0xff] %v158
                %v160 = vld [vmem:[%s148 + $0x28] sm:$0xff]
                %161 = vst [vmem:[%s149 + $0x28] sm:$0xff] %v160
                %v162 = vld [vmem:[%s148 + $0x60] sm:$0xff]
                %163 = vst [vmem:[%s149 + $0x30] sm:$0xff] %v162
                %v164 = vld [vmem:[%s148 + $0x68] sm:$0xff]
                %165 = vst [vmem:[%s149 + $0x38] sm:$0xff] %v164
                %v166 = vld [vmem:[%s148 + $0x70] sm:$0xff]
                %167 = vst [vmem:[%s149 + $0x40] sm:$0xff] %v166
                %v168 = vld [vmem:[%s148 + $0x78] sm:$0xff]
                %169 = vst [vmem:[%s149 + $0x48] sm:$0xff] %v168
                %v170 = vld [vmem:[%s148 + $0x80] sm:$0xff]
                %171 = vst [vmem:[%s149 + $0x50] sm:$0xff] %v170
                %v172 = vld [vmem:[%s148 + $0x88] sm:$0xff]
                %173 = vst [vmem:[%s149 + $0x58] sm:$0xff] %v172
                %v174 = vld [vmem:[%s148 + $0xc0] sm:$0xff]
                %175 = vst [vmem:[%s149 + $0x60] sm:$0xff] %v174
                %v176 = vld [vmem:[%s148 + $0xc8] sm:$0xff]
                %177 = vst [vmem:[%s149 + $0x68] sm:$0xff] %v176
                %v178 = vld [vmem:[%s148 + $0xd0] sm:$0xff]
                %179 = vst [vmem:[%s149 + $0x70] sm:$0xff] %v178
                %v180 = vld [vmem:[%s148 + $0xd8] sm:$0xff]
                %181 = vst [vmem:[%s149 + $0x78] sm:$0xff] %v180
                %v182 = vld [vmem:[%s148 + $0xe0] sm:$0xff]
                %183 = vst [vmem:[%s149 + $0x80] sm:$0xff] %v182
                %v184 = vld [vmem:[%s148 + $0xe8] sm:$0xff]
                %185 = vst [vmem:[%s149 + $0x88] sm:$0xff] %v184
                %v186 = vld [vmem:[%s148 + $0x120] sm:$0xff]
                %187 = vst [vmem:[%s149 + $0x90] sm:$0xff] %v186
                %v188 = vld [vmem:[%s148 + $0x128] sm:$0xff]
                %189 = vst [vmem:[%s149 + $0x98] sm:$0xff] %v188
                %v190 = vld [vmem:[%s148 + $0x130] sm:$0xff]
                %191 = vst [vmem:[%s149 + $0xa0] sm:$0xff] %v190
                %v192 = vld [vmem:[%s148 + $0x138] sm:$0xff]
                %193 = vst [vmem:[%s149 + $0xa8] sm:$0xff] %v192
                %v194 = vld [vmem:[%s148 + $0x140] sm:$0xff]
                %195 = vst [vmem:[%s149 + $0xb0] sm:$0xff] %v194
                %v196 = vld [vmem:[%s148 + $0x148] sm:$0xff]
                %197 = vst [vmem:[%s149 + $0xb8] sm:$0xff] %v196
                %v198 = vld [vmem:[%s148 + $0x180] sm:$0xff]
                %199 = vst [vmem:[%s149 + $0xc0] sm:$0xff] %v198
                %v200 = vld [vmem:[%s148 + $0x188] sm:$0xff]
                %201 = vst [vmem:[%s149 + $0xc8] sm:$0xff] %v200
                %v202 = vld [vmem:[%s148 + $0x190] sm:$0xff]
                %203 = vst [vmem:[%s149 + $0xd0] sm:$0xff] %v202
                %v204 = vld [vmem:[%s148 + $0x198] sm:$0xff]
                %205 = vst [vmem:[%s149 + $0xd8] sm:$0xff] %v204
                %v206 = vld [vmem:[%s148 + $0x1a0] sm:$0xff]
                %207 = vst [vmem:[%s149 + $0xe0] sm:$0xff] %v206
                %v208 = vld [vmem:[%s148 + $0x1a8] sm:$0xff]
                %209 = vst [vmem:[%s149 + $0xe8] sm:$0xff] %v208
                %v210 = vld [vmem:[%s148 + $0x1e0] sm:$0xff]
                %211 = vst [vmem:[%s149 + $0xf0] sm:$0xff] %v210
                %v212 = vld [vmem:[%s148 + $0x1e8] sm:$0xff]
                %213 = vst [vmem:[%s149 + $0xf8] sm:$0xff] %v212
                %v214 = vld [vmem:[%s148 + $0x1f0] sm:$0xff]
                %215 = vst [vmem:[%s149 + $0x100] sm:$0xff] %v214
                %v216 = vld [vmem:[%s148 + $0x1f8] sm:$0xff]
                %217 = vst [vmem:[%s149 + $0x108] sm:$0xff] %v216
                %v218 = vld [vmem:[%s148 + $0x200] sm:$0xff]
                %219 = vst [vmem:[%s149 + $0x110] sm:$0xff] %v218
                %v220 = vld [vmem:[%s148 + $0x208] sm:$0xff]
                %221 = vst [vmem:[%s149 + $0x118] sm:$0xff] %v220
                %v222 = vld [vmem:[%s148 + $0x240] sm:$0xff]
                %223 = vst [vmem:[%s149 + $0x120] sm:$0xff] %v222
                %v224 = vld [vmem:[%s148 + $0x248] sm:$0xff]
                %225 = vst [vmem:[%s149 + $0x128] sm:$0xff] %v224
                %v226 = vld [vmem:[%s148 + $0x250] sm:$0xff]
                %227 = vst [vmem:[%s149 + $0x130] sm:$0xff] %v226
                %v228 = vld [vmem:[%s148 + $0x258] sm:$0xff]
                %229 = vst [vmem:[%s149 + $0x138] sm:$0xff] %v228
                %v230 = vld [vmem:[%s148 + $0x260] sm:$0xff]
                %231 = vst [vmem:[%s149 + $0x140] sm:$0xff] %v230
                %v232 = vld [vmem:[%s148 + $0x268] sm:$0xff]
                %233 = vst [vmem:[%s149 + $0x148] sm:$0xff] %v232
                %v234 = vld [vmem:[%s148 + $0x2a0] sm:$0xff]
                %235 = vst [vmem:[%s149 + $0x150] sm:$0xff] %v234
                %v236 = vld [vmem:[%s148 + $0x2a8] sm:$0xff]
                %237 = vst [vmem:[%s149 + $0x158] sm:$0xff] %v236
                %v238 = vld [vmem:[%s148 + $0x2b0] sm:$0xff]
                %239 = vst [vmem:[%s149 + $0x160] sm:$0xff] %v238
                %v240 = vld [vmem:[%s148 + $0x2b8] sm:$0xff]
                %241 = vst [vmem:[%s149 + $0x168] sm:$0xff] %v240
                %v242 = vld [vmem:[%s148 + $0x2c0] sm:$0xff]
                %243 = vst [vmem:[%s149 + $0x170] sm:$0xff] %v242
                %v244 = vld [vmem:[%s148 + $0x2c8] sm:$0xff]
                %245 = vst [vmem:[%s149 + $0x178] sm:$0xff] %v244
                %v246 = vld [vmem:[%s148 + $0x300] sm:$0xff]
                %247 = vst [vmem:[%s149 + $0x180] sm:$0xff] %v246
                %v248 = vld [vmem:[%s148 + $0x308] sm:$0xff]
                %249 = vst [vmem:[%s149 + $0x188] sm:$0xff] %v248
                %v250 = vld [vmem:[%s148 + $0x310] sm:$0xff]
                %251 = vst [vmem:[%s149 + $0x190] sm:$0xff] %v250
                %v252 = vld [vmem:[%s148 + $0x318] sm:$0xff]
                %253 = vst [vmem:[%s149 + $0x198] sm:$0xff] %v252
                %v254 = vld [vmem:[%s148 + $0x320] sm:$0xff]
                %255 = vst [vmem:[%s149 + $0x1a0] sm:$0xff] %v254
                %v256 = vld [vmem:[%s148 + $0x328] sm:$0xff]
                %257 = vst [vmem:[%s149 + $0x1a8] sm:$0xff] %v256
                %v258 = vld [vmem:[%s148 + $0x360] sm:$0xff]
                %259 = vst [vmem:[%s149 + $0x1b0] sm:$0xff] %v258
                %v260 = vld [vmem:[%s148 + $0x368] sm:$0xff]
                %261 = vst [vmem:[%s149 + $0x1b8] sm:$0xff] %v260
                %v262 = vld [vmem:[%s148 + $0x370] sm:$0xff]
                %263 = vst [vmem:[%s149 + $0x1c0] sm:$0xff] %v262
                %v264 = vld [vmem:[%s148 + $0x378] sm:$0xff]
                %265 = vst [vmem:[%s149 + $0x1c8] sm:$0xff] %v264
                %v266 = vld [vmem:[%s148 + $0x380] sm:$0xff]
                %267 = vst [vmem:[%s149 + $0x1d0] sm:$0xff] %v266
                %v268 = vld [vmem:[%s148 + $0x388] sm:$0xff]
                %269 = vst [vmem:[%s149 + $0x1d8] sm:$0xff] %v268
              $region41: #{picture_net_forward.5} parent=35 // loop_footer
                %s147 = sadd.s32 1, %s143
              $region42: #{picture_net_forward.5} parent=35 // loop_footer_branch
                %142 = sbr.rel target = $region38
              $region43: #{picture_net_forward.5} parent=35 // loop_exit
                _
            $region36: #{picture_net_forward.5} parent=31 // pred_fallthru
              _
            // Predicated region
            $region44: #{picture_net_forward.5} parent=31 // pred_check
              _
            $region45: #{picture_net_forward.5} parent=31 // pred_check_branch
              %271 = sbr.rel target = $region47
            $region46: #{picture_net_forward.5} parent=31 // pred_region
              _
            $region47: #{picture_net_forward.5} parent=31 // pred_fallthru
              _
          $region32: #{picture_net_forward.5} parent=27 // pred_fallthru
            _
          %272 = vnop
        $region28: #{picture_net_forward.5} parent=23 // pred_fallthru
          _
      $region24: #{picture_net_forward.5} parent=5 // pred_fallthru
        _
      %p273 = scmp.le.s32.totalorder 1, %s9
      %p274 = scmp.lt.s32.totalorder %s9, 3
      %p275 = pnand %p273, %p274
      %p276 = pneg %p275
      // Predicated region
      $region48: #{picture_net_forward.5} parent=5 // pred_check
        _
      $region49: #{picture_net_forward.5} parent=5 // pred_check_branch
        %278 = sbr.rel (%p275) target = $region51
      $region50: #{picture_net_forward.5} parent=5 // pred_region
        %s279 = ssub.s32 %s9, 1
        %s280 = sand.u32 %s22, 1
        %s281 = sand.u32 %s22, 1
        %s282 = smul.addr %s281, 480
        %s283 = scalar_lea.vmem [#allocation2], %s282
        // Predicated region
        $region52: #{picture_net_forward.5} parent=50 // pred_check
          %p284 = pneg %p35
        $region53: #{picture_net_forward.5} parent=50 // pred_check_branch
          %286 = sbr.rel (%p284) target = $region55
        $region54: #{picture_net_forward.5} parent=50 // pred_region
          _
        $region55: #{picture_net_forward.5} parent=50 // pred_fallthru
          _
        %s287 = sand.u32 %s22, 1
        %s288 = sand.u32 %s22, 1
        %s289 = smul.addr %s288, 480
        %s290 = scalar_lea.vmem [#allocation2], %s289
        %p291 = pneg %p35
        %p292 = pneg %p32
        %p293 = pneg %p56
        %p294 = pneg %p53
        %p295 = pneg %p77
        %p296 = pneg %p74
        %p297 = pneg %p103
        %p298 = pneg %p100
        %s299 = smul.u32 2, %s14
        %p300 = scmp.lt.s32.totalorder %s299, 3
        %s301 = scalar_select %p300, %s299, 3
        %s302 = smul.addr %s301, 3
        %s303 = smul.addr %s302, 8
        %s304 = scalar_lea.vmem %s3, %s303
        %s305 = smul.u32 12, %s14
        %s306 = smul.u32 2, %s14
        %p307 = scmp.lt.s32.totalorder %s306, 3
        %s308 = scalar_select %p307, %s306, 3
        %s309 = smul.addr %s308, 3
        %s310 = smul.addr %s309, 8
        %s311 = scalar_lea.vmem %s3, %s310
        %s312 = smul.u32 2, %s14
        %v314 = vld [vmem:[%s1] sm:$0xf]
        %v315 = vld [vmem:[%s1 + $0x4] sm:$0xf]
        %v316 = vld [vmem:[%s283] sm:$0xff]
        %v317 = vld [vmem:[%s283 + $0x8] sm:$0xff]
        %v318 = vld [vmem:[%s283 + $0x10] sm:$0xff]
        %v319 = vld [vmem:[%s283 + $0x18] sm:$0xff]
        %v320 = vld [vmem:[%s283 + $0x20] sm:$0xff]
        %v321 = vld [vmem:[%s283 + $0x28] sm:$0xff]
        %v322 = vld [vmem:[%s283 + $0x30] sm:$0xff]
        %v323 = vld [vmem:[%s283 + $0x38] sm:$0xff]
        %v324 = vld [vmem:[%s283 + $0x40] sm:$0xff]
        %v325 = vld [vmem:[%s283 + $0x48] sm:$0xff]
        %v326 = vld [vmem:[%s283 + $0x50] sm:$0xff]
        %v327 = vld [vmem:[%s283 + $0x58] sm:$0xff]
        %v328 = vld [vmem:[%s283 + $0x60] sm:$0xff]
        %v329 = vld [vmem:[%s283 + $0x68] sm:$0xff]
        %v330 = vld [vmem:[%s283 + $0x70] sm:$0xff]
        %v331 = vld [vmem:[%s283 + $0x78] sm:$0xff]
        %v332 = vld [vmem:[%s283 + $0x80] sm:$0xff]
        %v333 = vld [vmem:[%s283 + $0x88] sm:$0xff]
        %v334 = vld [vmem:[%s283 + $0x90] sm:$0xff]
        %v335 = vld [vmem:[%s283 + $0x98] sm:$0xff]
        %v336 = vld [vmem:[%s283 + $0xa0] sm:$0xff]
        %v337 = vld [vmem:[%s283 + $0xa8] sm:$0xff]
        %v338 = vld [vmem:[%s283 + $0xb0] sm:$0xff]
        %v339 = vld [vmem:[%s283 + $0xb8] sm:$0xff]
        %v340 = vld [vmem:[%s283 + $0xc0] sm:$0xff]
        %v341 = vld [vmem:[%s283 + $0xc8] sm:$0xff]
        %v342 = vld [vmem:[%s283 + $0xd0] sm:$0xff]
        %v343 = vld [vmem:[%s283 + $0xd8] sm:$0xff]
        %v344 = vld [vmem:[%s283 + $0xe0] sm:$0xff]
        %v345 = vld [vmem:[%s283 + $0xe8] sm:$0xff]
        %v346 = vld [vmem:[%s283 + $0xf0] sm:$0xff]
        %v347 = vld [vmem:[%s283 + $0xf8] sm:$0xff]
        %v348 = vld [vmem:[%s283 + $0x100] sm:$0xff]
        %v349 = vld [vmem:[%s283 + $0x108] sm:$0xff]
        %v350 = vld [vmem:[%s283 + $0x110] sm:$0xff]
        %v351 = vld [vmem:[%s283 + $0x118] sm:$0xff]
        %v352 = vld [vmem:[%s283 + $0x120] sm:$0xff]
        %v353 = vld [vmem:[%s283 + $0x128] sm:$0xff]
        %v354 = vld [vmem:[%s283 + $0x130] sm:$0xff]
        %v355 = vld [vmem:[%s283 + $0x138] sm:$0xff]
        %v356 = vld [vmem:[%s283 + $0x140] sm:$0xff]
        %v357 = vld [vmem:[%s283 + $0x148] sm:$0xff]
        %v358 = vld [vmem:[%s283 + $0x150] sm:$0xff]
        %v359 = vld [vmem:[%s283 + $0x158] sm:$0xff]
        %v360 = vld [vmem:[%s283 + $0x160] sm:$0xff]
        %v361 = vld [vmem:[%s283 + $0x168] sm:$0xff]
        %v362 = vld [vmem:[%s283 + $0x170] sm:$0xff]
        %v363 = vld [vmem:[%s283 + $0x178] sm:$0xff]
        %v364 = vld [vmem:[%s283 + $0x180] sm:$0xff]
        %v365 = vld [vmem:[%s283 + $0x188] sm:$0xff]
        %v366 = vld [vmem:[%s283 + $0x190] sm:$0xff]
        %v367 = vld [vmem:[%s283 + $0x198] sm:$0xff]
        %v368 = vld [vmem:[%s283 + $0x1a0] sm:$0xff]
        %v369 = vld [vmem:[%s283 + $0x1a8] sm:$0xff]
        %v370 = vld [vmem:[%s283 + $0x1b0] sm:$0xff]
        %v371 = vld [vmem:[%s283 + $0x1b8] sm:$0xff]
        %v372 = vld [vmem:[%s283 + $0x1c0] sm:$0xff]
        %v373 = vld [vmem:[%s283 + $0x1c8] sm:$0xff]
        %v374 = vld [vmem:[%s283 + $0x1d0] sm:$0xff]
        %v375 = vld [vmem:[%s283 + $0x1d8] sm:$0xff]
        %v376 = vld [vmem:[%s2] sm:$0xff]
        %v377 = vld [vmem:[%s2 + $0x8] sm:$0xff]
        %379 = vset.pattern.permute.xlu0 0
        %380 = vperm.xlu0 %379, %v376
        %v381 = vpop.permute.xlu0 %380
        %384 = vset.pattern.permute.xlu0 0
        %385 = vperm.xlu0 %384, %v377
        %v386 = vpop.permute.xlu0 %385
        %v390 = vunpack.c.l.b16 %v314
        %v391 = vunpack.c.l.b16 %v315
        %v392 = vpack.c.b16 %v391, %v390
        %v453 = vunpack.c.l.b16 %v316
        %v454 = vunpack.c.h.b16 %v316
        %v455 = vunpack.c.l.b16 %v317
        %v456 = vunpack.c.h.b16 %v317
        %v457 = vunpack.c.l.b16 %v318
        %v458 = vunpack.c.h.b16 %v318
        %v459 = vunpack.c.l.b16 %v319
        %v460 = vunpack.c.h.b16 %v319
        %v461 = vunpack.c.l.b16 %v320
        %v462 = vunpack.c.h.b16 %v320
        %v463 = vunpack.c.l.b16 %v321
        %v464 = vunpack.c.h.b16 %v321
        %v465 = vunpack.c.l.b16 %v322
        %v466 = vunpack.c.h.b16 %v322
        %v467 = vunpack.c.l.b16 %v323
        %v468 = vunpack.c.h.b16 %v323
        %v469 = vunpack.c.l.b16 %v324
        %v470 = vunpack.c.h.b16 %v324
        %v471 = vunpack.c.l.b16 %v325
        %v472 = vunpack.c.h.b16 %v325
        %v473 = vunpack.c.l.b16 %v326
        %v474 = vunpack.c.h.b16 %v326
        %v475 = vunpack.c.l.b16 %v327
        %v476 = vunpack.c.h.b16 %v327
        %v477 = vunpack.c.l.b16 %v328
        %v478 = vunpack.c.h.b16 %v328
        %v479 = vunpack.c.l.b16 %v329
        %v480 = vunpack.c.h.b16 %v329
        %v481 = vunpack.c.l.b16 %v330
        %v482 = vunpack.c.h.b16 %v330
        %v483 = vunpack.c.l.b16 %v331
        %v484 = vunpack.c.h.b16 %v331
        %v485 = vunpack.c.l.b16 %v332
        %v486 = vunpack.c.h.b16 %v332
        %v487 = vunpack.c.l.b16 %v333
        %v488 = vunpack.c.h.b16 %v333
        %v489 = vunpack.c.l.b16 %v334
        %v490 = vunpack.c.h.b16 %v334
        %v491 = vunpack.c.l.b16 %v335
        %v492 = vunpack.c.h.b16 %v335
        %v493 = vunpack.c.l.b16 %v336
        %v494 = vunpack.c.h.b16 %v336
        %v495 = vunpack.c.l.b16 %v337
        %v496 = vunpack.c.h.b16 %v337
        %v497 = vunpack.c.l.b16 %v338
        %v498 = vunpack.c.h.b16 %v338
        %v499 = vunpack.c.l.b16 %v339
        %v500 = vunpack.c.h.b16 %v339
        %v501 = vunpack.c.l.b16 %v340
        %v502 = vunpack.c.h.b16 %v340
        %v503 = vunpack.c.l.b16 %v341
        %v504 = vunpack.c.h.b16 %v341
        %v505 = vunpack.c.l.b16 %v342
        %v506 = vunpack.c.h.b16 %v342
        %v507 = vunpack.c.l.b16 %v343
        %v508 = vunpack.c.h.b16 %v343
        %v509 = vunpack.c.l.b16 %v344
        %v510 = vunpack.c.h.b16 %v344
        %v511 = vunpack.c.l.b16 %v345
        %v512 = vunpack.c.h.b16 %v345
        %v513 = vunpack.c.l.b16 %v346
        %v514 = vunpack.c.h.b16 %v346
        %v515 = vunpack.c.l.b16 %v347
        %v516 = vunpack.c.h.b16 %v347
        %v517 = vunpack.c.l.b16 %v348
        %v518 = vunpack.c.h.b16 %v348
        %v519 = vunpack.c.l.b16 %v349
        %v520 = vunpack.c.h.b16 %v349
        %v521 = vunpack.c.l.b16 %v350
        %v522 = vunpack.c.h.b16 %v350
        %v523 = vunpack.c.l.b16 %v351
        %v524 = vunpack.c.h.b16 %v351
        %v525 = vunpack.c.l.b16 %v352
        %v526 = vunpack.c.h.b16 %v352
        %v527 = vunpack.c.l.b16 %v353
        %v528 = vunpack.c.h.b16 %v353
        %v529 = vunpack.c.l.b16 %v354
        %v530 = vunpack.c.h.b16 %v354
        %v531 = vunpack.c.l.b16 %v355
        %v532 = vunpack.c.h.b16 %v355
        %v533 = vunpack.c.l.b16 %v356
        %v534 = vunpack.c.h.b16 %v356
        %v535 = vunpack.c.l.b16 %v357
        %v536 = vunpack.c.h.b16 %v357
        %v537 = vunpack.c.l.b16 %v358
        %v538 = vunpack.c.h.b16 %v358
        %v539 = vunpack.c.l.b16 %v359
        %v540 = vunpack.c.h.b16 %v359
        %v541 = vunpack.c.l.b16 %v360
        %v542 = vunpack.c.h.b16 %v360
        %v543 = vunpack.c.l.b16 %v361
        %v544 = vunpack.c.h.b16 %v361
        %v545 = vunpack.c.l.b16 %v362
        %v546 = vunpack.c.h.b16 %v362
        %v547 = vunpack.c.l.b16 %v363
        %v548 = vunpack.c.h.b16 %v363
        %v549 = vunpack.c.l.b16 %v364
        %v550 = vunpack.c.h.b16 %v364
        %v551 = vunpack.c.l.b16 %v365
        %v552 = vunpack.c.h.b16 %v365
        %v553 = vunpack.c.l.b16 %v366
        %v554 = vunpack.c.h.b16 %v366
        %v555 = vunpack.c.l.b16 %v367
        %v556 = vunpack.c.h.b16 %v367
        %v557 = vunpack.c.l.b16 %v368
        %v558 = vunpack.c.h.b16 %v368
        %v559 = vunpack.c.l.b16 %v369
        %v560 = vunpack.c.h.b16 %v369
        %v561 = vunpack.c.l.b16 %v370
        %v562 = vunpack.c.h.b16 %v370
        %v563 = vunpack.c.l.b16 %v371
        %v564 = vunpack.c.h.b16 %v371
        %v565 = vunpack.c.l.b16 %v372
        %v566 = vunpack.c.h.b16 %v372
        %v567 = vunpack.c.l.b16 %v373
        %v568 = vunpack.c.h.b16 %v373
        %v569 = vunpack.c.l.b16 %v374
        %v570 = vunpack.c.h.b16 %v374
        %v571 = vunpack.c.l.b16 %v375
        %v572 = vunpack.c.h.b16 %v375
        %v573 = vpack.c.b16 %v465, %v453
        %v574 = vpack.c.b16 %v466, %v454
        %v575 = vpack.c.b16 %v467, %v455
        %v576 = vpack.c.b16 %v468, %v456
        %v577 = vpack.c.b16 %v469, %v457
        %v578 = vpack.c.b16 %v470, %v458
        %v579 = vpack.c.b16 %v471, %v459
        %v580 = vpack.c.b16 %v472, %v460
        %v581 = vpack.c.b16 %v473, %v461
        %v582 = vpack.c.b16 %v474, %v462
        %v583 = vpack.c.b16 %v475, %v463
        %v584 = vpack.c.b16 %v476, %v464
        %v585 = vpack.c.b16 %v489, %v477
        %v586 = vpack.c.b16 %v490, %v478
        %v587 = vpack.c.b16 %v491, %v479
        %v588 = vpack.c.b16 %v492, %v480
        %v589 = vpack.c.b16 %v493, %v481
        %v590 = vpack.c.b16 %v494, %v482
        %v591 = vpack.c.b16 %v495, %v483
        %v592 = vpack.c.b16 %v496, %v484
        %v593 = vpack.c.b16 %v497, %v485
        %v594 = vpack.c.b16 %v498, %v486
        %v595 = vpack.c.b16 %v499, %v487
        %v596 = vpack.c.b16 %v500, %v488
        %v597 = vpack.c.b16 %v513, %v501
        %v598 = vpack.c.b16 %v514, %v502
        %v599 = vpack.c.b16 %v515, %v503
        %v600 = vpack.c.b16 %v516, %v504
        %v601 = vpack.c.b16 %v517, %v505
        %v602 = vpack.c.b16 %v518, %v506
        %v603 = vpack.c.b16 %v519, %v507
        %v604 = vpack.c.b16 %v520, %v508
        %v605 = vpack.c.b16 %v521, %v509
        %v606 = vpack.c.b16 %v522, %v510
        %v607 = vpack.c.b16 %v523, %v511
        %v608 = vpack.c.b16 %v524, %v512
        %v609 = vpack.c.b16 %v537, %v525
        %v610 = vpack.c.b16 %v538, %v526
        %v611 = vpack.c.b16 %v539, %v527
        %v612 = vpack.c.b16 %v540, %v528
        %v613 = vpack.c.b16 %v541, %v529
        %v614 = vpack.c.b16 %v542, %v530
        %v615 = vpack.c.b16 %v543, %v531
        %v616 = vpack.c.b16 %v544, %v532
        %v617 = vpack.c.b16 %v545, %v533
        %v618 = vpack.c.b16 %v546, %v534
        %v619 = vpack.c.b16 %v547, %v535
        %v620 = vpack.c.b16 %v548, %v536
        %v621 = vpack.c.b16 %v561, %v549
        %v622 = vpack.c.b16 %v562, %v550
        %v623 = vpack.c.b16 %v563, %v551
        %v624 = vpack.c.b16 %v564, %v552
        %v625 = vpack.c.b16 %v565, %v553
        %v626 = vpack.c.b16 %v566, %v554
        %v627 = vpack.c.b16 %v567, %v555
        %v628 = vpack.c.b16 %v568, %v556
        %v629 = vpack.c.b16 %v569, %v557
        %v630 = vpack.c.b16 %v570, %v558
        %v631 = vpack.c.b16 %v571, %v559
        %v632 = vpack.c.b16 %v572, %v560
        %vm693 = vcmask 654336
        %v695 = vsel %vm693, %v392, 0
        %697 = vmatprep.subr.bf16.mxu0 0
        %698 = vmatpush1.bf16.msra.mxu0 0
        %699 = vmatprep.subr.bf16.mxu0 0
        %700 = vmatpush1.bf16.msra.mxu0 0
        %701 = vmatprep.subr.bf16.mxu0 0
        %702 = vmatpush1.bf16.msra.mxu0 0
        %703 = vmatprep.subr.bf16.mxu0 %v622
        %704 = vmatpush1.bf16.msra.mxu0 %v621
        %705 = vmatprep.subr.bf16.mxu0 %v610
        %706 = vmatpush1.bf16.msra.mxu0 %v609
        %707 = vmatprep.subr.bf16.mxu0 %v598
        %708 = vmatpush1.bf16.msra.mxu0 %v597
        %709 = vmatprep.subr.bf16.mxu0 %v586
        %710 = vmatpush1.bf16.msra.mxu0 %v585
        %711 = vmatprep.subr.bf16.mxu0 %v574
        %712 = vmatpush1.bf16.msra.mxu0 %v573
        %713 = vmatprep.subr.bf16.mxu0 0
        %714 = vmatpush2.bf16.msra.mxu0 0
        %715 = vmatprep.subr.bf16.mxu0 0
        %716 = vmatpush2.bf16.msra.mxu0 0
        %717 = vmatprep.subr.bf16.mxu0 0
        %718 = vmatpush2.bf16.msra.mxu0 0
        %719 = vmatprep.subr.bf16.mxu0 0
        %720 = vmatpush2.bf16.msra.mxu0 0
        %721 = vmatprep.subr.bf16.mxu0 0
        %722 = vmatpush2.bf16.msra.mxu0 0
        %723 = vmatprep.subr.bf16.mxu0 0
        %724 = vmatpush2.bf16.msra.mxu0 0
        %725 = vmatprep.subr.bf16.mxu0 0
        %726 = vmatpush2.bf16.msra.mxu0 0
        %727 = vmatprep.subr.bf16.mxu0 0
        %728 = vmatpush2.bf16.msra.mxu0 0
        %729 = vmatprep.mubr.bf16.mxu0 0
        %730 = vmatmul.mubr.bf16.gmra.mxu0 %v695
        %v731 = vpop.f32.mrf.mxu0
        %v732 = vadd.f32 %v381, %v731
        %v733 = vpop.f32.mrf.mxu0
        %v734 = vadd.f32 %v381, %v733
        %v735 = vpop.f32.mrf.mxu0
        %v736 = vadd.f32 %v386, %v735
        %v737 = vpop.f32.mrf.mxu0
        %v738 = vadd.f32 %v386, %v737
        %739 = vdwg.mxu0
        %740 = vmatprep.subr.bf16.mxu0 0
        %741 = vmatpush1.bf16.msra.mxu0 0
        %742 = vmatprep.subr.bf16.mxu0 0
        %743 = vmatpush1.bf16.msra.mxu0 0
        %744 = vmatprep.subr.bf16.mxu0 0
        %745 = vmatpush1.bf16.msra.mxu0 0
        %746 = vmatprep.subr.bf16.mxu0 %v624
        %747 = vmatpush1.bf16.msra.mxu0 %v623
        %748 = vmatprep.subr.bf16.mxu0 %v612
        %749 = vmatpush1.bf16.msra.mxu0 %v611
        %750 = vmatprep.subr.bf16.mxu0 %v600
        %751 = vmatpush1.bf16.msra.mxu0 %v599
        %752 = vmatprep.subr.bf16.mxu0 %v588
        %753 = vmatpush1.bf16.msra.mxu0 %v587
        %754 = vmatprep.subr.bf16.mxu0 %v576
        %755 = vmatpush1.bf16.msra.mxu0 %v575
        %756 = vmatprep.subr.bf16.mxu0 0
        %757 = vmatpush2.bf16.msra.mxu0 0
        %758 = vmatprep.subr.bf16.mxu0 0
        %759 = vmatpush2.bf16.msra.mxu0 0
        %760 = vmatprep.subr.bf16.mxu0 0
        %761 = vmatpush2.bf16.msra.mxu0 0
        %762 = vmatprep.subr.bf16.mxu0 0
        %763 = vmatpush2.bf16.msra.mxu0 0
        %764 = vmatprep.subr.bf16.mxu0 0
        %765 = vmatpush2.bf16.msra.mxu0 0
        %766 = vmatprep.subr.bf16.mxu0 0
        %767 = vmatpush2.bf16.msra.mxu0 0
        %768 = vmatprep.subr.bf16.mxu0 0
        %769 = vmatpush2.bf16.msra.mxu0 0
        %770 = vmatprep.subr.bf16.mxu0 0
        %771 = vmatpush2.bf16.msra.mxu0 0
        %772 = vmatprep.mubr.bf16.mxu0 0
        %773 = vmatmul.mubr.bf16.gmra.mxu0 %v695
        %v774 = vpop.f32.mrf.mxu0
        %v775 = vadd.f32 %v381, %v774
        %v776 = vpop.f32.mrf.mxu0
        %v777 = vadd.f32 %v381, %v776
        %v778 = vpop.f32.mrf.mxu0
        %v779 = vadd.f32 %v386, %v778
        %v780 = vpop.f32.mrf.mxu0
        %v781 = vadd.f32 %v386, %v780
        %782 = vdwg.mxu0
        %783 = vmatprep.subr.bf16.mxu0 0
        %784 = vmatpush1.bf16.msra.mxu0 0
        %785 = vmatprep.subr.bf16.mxu0 0
        %786 = vmatpush1.bf16.msra.mxu0 0
        %787 = vmatprep.subr.bf16.mxu0 0
        %788 = vmatpush1.bf16.msra.mxu0 0
        %789 = vmatprep.subr.bf16.mxu0 %v626
        %790 = vmatpush1.bf16.msra.mxu0 %v625
        %791 = vmatprep.subr.bf16.mxu0 %v614
        %792 = vmatpush1.bf16.msra.mxu0 %v613
        %793 = vmatprep.subr.bf16.mxu0 %v602
        %794 = vmatpush1.bf16.msra.mxu0 %v601
        %795 = vmatprep.subr.bf16.mxu0 %v590
        %796 = vmatpush1.bf16.msra.mxu0 %v589
        %797 = vmatprep.subr.bf16.mxu0 %v578
        %798 = vmatpush1.bf16.msra.mxu0 %v577
        %799 = vmatprep.subr.bf16.mxu0 0
        %800 = vmatpush2.bf16.msra.mxu0 0
        %801 = vmatprep.subr.bf16.mxu0 0
        %802 = vmatpush2.bf16.msra.mxu0 0
        %803 = vmatprep.subr.bf16.mxu0 0
        %804 = vmatpush2.bf16.msra.mxu0 0
        %805 = vmatprep.subr.bf16.mxu0 0
        %806 = vmatpush2.bf16.msra.mxu0 0
        %807 = vmatprep.subr.bf16.mxu0 0
        %808 = vmatpush2.bf16.msra.mxu0 0
        %809 = vmatprep.subr.bf16.mxu0 0
        %810 = vmatpush2.bf16.msra.mxu0 0
        %811 = vmatprep.subr.bf16.mxu0 0
        %812 = vmatpush2.bf16.msra.mxu0 0
        %813 = vmatprep.subr.bf16.mxu0 0
        %814 = vmatpush2.bf16.msra.mxu0 0
        %815 = vmatprep.mubr.bf16.mxu0 0
        %816 = vmatmul.mubr.bf16.gmra.mxu0 %v695
        %v817 = vpop.f32.mrf.mxu0
        %v818 = vadd.f32 %v381, %v817
        %v819 = vpop.f32.mrf.mxu0
        %v820 = vadd.f32 %v381, %v819
        %v821 = vpop.f32.mrf.mxu0
        %v822 = vadd.f32 %v386, %v821
        %v823 = vpop.f32.mrf.mxu0
        %v824 = vadd.f32 %v386, %v823
        %825 = vdwg.mxu0
        %826 = vmatprep.subr.bf16.mxu0 0
        %827 = vmatpush1.bf16.msra.mxu0 0
        %828 = vmatprep.subr.bf16.mxu0 0
        %829 = vmatpush1.bf16.msra.mxu0 0
        %830 = vmatprep.subr.bf16.mxu0 0
        %831 = vmatpush1.bf16.msra.mxu0 0
        %832 = vmatprep.subr.bf16.mxu0 %v628
        %833 = vmatpush1.bf16.msra.mxu0 %v627
        %834 = vmatprep.subr.bf16.mxu0 %v616
        %835 = vmatpush1.bf16.msra.mxu0 %v615
        %836 = vmatprep.subr.bf16.mxu0 %v604
        %837 = vmatpush1.bf16.msra.mxu0 %v603
        %838 = vmatprep.subr.bf16.mxu0 %v592
        %839 = vmatpush1.bf16.msra.mxu0 %v591
        %840 = vmatprep.subr.bf16.mxu0 %v580
        %841 = vmatpush1.bf16.msra.mxu0 %v579
        %842 = vmatprep.subr.bf16.mxu0 0
        %843 = vmatpush2.bf16.msra.mxu0 0
        %844 = vmatprep.subr.bf16.mxu0 0
        %845 = vmatpush2.bf16.msra.mxu0 0
        %846 = vmatprep.subr.bf16.mxu0 0
        %847 = vmatpush2.bf16.msra.mxu0 0
        %848 = vmatprep.subr.bf16.mxu0 0
        %849 = vmatpush2.bf16.msra.mxu0 0
        %850 = vmatprep.subr.bf16.mxu0 0
        %851 = vmatpush2.bf16.msra.mxu0 0
        %852 = vmatprep.subr.bf16.mxu0 0
        %853 = vmatpush2.bf16.msra.mxu0 0
        %854 = vmatprep.subr.bf16.mxu0 0
        %855 = vmatpush2.bf16.msra.mxu0 0
        %856 = vmatprep.subr.bf16.mxu0 0
        %857 = vmatpush2.bf16.msra.mxu0 0
        %858 = vmatprep.mubr.bf16.mxu0 0
        %859 = vmatmul.mubr.bf16.gmra.mxu0 %v695
        %v860 = vpop.f32.mrf.mxu0
        %v861 = vadd.f32 %v381, %v860
        %v862 = vpop.f32.mrf.mxu0
        %v863 = vadd.f32 %v381, %v862
        %v864 = vpop.f32.mrf.mxu0
        %v865 = vadd.f32 %v386, %v864
        %v866 = vpop.f32.mrf.mxu0
        %v867 = vadd.f32 %v386, %v866
        %868 = vdwg.mxu0
        %869 = vmatprep.subr.bf16.mxu0 0
        %870 = vmatpush1.bf16.msra.mxu0 0
        %871 = vmatprep.subr.bf16.mxu0 0
        %872 = vmatpush1.bf16.msra.mxu0 0
        %873 = vmatprep.subr.bf16.mxu0 0
        %874 = vmatpush1.bf16.msra.mxu0 0
        %875 = vmatprep.subr.bf16.mxu0 %v630
        %876 = vmatpush1.bf16.msra.mxu0 %v629
        %877 = vmatprep.subr.bf16.mxu0 %v618
        %878 = vmatpush1.bf16.msra.mxu0 %v617
        %879 = vmatprep.subr.bf16.mxu0 %v606
        %880 = vmatpush1.bf16.msra.mxu0 %v605
        %881 = vmatprep.subr.bf16.mxu0 %v594
        %882 = vmatpush1.bf16.msra.mxu0 %v593
        %883 = vmatprep.subr.bf16.mxu0 %v582
        %884 = vmatpush1.bf16.msra.mxu0 %v581
        %885 = vmatprep.subr.bf16.mxu0 0
        %886 = vmatpush2.bf16.msra.mxu0 0
        %887 = vmatprep.subr.bf16.mxu0 0
        %888 = vmatpush2.bf16.msra.mxu0 0
        %889 = vmatprep.subr.bf16.mxu0 0
        %890 = vmatpush2.bf16.msra.mxu0 0
        %891 = vmatprep.subr.bf16.mxu0 0
        %892 = vmatpush2.bf16.msra.mxu0 0
        %893 = vmatprep.subr.bf16.mxu0 0
        %894 = vmatpush2.bf16.msra.mxu0 0
        %895 = vmatprep.subr.bf16.mxu0 0
        %896 = vmatpush2.bf16.msra.mxu0 0
        %897 = vmatprep.subr.bf16.mxu0 0
        %898 = vmatpush2.bf16.msra.mxu0 0
        %899 = vmatprep.subr.bf16.mxu0 0
        %900 = vmatpush2.bf16.msra.mxu0 0
        %901 = vmatprep.mubr.bf16.mxu0 0
        %902 = vmatmul.mubr.bf16.gmra.mxu0 %v695
        %v903 = vpop.f32.mrf.mxu0
        %v904 = vadd.f32 %v381, %v903
        %v905 = vpop.f32.mrf.mxu0
        %v906 = vadd.f32 %v381, %v905
        %v907 = vpop.f32.mrf.mxu0
        %v908 = vadd.f32 %v386, %v907
        %v909 = vpop.f32.mrf.mxu0
        %v910 = vadd.f32 %v386, %v909
        %911 = vdwg.mxu0
        %912 = vmatprep.subr.bf16.mxu0 0
        %913 = vmatpush1.bf16.msra.mxu0 0
        %914 = vmatprep.subr.bf16.mxu0 0
        %915 = vmatpush1.bf16.msra.mxu0 0
        %916 = vmatprep.subr.bf16.mxu0 0
        %917 = vmatpush1.bf16.msra.mxu0 0
        %918 = vmatprep.subr.bf16.mxu0 %v632
        %919 = vmatpush1.bf16.msra.mxu0 %v631
        %920 = vmatprep.subr.bf16.mxu0 %v620
        %921 = vmatpush1.bf16.msra.mxu0 %v619
        %922 = vmatprep.subr.bf16.mxu0 %v608
        %923 = vmatpush1.bf16.msra.mxu0 %v607
        %924 = vmatprep.subr.bf16.mxu0 %v596
        %925 = vmatpush1.bf16.msra.mxu0 %v595
        %926 = vmatprep.subr.bf16.mxu0 %v584
        %927 = vmatpush1.bf16.msra.mxu0 %v583
        %928 = vmatprep.subr.bf16.mxu0 0
        %929 = vmatpush2.bf16.msra.mxu0 0
        %930 = vmatprep.subr.bf16.mxu0 0
        %931 = vmatpush2.bf16.msra.mxu0 0
        %932 = vmatprep.subr.bf16.mxu0 0
        %933 = vmatpush2.bf16.msra.mxu0 0
        %934 = vmatprep.subr.bf16.mxu0 0
        %935 = vmatpush2.bf16.msra.mxu0 0
        %936 = vmatprep.subr.bf16.mxu0 0
        %937 = vmatpush2.bf16.msra.mxu0 0
        %938 = vmatprep.subr.bf16.mxu0 0
        %939 = vmatpush2.bf16.msra.mxu0 0
        %940 = vmatprep.subr.bf16.mxu0 0
        %941 = vmatpush2.bf16.msra.mxu0 0
        %942 = vmatprep.subr.bf16.mxu0 0
        %943 = vmatpush2.bf16.msra.mxu0 0
        %944 = vmatprep.mubr.bf16.mxu0 0
        %945 = vmatmul.mubr.bf16.gmra.mxu0 %v695
        %v946 = vpop.f32.mrf.mxu0
        %v947 = vadd.f32 %v381, %v946
        %v948 = vpop.f32.mrf.mxu0
        %v949 = vadd.f32 %v381, %v948
        %v950 = vpop.f32.mrf.mxu0
        %v951 = vadd.f32 %v386, %v950
        %v952 = vpop.f32.mrf.mxu0
        %v953 = vadd.f32 %v386, %v952
        %954 = vdwg.mxu0
        %vm955 = vcmp.gt.f32.partialorder %v732, 0.0
        %vm956 = vcmp.gt.f32.partialorder %v734, 0.0
        %vm957 = vcmp.gt.f32.partialorder %v775, 0.0
        %vm958 = vcmp.gt.f32.partialorder %v777, 0.0
        %vm959 = vcmp.gt.f32.partialorder %v818, 0.0
        %vm960 = vcmp.gt.f32.partialorder %v820, 0.0
        %vm961 = vcmp.gt.f32.partialorder %v861, 0.0
        %vm962 = vcmp.gt.f32.partialorder %v863, 0.0
        %vm963 = vcmp.gt.f32.partialorder %v904, 0.0
        %vm964 = vcmp.gt.f32.partialorder %v906, 0.0
        %vm965 = vcmp.gt.f32.partialorder %v947, 0.0
        %vm966 = vcmp.gt.f32.partialorder %v949, 0.0
        %vm967 = vcmp.gt.f32.partialorder %v736, 0.0
        %vm968 = vcmp.gt.f32.partialorder %v738, 0.0
        %vm969 = vcmp.gt.f32.partialorder %v779, 0.0
        %vm970 = vcmp.gt.f32.partialorder %v781, 0.0
        %vm971 = vcmp.gt.f32.partialorder %v822, 0.0
        %vm972 = vcmp.gt.f32.partialorder %v824, 0.0
        %vm973 = vcmp.gt.f32.partialorder %v865, 0.0
        %vm974 = vcmp.gt.f32.partialorder %v867, 0.0
        %vm975 = vcmp.gt.f32.partialorder %v908, 0.0
        %vm976 = vcmp.gt.f32.partialorder %v910, 0.0
        %vm977 = vcmp.gt.f32.partialorder %v951, 0.0
        %vm978 = vcmp.gt.f32.partialorder %v953, 0.0
        %v979 = vmul.f32 %v732, 0.01
        %v980 = vmul.f32 %v734, 0.01
        %v981 = vmul.f32 %v775, 0.01
        %v982 = vmul.f32 %v777, 0.01
        %v983 = vmul.f32 %v818, 0.01
        %v984 = vmul.f32 %v820, 0.01
        %v985 = vmul.f32 %v861, 0.01
        %v986 = vmul.f32 %v863, 0.01
        %v987 = vmul.f32 %v904, 0.01
        %v988 = vmul.f32 %v906, 0.01
        %v989 = vmul.f32 %v947, 0.01
        %v990 = vmul.f32 %v949, 0.01
        %v991 = vmul.f32 %v736, 0.01
        %v992 = vmul.f32 %v738, 0.01
        %v993 = vmul.f32 %v779, 0.01
        %v994 = vmul.f32 %v781, 0.01
        %v995 = vmul.f32 %v822, 0.01
        %v996 = vmul.f32 %v824, 0.01
        %v997 = vmul.f32 %v865, 0.01
        %v998 = vmul.f32 %v867, 0.01
        %v999 = vmul.f32 %v908, 0.01
        %v1000 = vmul.f32 %v910, 0.01
        %v1001 = vmul.f32 %v951, 0.01
        %v1002 = vmul.f32 %v953, 0.01
        %v1003 = vsel %vm955, %v732, %v979
        %v1004 = vsel %vm956, %v734, %v980
        %v1005 = vsel %vm957, %v775, %v981
        %v1006 = vsel %vm958, %v777, %v982
        %v1007 = vsel %vm959, %v818, %v983
        %v1008 = vsel %vm960, %v820, %v984
        %v1009 = vsel %vm961, %v861, %v985
        %v1010 = vsel %vm962, %v863, %v986
        %v1011 = vsel %vm963, %v904, %v987
        %v1012 = vsel %vm964, %v906, %v988
        %v1013 = vsel %vm965, %v947, %v989
        %v1014 = vsel %vm966, %v949, %v990
        %v1015 = vsel %vm967, %v736, %v991
        %v1016 = vsel %vm968, %v738, %v992
        %v1017 = vsel %vm969, %v779, %v993
        %v1018 = vsel %vm970, %v781, %v994
        %v1019 = vsel %vm971, %v822, %v995
        %v1020 = vsel %vm972, %v824, %v996
        %v1021 = vsel %vm973, %v865, %v997
        %v1022 = vsel %vm974, %v867, %v998
        %v1023 = vsel %vm975, %v908, %v999
        %v1024 = vsel %vm976, %v910, %v1000
        %v1025 = vsel %vm977, %v951, %v1001
        %v1026 = vsel %vm978, %v953, %v1002
        %v1027 = vmax.f32 %v1003, %v1006
        %v1028 = vmax.f32 %v1004, %v1007
        %v1029 = vmax.f32 %v1005, %v1008
        %v1030 = vmax.f32 %v1015, %v1018
        %v1031 = vmax.f32 %v1016, %v1019
        %v1032 = vmax.f32 %v1017, %v1020
        %v1033 = vmax.f32 %v1009, %v1012
        %v1034 = vmax.f32 %v1010, %v1013
        %v1035 = vmax.f32 %v1011, %v1014
        %v1036 = vmax.f32 %v1021, %v1024
        %v1037 = vmax.f32 %v1022, %v1025
        %v1038 = vmax.f32 %v1023, %v1026
        %v1039 = vmax.f32 %v1027, %v1033
        %v1040 = vmax.f32 %v1028, %v1034
        %v1041 = vmax.f32 %v1029, %v1035
        %v1042 = vmax.f32 %v1030, %v1036
        %v1043 = vmax.f32 %v1031, %v1037
        %v1044 = vmax.f32 %v1032, %v1038
        %1045 = vst [vmem:[%s311] sm:$0xff] %v1039
        %1046 = vst [vmem:[%s311 + $0x8] sm:$0xff] %v1040
        %1047 = vst [vmem:[%s311 + $0x10] sm:$0xff] %v1041
        %1048 = vst [vmem:[%s311 + $0x18] sm:$0xff] %v1042
        %1049 = vst [vmem:[%s311 + $0x20] sm:$0xff] %v1043
        %1050 = vst [vmem:[%s311 + $0x28] sm:$0xff] %v1044
        %s1051 = smul.u32 2, %s14
        %p1052 = scmp.lt.s32.totalorder %s1051, 3
        %s1053 = scalar_select %p1052, %s1051, 3
        %s1054 = smul.addr %s1053, 3
        %s1055 = smul.addr %s1054, 8
        %s1056 = scalar_lea.vmem %s3, %s1055
        // Predicated region
        $region56: #{picture_net_forward.5} parent=50 // pred_check
          %p1057 = pneg %p100
        $region57: #{picture_net_forward.5} parent=50 // pred_check_branch
          %1059 = sbr.rel (%p1057) target = $region59
        $region58: #{picture_net_forward.5} parent=50 // pred_region
          %s1060 = smul.u32 2, %s14
        $region59: #{picture_net_forward.5} parent=50 // pred_fallthru
          _
      $region51: #{picture_net_forward.5} parent=5 // pred_fallthru
        _
      %p1061 = scmp.le.s32.totalorder 2, %s9
      // Predicated region
      $region60: #{picture_net_forward.5} parent=5 // pred_check
        %p1062 = pneg %p1061
      $region61: #{picture_net_forward.5} parent=5 // pred_check_branch
        %1064 = sbr.rel (%p1062) target = $region63
      $region62: #{picture_net_forward.5} parent=5 // pred_region
        %s1065 = ssub.s32 %s9, 2
        // Predicated region
        $region64: #{picture_net_forward.5} parent=62 // pred_check
          %p1066 = pneg %p106
        $region65: #{picture_net_forward.5} parent=62 // pred_check_branch
          %1068 = sbr.rel (%p1066) target = $region67
        $region66: #{picture_net_forward.5} parent=62 // pred_region
          %s1069 = smul.u32 2, %s15
          %p1070 = scmp.lt.s32.totalorder %s1069, 3
          %s1071 = scalar_select %p1070, %s1069, 3
          %s1072 = smul.addr %s1071, 3
          %s1073 = smul.addr %s1072, 8
          %s1074 = scalar_lea.vmem %s3, %s1073
        $region67: #{picture_net_forward.5} parent=62 // pred_fallthru
          _
      $region63: #{picture_net_forward.5} parent=5 // pred_fallthru
        _
    $region6: #{picture_net_forward.5} parent=1 // loop_footer
      %s13 = sadd.s32 1, %s9
    $region7: #{picture_net_forward.5} parent=1 // loop_footer_branch
      %8 = sbr.rel target = $region3
    $region8: #{picture_net_forward.5} parent=1 // loop_exit
      _

// kernel: picture_net_forward.6
$region0: #{picture_net_forward.6}
  #allocation0 [shape = 'u32[]', space=smem, size = 0x4, offset = 0x4, fixed_abs, tag = 'smem constant byte address 0x4 - core index']
  #allocation1 [shape = 'u32[144,128]{1,0:T(1,128)}', space=vmem, size = 0x12000, scoped, tag = 'internal scratch']
  %s0 = inlined_call_operand.vmem [shape: bf16[144,1024], index: 0, kind: input, shape index: {}]
  %s1 = inlined_call_operand.vmem [shape: bf16[32,144], index: 1, kind: input, shape index: {}]
  %s2 = inlined_call_operand.vmem [shape: f32[32,1], index: 2, kind: input, shape index: {}]
  %s3 = inlined_call_operand.vmem [shape: f32[64,128], index: 3, kind: output, shape index: {}]
  %s4 = sld [smem:[#allocation0]]
  $region68: #{picture_net_forward.6} parent=0
    _
  %s6 = ssub.s32 1, %s4
  %s7 = scalar_select 0, %s6, %s4
  $region1: #{picture_net_forward.6} parent=0
    #allocation2 [shape = 'u8[294912]{0}', space=vmem, size = 0x48000, scoped, tag = 'input window, operand 0']
    loop: start=0, step=1, limit=4
    $region2: #{picture_net_forward.6} parent=1 // loop_pre_header
      _
    $region3: #{picture_net_forward.6} parent=1 // loop_header
      %s9 = sphi 0, %s13
      %p10 = scmp.ge.s32.totalorder %s9, 4
      %s19 = sphi 0, %s21
      %s22 = sphi 0, %s19
      %s23 = sphi 0, %s22
      %s39 = sphi 0, %s23
      %s43 = sphi 0, %s43
      %s45 = sphi 0, %s43
      %s46 = sphi 0, %s45
      %s60 = sphi 0, %s46
      %s64 = sphi 0, %s64
      %s66 = sphi 0, %s64
      %s67 = sphi 0, %s66
      %s81 = sphi 0, %s67
      %s87 = sphi 0, %s89
      %s90 = sphi 0, %s87
      %s91 = sphi 0, %s90
      %s107 = sphi 0, %s91
    $region4: #{picture_net_forward.6} parent=1 // loop_header_branch
      %12 = sbr.rel (%p10) target = $region8
    $region5: #{picture_net_forward.6} parent=1 // loop_body
      %s14 = ssub.s32 %s9, 1
      %s15 = ssub.s32 %s9, 2
      %s16 = sadd.s32 %s9, 1
      %s17 = ssub.s32 %s9, %s16
      %p18 = scmp.eq.s32.totalorder %s17, 0
      %s20 = sadd.s32 %s19, 1
      %s21 = scalar_select %p18, %s19, %s20
      %p24 = pneg %p18
      %p25 = scmp.eq.s32.totalorder %s9, 1
      %p26 = por %p24, %p25
      %p27 = scmp.ne.s32.totalorder %s19, %s22
      %p28 = scmp.eq.s32.totalorder %s9, 0
      %p29 = por %p27, %p28
      %p30 = scmp.ne.s32.totalorder %s19, %s22
      %p31 = scmp.eq.s32.totalorder %s14, 1
      %p32 = por %p30, %p31
      %p33 = scmp.ne.s32.totalorder %s22, %s23
      %p34 = scmp.eq.s32.totalorder %s14, 0
      %p35 = por %p33, %p34
      %p36 = scmp.ne.s32.totalorder %s22, %s23
      %p37 = scmp.eq.s32.totalorder %s15, 1
      %p38 = por %p36, %p37
      %p40 = scmp.ne.s32.totalorder %s23, %s39
      %p41 = scmp.eq.s32.totalorder %s15, 0
      %p42 = por %p40, %p41
      %s44 = sadd.s32 %s43, 1
      %p47 = scmp.eq.s32.totalorder %s9, 1
      %p48 = scmp.ne.s32.totalorder %s43, %s45
      %p49 = scmp.eq.s32.totalorder %s9, 0
      %p50 = por %p48, %p49
      %p51 = scmp.ne.s32.totalorder %s43, %s45
      %p52 = scmp.eq.s32.totalorder %s14, 1
      %p53 = por %p51, %p52
      %p54 = scmp.ne.s32.totalorder %s45, %s46
      %p55 = scmp.eq.s32.totalorder %s14, 0
      %p56 = por %p54, %p55
      %p57 = scmp.ne.s32.totalorder %s45, %s46
      %p58 = scmp.eq.s32.totalorder %s15, 1
      %p59 = por %p57, %p58
      %p61 = scmp.ne.s32.totalorder %s46, %s60
      %p62 = scmp.eq.s32.totalorder %s15, 0
      %p63 = por %p61, %p62
      %s65 = sadd.s32 %s64, 1
      %p68 = scmp.eq.s32.totalorder %s9, 1
      %p69 = scmp.ne.s32.totalorder %s64, %s66
      %p70 = scmp.eq.s32.totalorder %s9, 0
      %p71 = por %p69, %p70
      %p72 = scmp.ne.s32.totalorder %s64, %s66
      %p73 = scmp.eq.s32.totalorder %s14, 1
      %p74 = por %p72, %p73
      %p75 = scmp.ne.s32.totalorder %s66, %s67
      %p76 = scmp.eq.s32.totalorder %s14, 0
      %p77 = por %p75, %p76
      %p78 = scmp.ne.s32.totalorder %s66, %s67
      %p79 = scmp.eq.s32.totalorder %s15, 1
      %p80 = por %p78, %p79
      %p82 = scmp.ne.s32.totalorder %s67, %s81
      %p83 = scmp.eq.s32.totalorder %s15, 0
      %p84 = por %p82, %p83
      %s85 = ssub.s32 %s9, %s16
      %p86 = scmp.eq.s32.totalorder %s85, 0
      %s88 = sadd.s32 %s87, 1
      %s89 = scalar_select %p86, %s87, %s88
      %p92 = pneg %p86
      %p93 = scmp.eq.s32.totalorder %s9, 1
      %p94 = por %p92, %p93
      %p95 = scmp.ne.s32.totalorder %s87, %s90
      %p96 = scmp.eq.s32.totalorder %s9, 0
      %p97 = por %p95, %p96
      %p98 = scmp.ne.s32.totalorder %s87, %s90
      %p99 = scmp.eq.s32.totalorder %s14, 1
      %p100 = por %p98, %p99
      %p101 = scmp.ne.s32.totalorder %s90, %s91
      %p102 = scmp.eq.s32.totalorder %s14, 0
      %p103 = por %p101, %p102
      %p104 = scmp.ne.s32.totalorder %s90, %s91
      %p105 = scmp.eq.s32.totalorder %s15, 1
      %p106 = por %p104, %p105
      %p108 = scmp.ne.s32.totalorder %s91, %s107
      %p109 = scmp.eq.s32.totalorder %s15, 0
      %p110 = por %p108, %p109
      %p111 = scmp.le.s32.totalorder 1, %s9
      %p112 = scmp.lt.s32.totalorder %s9, 3
      %p113 = pnand %p111, %p112
      %p114 = pneg %p113
      // Predicated region
      $region9: #{picture_net_forward.6} parent=5 // pred_check
        _
      $region10: #{picture_net_forward.6} parent=5 // pred_check_branch
        %116 = sbr.rel (%p113) target = $region12
      $region11: #{picture_net_forward.6} parent=5 // pred_region
        %s117 = ssub.s32 %s9, 1
        // Predicated region
        $region13: #{picture_net_forward.6} parent=11 // pred_check
          %p118 = pneg %p56
        $region14: #{picture_net_forward.6} parent=11 // pred_check_branch
          %120 = sbr.rel (%p118) target = $region16
        $region15: #{picture_net_forward.6} parent=11 // pred_region
          _
        $region16: #{picture_net_forward.6} parent=11 // pred_fallthru
          _
        // Predicated region
        $region17: #{picture_net_forward.6} parent=11 // pred_check
          %p121 = pneg %p77
        $region18: #{picture_net_forward.6} parent=11 // pred_check_branch
          %123 = sbr.rel (%p121) target = $region20
        $region19: #{picture_net_forward.6} parent=11 // pred_region
          _
        $region20: #{picture_net_forward.6} parent=11 // pred_fallthru
          _
      $region12: #{picture_net_forward.6} parent=5 // pred_fallthru
        _
      %p124 = scmp.lt.s32.totalorder %s9, 2
      // Predicated region
      $region21: #{picture_net_forward.6} parent=5 // pred_check
        %p125 = pneg %p124
      $region22: #{picture_net_forward.6} parent=5 // pred_check_branch
        %127 = sbr.rel (%p125) target = $region24
      $region23: #{picture_net_forward.6} parent=5 // pred_region
        // Predicated region
        $region25: #{picture_net_forward.6} parent=23 // pred_check
          %p128 = pneg %p29
        $region26: #{picture_net_forward.6} parent=23 // pred_check_branch
          %130 = sbr.rel (%p128) target = $region28
        $region27: #{picture_net_forward.6} parent=23 // pred_region
          %s131 = sand.u32 %s19, 1
          %s132 = sand.u32 %s19, 1
          %s133 = smul.addr %s132, 288
          %s134 = scalar_lea.vmem [#allocation2], %s133
          %s135 = smul.u32 4, %s9
          %s136 = smul.addr %s135, 4
          %s137 = scalar_lea.vmem %s0, %s136
          // Predicated region
          $region29: #{picture_net_forward.6} parent=27 // pred_check
            _
          $region30: #{picture_net_forward.6} parent=27 // pred_check_branch
            %139 = sbr.rel (0) target = $region32
          $region31: #{picture_net_forward.6} parent=27 // pred_region
            // Predicated region
            $region33: #{picture_net_forward.6} parent=31 // pred_check
              _
            $region34: #{picture_net_forward.6} parent=31 // pred_check_branch
              %141 = sbr.rel (0) target = $region36
            $region35: #{picture_net_forward.6} parent=31 // pred_region
              loop: start=0, step=1, limit=1
              $region37: #{picture_net_forward.6} parent=35 // loop_pre_header
                _
              $region38: #{picture_net_forward.6} parent=35 // loop_header
                %s143 = sphi 0, %s147
                %p144 = scmp.ge.s32.totalorder %s143, 1
                %s148 = sphi %s137, %s137
                %s149 = sphi %s134, %s134
              $region39: #{picture_net_forward.6} parent=35 // loop_header_branch
                %146 = sbr.rel (%p144) target = $region43
              $region40: #{picture_net_forward.6} parent=35 // loop_body
                %v150 = vld [vmem:[%s148] sm:$0xff]
                %151 = vst [vmem:[%s149] sm:$0xff] %v150
                %v152 = vld [vmem:[%s148 + $0x8] sm:$0xff]
                %153 = vst [vmem:[%s149 + $0x8] sm:$0xff] %v152
                %v154 = vld [vmem:[%s148 + $0x20] sm:$0xff]
                %155 = vst [vmem:[%s149 + $0x10] sm:$0xff] %v154
                %v156 = vld [vmem:[%s148 + $0x28] sm:$0xff]
                %157 = vst [vmem:[%s149 + $0x18] sm:$0xff] %v156
                %v158 = vld [vmem:[%s148 + $0x40] sm:$0xff]
                %159 = vst [vmem:[%s149 + $0x20] sm:$0xff] %v158
                %v160 = vld [vmem:[%s148 + $0x48] sm:$0xff]
                %161 = vst [vmem:[%s149 + $0x28] sm:$0xff] %v160
                %v162 = vld [vmem:[%s148 + $0x60] sm:$0xff]
                %163 = vst [vmem:[%s149 + $0x30] sm:$0xff] %v162
                %v164 = vld [vmem:[%s148 + $0x68] sm:$0xff]
                %165 = vst [vmem:[%s149 + $0x38] sm:$0xff] %v164
                %v166 = vld [vmem:[%s148 + $0x80] sm:$0xff]
                %167 = vst [vmem:[%s149 + $0x40] sm:$0xff] %v166
                %v168 = vld [vmem:[%s148 + $0x88] sm:$0xff]
                %169 = vst [vmem:[%s149 + $0x48] sm:$0xff] %v168
                %v170 = vld [vmem:[%s148 + $0xa0] sm:$0xff]
                %171 = vst [vmem:[%s149 + $0x50] sm:$0xff] %v170
                %v172 = vld [vmem:[%s148 + $0xa8] sm:$0xff]
                %173 = vst [vmem:[%s149 + $0x58] sm:$0xff] %v172
                %v174 = vld [vmem:[%s148 + $0xc0] sm:$0xff]
                %175 = vst [vmem:[%s149 + $0x60] sm:$0xff] %v174
                %v176 = vld [vmem:[%s148 + $0xc8] sm:$0xff]
                %177 = vst [vmem:[%s149 + $0x68] sm:$0xff] %v176
                %v178 = vld [vmem:[%s148 + $0xe0] sm:$0xff]
                %179 = vst [vmem:[%s149 + $0x70] sm:$0xff] %v178
                %v180 = vld [vmem:[%s148 + $0xe8] sm:$0xff]
                %181 = vst [vmem:[%s149 + $0x78] sm:$0xff] %v180
                %v182 = vld [vmem:[%s148 + $0x100] sm:$0xff]
                %183 = vst [vmem:[%s149 + $0x80] sm:$0xff] %v182
                %v184 = vld [vmem:[%s148 + $0x108] sm:$0xff]
                %185 = vst [vmem:[%s149 + $0x88] sm:$0xff] %v184
                %v186 = vld [vmem:[%s148 + $0x120] sm:$0xff]
                %187 = vst [vmem:[%s149 + $0x90] sm:$0xff] %v186
                %v188 = vld [vmem:[%s148 + $0x128] sm:$0xff]
                %189 = vst [vmem:[%s149 + $0x98] sm:$0xff] %v188
                %v190 = vld [vmem:[%s148 + $0x140] sm:$0xff]
                %191 = vst [vmem:[%s149 + $0xa0] sm:$0xff] %v190
                %v192 = vld [vmem:[%s148 + $0x148] sm:$0xff]
                %193 = vst [vmem:[%s149 + $0xa8] sm:$0xff] %v192
                %v194 = vld [vmem:[%s148 + $0x160] sm:$0xff]
                %195 = vst [vmem:[%s149 + $0xb0] sm:$0xff] %v194
                %v196 = vld [vmem:[%s148 + $0x168] sm:$0xff]
                %197 = vst [vmem:[%s149 + $0xb8] sm:$0xff] %v196
                %v198 = vld [vmem:[%s148 + $0x180] sm:$0xff]
                %199 = vst [vmem:[%s149 + $0xc0] sm:$0xff] %v198
                %v200 = vld [vmem:[%s148 + $0x188] sm:$0xff]
                %201 = vst [vmem:[%s149 + $0xc8] sm:$0xff] %v200
                %v202 = vld [vmem:[%s148 + $0x1a0] sm:$0xff]
                %203 = vst [vmem:[%s149 + $0xd0] sm:$0xff] %v202
                %v204 = vld [vmem:[%s148 + $0x1a8] sm:$0xff]
                %205 = vst [vmem:[%s149 + $0xd8] sm:$0xff] %v204
                %v206 = vld [vmem:[%s148 + $0x1c0] sm:$0xff]
                %207 = vst [vmem:[%s149 + $0xe0] sm:$0xff] %v206
                %v208 = vld [vmem:[%s148 + $0x1c8] sm:$0xff]
                %209 = vst [vmem:[%s149 + $0xe8] sm:$0xff] %v208
                %v210 = vld [vmem:[%s148 + $0x1e0] sm:$0xff]
                %211 = vst [vmem:[%s149 + $0xf0] sm:$0xff] %v210
                %v212 = vld [vmem:[%s148 + $0x1e8] sm:$0xff]
                %213 = vst [vmem:[%s149 + $0xf8] sm:$0xff] %v212
                %v214 = vld [vmem:[%s148 + $0x200] sm:$0xff]
                %215 = vst [vmem:[%s149 + $0x100] sm:$0xff] %v214
                %v216 = vld [vmem:[%s148 + $0x208] sm:$0xff]
                %217 = vst [vmem:[%s149 + $0x108] sm:$0xff] %v216
                %v218 = vld [vmem:[%s148 + $0x220] sm:$0xff]
                %219 = vst [vmem:[%s149 + $0x110] sm:$0xff] %v218
                %v220 = vld [vmem:[%s148 + $0x228] sm:$0xff]
                %221 = vst [vmem:[%s149 + $0x118] sm:$0xff] %v220
              $region41: #{picture_net_forward.6} parent=35 // loop_footer
                %s147 = sadd.s32 1, %s143
              $region42: #{picture_net_forward.6} parent=35 // loop_footer_branch
                %142 = sbr.rel target = $region38
              $region43: #{picture_net_forward.6} parent=35 // loop_exit
                _
            $region36: #{picture_net_forward.6} parent=31 // pred_fallthru
              _
            // Predicated region
            $region44: #{picture_net_forward.6} parent=31 // pred_check
              _
            $region45: #{picture_net_forward.6} parent=31 // pred_check_branch
              %223 = sbr.rel target = $region47
            $region46: #{picture_net_forward.6} parent=31 // pred_region
              _
            $region47: #{picture_net_forward.6} parent=31 // pred_fallthru
              _
          $region32: #{picture_net_forward.6} parent=27 // pred_fallthru
            _
          %224 = vnop
        $region28: #{picture_net_forward.6} parent=23 // pred_fallthru
          _
      $region24: #{picture_net_forward.6} parent=5 // pred_fallthru
        _
      %p225 = scmp.le.s32.totalorder 1, %s9
      %p226 = scmp.lt.s32.totalorder %s9, 3
      %p227 = pnand %p225, %p226
      %p228 = pneg %p227
      // Predicated region
      $region48: #{picture_net_forward.6} parent=5 // pred_check
        _
      $region49: #{picture_net_forward.6} parent=5 // pred_check_branch
        %230 = sbr.rel (%p227) target = $region51
      $region50: #{picture_net_forward.6} parent=5 // pred_region
        %s231 = ssub.s32 %s9, 1
        %s232 = sand.u32 %s22, 1
        %s233 = sand.u32 %s22, 1
        %s234 = smul.addr %s233, 288
        %s235 = scalar_lea.vmem [#allocation2], %s234
        // Predicated region
        $region52: #{picture_net_forward.6} parent=50 // pred_check
          %p236 = pneg %p35
        $region53: #{picture_net_forward.6} parent=50 // pred_check_branch
          %238 = sbr.rel (%p236) target = $region55
        $region54: #{picture_net_forward.6} parent=50 // pred_region
          _
        $region55: #{picture_net_forward.6} parent=50 // pred_fallthru
          _
        %s239 = sand.u32 %s22, 1
        %s240 = sand.u32 %s22, 1
        %s241 = smul.addr %s240, 288
        %s242 = scalar_lea.vmem [#allocation2], %s241
        %p243 = pneg %p35
        %p244 = pneg %p32
        %p245 = pneg %p56
        %p246 = pneg %p53
        %p247 = pneg %p77
        %p248 = pneg %p74
        %p249 = pneg %p103
        %p250 = pneg %p100
        %s251 = smul.u32 4, %s14
        %p252 = scmp.lt.s32.totalorder %s251, 7
        %s253 = scalar_select %p252, %s251, 7
        %s254 = smul.addr %s253, 8
        %s255 = scalar_lea.vmem %s3, %s254
        %s256 = smul.u32 4, %s14
        %s257 = smul.u32 4, %s14
        %p258 = scmp.lt.s32.totalorder %s257, 7
        %s259 = scalar_select %p258, %s257, 7
        %s260 = smul.addr %s259, 8
        %s261 = scalar_lea.vmem %s3, %s260
        %s262 = smul.u32 4, %s14
        %v264 = vld [vmem:[%s1] sm:$0xff]
        %v265 = vld [vmem:[%s1 + $0x8] sm:$0xff]
        %v266 = vld [vmem:[%s1 + $0x10] sm:$0xff]
        %v267 = vld [vmem:[%s1 + $0x18] sm:$0xff]
        %v268 = vld [vmem:[%s235] sm:$0xff]
        %v269 = vld [vmem:[%s235 + $0x8] sm:$0xff]
        %v270 = vld [vmem:[%s235 + $0x10] sm:$0xff]
        %v271 = vld [vmem:[%s235 + $0x18] sm:$0xff]
        %v272 = vld [vmem:[%s235 + $0x20] sm:$0xff]
        %v273 = vld [vmem:[%s235 + $0x28] sm:$0xff]
        %v274 = vld [vmem:[%s235 + $0x30] sm:$0xff]
        %v275 = vld [vmem:[%s235 + $0x38] sm:$0xff]
        %v276 = vld [vmem:[%s235 + $0x40] sm:$0xff]
        %v277 = vld [vmem:[%s235 + $0x48] sm:$0xff]
        %v278 = vld [vmem:[%s235 + $0x50] sm:$0xff]
        %v279 = vld [vmem:[%s235 + $0x58] sm:$0xff]
        %v280 = vld [vmem:[%s235 + $0x60] sm:$0xff]
        %v281 = vld [vmem:[%s235 + $0x68] sm:$0xff]
        %v282 = vld [vmem:[%s235 + $0x70] sm:$0xff]
        %v283 = vld [vmem:[%s235 + $0x78] sm:$0xff]
        %v284 = vld [vmem:[%s235 + $0x80] sm:$0xff]
        %v285 = vld [vmem:[%s235 + $0x88] sm:$0xff]
        %v286 = vld [vmem:[%s235 + $0x90] sm:$0xff]
        %v287 = vld [vmem:[%s235 + $0x98] sm:$0xff]
        %v288 = vld [vmem:[%s235 + $0xa0] sm:$0xff]
        %v289 = vld [vmem:[%s235 + $0xa8] sm:$0xff]
        %v290 = vld [vmem:[%s235 + $0xb0] sm:$0xff]
        %v291 = vld [vmem:[%s235 + $0xb8] sm:$0xff]
        %v292 = vld [vmem:[%s235 + $0xc0] sm:$0xff]
        %v293 = vld [vmem:[%s235 + $0xc8] sm:$0xff]
        %v294 = vld [vmem:[%s235 + $0xd0] sm:$0xff]
        %v295 = vld [vmem:[%s235 + $0xd8] sm:$0xff]
        %v296 = vld [vmem:[%s235 + $0xe0] sm:$0xff]
        %v297 = vld [vmem:[%s235 + $0xe8] sm:$0xff]
        %v298 = vld [vmem:[%s235 + $0xf0] sm:$0xff]
        %v299 = vld [vmem:[%s235 + $0xf8] sm:$0xff]
        %v300 = vld [vmem:[%s235 + $0x100] sm:$0xff]
        %v301 = vld [vmem:[%s235 + $0x108] sm:$0xff]
        %v302 = vld [vmem:[%s235 + $0x110] sm:$0xff]
        %v303 = vld [vmem:[%s235 + $0x118] sm:$0xff]
        %v304 = vld [vmem:[%s2] sm:$0xff]
        %v305 = vld [vmem:[%s2 + $0x8] sm:$0xff]
        %v306 = vld [vmem:[%s2 + $0x10] sm:$0xff]
        %v307 = vld [vmem:[%s2 + $0x18] sm:$0xff]
        %309 = vset.pattern.permute.xlu0 0
        %310 = vperm.xlu0 %309, %v304
        %v311 = vpop.permute.xlu0 %310
        %314 = vset.pattern.permute.xlu0 0
        %315 = vperm.xlu0 %314, %v305
        %v316 = vpop.permute.xlu0 %315
        %319 = vset.pattern.permute.xlu0 0
        %320 = vperm.xlu0 %319, %v306
        %v321 = vpop.permute.xlu0 %320
        %324 = vset.pattern.permute.xlu0 0
        %325 = vperm.xlu0 %324, %v307
        %v326 = vpop.permute.xlu0 %325
        %v332 = vunpack.c.l.b16 %v264
        %v333 = vunpack.c.h.b16 %v264
        %v334 = vunpack.c.l.b16 %v265
        %v335 = vunpack.c.h.b16 %v265
        %v336 = vunpack.c.l.b16 %v266
        %v337 = vunpack.c.h.b16 %v266
        %v338 = vunpack.c.l.b16 %v267
        %v339 = vunpack.c.h.b16 %v267
        %v340 = vpack.c.b16 %v334, %v332
        %v341 = vpack.c.b16 %v335, %v333
        %v342 = vpack.c.b16 %v338, %v336
        %v343 = vpack.c.b16 %v339, %v337
        %v382 = vunpack.c.l.b16 %v268
        %v383 = vunpack.c.h.b16 %v268
        %v384 = vunpack.c.l.b16 %v269
        %v385 = vunpack.c.h.b16 %v269
        %v386 = vunpack.c.l.b16 %v270
        %v387 = vunpack.c.h.b16 %v270
        %v388 = vunpack.c.l.b16 %v271
        %v389 = vunpack.c.h.b16 %v271
        %v390 = vunpack.c.l.b16 %v272
        %v391 = vunpack.c.h.b16 %v272
        %v392 = vunpack.c.l.b16 %v273
        %v393 = vunpack.c.h.b16 %v273
        %v394 = vunpack.c.l.b16 %v274
        %v395 = vunpack.c.h.b16 %v274
        %v396 = vunpack.c.l.b16 %v275
        %v397 = vunpack.c.h.b16 %v275
        %v398 = vunpack.c.l.b16 %v276
        %v399 = vunpack.c.h.b16 %v276
        %v400 = vunpack.c.l.b16 %v277
        %v401 = vunpack.c.h.b16 %v277
        %v402 = vunpack.c.l.b16 %v278
        %v403 = vunpack.c.h.b16 %v278
        %v404 = vunpack.c.l.b16 %v279
        %v405 = vunpack.c.h.b16 %v279
        %v406 = vunpack.c.l.b16 %v280
        %v407 = vunpack.c.h.b16 %v280
        %v408 = vunpack.c.l.b16 %v281
        %v409 = vunpack.c.h.b16 %v281
        %v410 = vunpack.c.l.b16 %v282
        %v411 = vunpack.c.h.b16 %v282
        %v412 = vunpack.c.l.b16 %v283
        %v413 = vunpack.c.h.b16 %v283
        %v414 = vunpack.c.l.b16 %v284
        %v415 = vunpack.c.h.b16 %v284
        %v416 = vunpack.c.l.b16 %v285
        %v417 = vunpack.c.h.b16 %v285
        %v418 = vunpack.c.l.b16 %v286
        %v419 = vunpack.c.h.b16 %v286
        %v420 = vunpack.c.l.b16 %v287
        %v421 = vunpack.c.h.b16 %v287
        %v422 = vunpack.c.l.b16 %v288
        %v423 = vunpack.c.h.b16 %v288
        %v424 = vunpack.c.l.b16 %v289
        %v425 = vunpack.c.h.b16 %v289
        %v426 = vunpack.c.l.b16 %v290
        %v427 = vunpack.c.h.b16 %v290
        %v428 = vunpack.c.l.b16 %v291
        %v429 = vunpack.c.h.b16 %v291
        %v430 = vunpack.c.l.b16 %v292
        %v431 = vunpack.c.h.b16 %v292
        %v432 = vunpack.c.l.b16 %v293
        %v433 = vunpack.c.h.b16 %v293
        %v434 = vunpack.c.l.b16 %v294
        %v435 = vunpack.c.h.b16 %v294
        %v436 = vunpack.c.l.b16 %v295
        %v437 = vunpack.c.h.b16 %v295
        %v438 = vunpack.c.l.b16 %v296
        %v439 = vunpack.c.h.b16 %v296
        %v440 = vunpack.c.l.b16 %v297
        %v441 = vunpack.c.h.b16 %v297
        %v442 = vunpack.c.l.b16 %v298
        %v443 = vunpack.c.h.b16 %v298
        %v444 = vunpack.c.l.b16 %v299
        %v445 = vunpack.c.h.b16 %v299
        %v446 = vunpack.c.l.b16 %v300
        %v447 = vunpack.c.h.b16 %v300
        %v448 = vunpack.c.l.b16 %v301
        %v449 = vunpack.c.h.b16 %v301
        %v450 = vunpack.c.l.b16 %v302
        %v451 = vunpack.c.h.b16 %v302
        %v452 = vunpack.c.l.b16 %v303
        %v453 = vunpack.c.h.b16 %v303
        %v454 = vpack.c.b16 %v386, %v382
        %v455 = vpack.c.b16 %v387, %v383
        %v456 = vpack.c.b16 %v388, %v384
        %v457 = vpack.c.b16 %v389, %v385
        %v458 = vpack.c.b16 %v394, %v390
        %v459 = vpack.c.b16 %v395, %v391
        %v460 = vpack.c.b16 %v396, %v392
        %v461 = vpack.c.b16 %v397, %v393
        %v462 = vpack.c.b16 %v402, %v398
        %v463 = vpack.c.b16 %v403, %v399
        %v464 = vpack.c.b16 %v404, %v400
        %v465 = vpack.c.b16 %v405, %v401
        %v466 = vpack.c.b16 %v410, %v406
        %v467 = vpack.c.b16 %v411, %v407
        %v468 = vpack.c.b16 %v412, %v408
        %v469 = vpack.c.b16 %v413, %v409
        %v470 = vpack.c.b16 %v418, %v414
        %v471 = vpack.c.b16 %v419, %v415
        %v472 = vpack.c.b16 %v420, %v416
        %v473 = vpack.c.b16 %v421, %v417
        %v474 = vpack.c.b16 %v426, %v422
        %v475 = vpack.c.b16 %v427, %v423
        %v476 = vpack.c.b16 %v428, %v424
        %v477 = vpack.c.b16 %v429, %v425
        %v478 = vpack.c.b16 %v434, %v430
        %v479 = vpack.c.b16 %v435, %v431
        %v480 = vpack.c.b16 %v436, %v432
        %v481 = vpack.c.b16 %v437, %v433
        %v482 = vpack.c.b16 %v442, %v438
        %v483 = vpack.c.b16 %v443, %v439
        %v484 = vpack.c.b16 %v444, %v440
        %v485 = vpack.c.b16 %v445, %v441
        %v486 = vpack.c.b16 %v450, %v446
        %v487 = vpack.c.b16 %v451, %v447
        %v488 = vpack.c.b16 %v452, %v448
        %v489 = vpack.c.b16 %v453, %v449
        %vm526 = vcmask 130048
        %v528 = vsel %vm526, %v341, 0
        %v531 = vsel %vm526, %v343, 0
        %533 = vmatprep.subr.bf16.mxu0 %v483
        %534 = vmatpush1.bf16.msra.mxu0 %v482
        %535 = vmatprep.subr.bf16.mxu0 %v479
        %536 = vmatpush1.bf16.msra.mxu0 %v478
        %537 = vmatprep.subr.bf16.mxu0 %v475
        %538 = vmatpush1.bf16.msra.mxu0 %v474
        %539 = vmatprep.subr.bf16.mxu0 %v471
        %540 = vmatpush1.bf16.msra.mxu0 %v470
        %541 = vmatprep.subr.bf16.mxu0 %v467
        %542 = vmatpush1.bf16.msra.mxu0 %v466
        %543 = vmatprep.subr.bf16.mxu0 %v463
        %544 = vmatpush1.bf16.msra.mxu0 %v462
        %545 = vmatprep.subr.bf16.mxu0 %v459
        %546 = vmatpush1.bf16.msra.mxu0 %v458
        %547 = vmatprep.subr.bf16.mxu0 %v455
        %548 = vmatpush1.bf16.msra.mxu0 %v454
        %549 = vmatprep.subr.bf16.mxu0 0
        %550 = vmatpush2.bf16.msra.mxu0 0
        %551 = vmatprep.subr.bf16.mxu0 0
        %552 = vmatpush2.bf16.msra.mxu0 0
        %553 = vmatprep.subr.bf16.mxu0 0
        %554 = vmatpush2.bf16.msra.mxu0 0
        %555 = vmatprep.subr.bf16.mxu0 0
        %556 = vmatpush2.bf16.msra.mxu0 0
        %557 = vmatprep.subr.bf16.mxu0 0
        %558 = vmatpush2.bf16.msra.mxu0 0
        %559 = vmatprep.subr.bf16.mxu0 0
        %560 = vmatpush2.bf16.msra.mxu0 0
        %561 = vmatprep.subr.bf16.mxu0 0
        %562 = vmatpush2.bf16.msra.mxu0 0
        %563 = vmatprep.subr.bf16.mxu0 %v487
        %564 = vmatpush2.bf16.msra.mxu0 %v486
        %565 = vmatprep.mubr.bf16.mxu0 %v528
        %566 = vmatmul.mubr.bf16.gmra.mxu0 %v340
        %v567 = vpop.f32.mrf.mxu0
        %v568 = vadd.f32 %v311, %v567
        %v569 = vpop.f32.mrf.mxu0
        %v570 = vadd.f32 %v311, %v569
        %v571 = vpop.f32.mrf.mxu0
        %v572 = vadd.f32 %v316, %v571
        %v573 = vpop.f32.mrf.mxu0
        %v574 = vadd.f32 %v316, %v573
        %575 = vmatprep.mubr.bf16.mxu0 %v531
        %576 = vmatmul.mubr.bf16.gmra.mxu0 %v342
        %v577 = vpop.f32.mrf.mxu0
        %v578 = vadd.f32 %v321, %v577
        %v579 = vpop.f32.mrf.mxu0
        %v580 = vadd.f32 %v321, %v579
        %v581 = vpop.f32.mrf.mxu0
        %v582 = vadd.f32 %v326, %v581
        %v583 = vpop.f32.mrf.mxu0
        %v584 = vadd.f32 %v326, %v583
        %585 = vdwg.mxu0
        %586 = vmatprep.subr.bf16.mxu0 %v485
        %587 = vmatpush1.bf16.msra.mxu0 %v484
        %588 = vmatprep.subr.bf16.mxu0 %v481
        %589 = vmatpush1.bf16.msra.mxu0 %v480
        %590 = vmatprep.subr.bf16.mxu0 %v477
        %591 = vmatpush1.bf16.msra.mxu0 %v476
        %592 = vmatprep.subr.bf16.mxu0 %v473
        %593 = vmatpush1.bf16.msra.mxu0 %v472
        %594 = vmatprep.subr.bf16.mxu0 %v469
        %595 = vmatpush1.bf16.msra.mxu0 %v468
        %596 = vmatprep.subr.bf16.mxu0 %v465
        %597 = vmatpush1.bf16.msra.mxu0 %v464
        %598 = vmatprep.subr.bf16.mxu0 %v461
        %599 = vmatpush1.bf16.msra.mxu0 %v460
        %600 = vmatprep.subr.bf16.mxu0 %v457
        %601 = vmatpush1.bf16.msra.mxu0 %v456
        %602 = vmatprep.subr.bf16.mxu0 0
        %603 = vmatpush2.bf16.msra.mxu0 0
        %604 = vmatprep.subr.bf16.mxu0 0
        %605 = vmatpush2.bf16.msra.mxu0 0
        %606 = vmatprep.subr.bf16.mxu0 0
        %607 = vmatpush2.bf16.msra.mxu0 0
        %608 = vmatprep.subr.bf16.mxu0 0
        %609 = vmatpush2.bf16.msra.mxu0 0
        %610 = vmatprep.subr.bf16.mxu0 0
        %611 = vmatpush2.bf16.msra.mxu0 0
        %612 = vmatprep.subr.bf16.mxu0 0
        %613 = vmatpush2.bf16.msra.mxu0 0
        %614 = vmatprep.subr.bf16.mxu0 0
        %615 = vmatpush2.bf16.msra.mxu0 0
        %616 = vmatprep.subr.bf16.mxu0 %v489
        %617 = vmatpush2.bf16.msra.mxu0 %v488
        %618 = vmatprep.mubr.bf16.mxu0 %v528
        %619 = vmatmul.mubr.bf16.gmra.mxu0 %v340
        %v620 = vpop.f32.mrf.mxu0
        %v621 = vadd.f32 %v311, %v620
        %v622 = vpop.f32.mrf.mxu0
        %v623 = vadd.f32 %v311, %v622
        %v624 = vpop.f32.mrf.mxu0
        %v625 = vadd.f32 %v316, %v624
        %v626 = vpop.f32.mrf.mxu0
        %v627 = vadd.f32 %v316, %v626
        %628 = vmatprep.mubr.bf16.mxu0 %v531
        %629 = vmatmul.mubr.bf16.gmra.mxu0 %v342
        %v630 = vpop.f32.mrf.mxu0
        %v631 = vadd.f32 %v321, %v630
        %v632 = vpop.f32.mrf.mxu0
        %v633 = vadd.f32 %v321, %v632
        %v634 = vpop.f32.mrf.mxu0
        %v635 = vadd.f32 %v326, %v634
        %v636 = vpop.f32.mrf.mxu0
        %v637 = vadd.f32 %v326, %v636
        %638 = vdwg.mxu0
        %vm639 = vcmp.gt.f32.partialorder %v568, 0.0
        %vm640 = vcmp.gt.f32.partialorder %v570, 0.0
        %vm641 = vcmp.gt.f32.partialorder %v621, 0.0
        %vm642 = vcmp.gt.f32.partialorder %v623, 0.0
        %vm643 = vcmp.gt.f32.partialorder %v572, 0.0
        %vm644 = vcmp.gt.f32.partialorder %v574, 0.0
        %vm645 = vcmp.gt.f32.partialorder %v625, 0.0
        %vm646 = vcmp.gt.f32.partialorder %v627, 0.0
        %vm647 = vcmp.gt.f32.partialorder %v578, 0.0
        %vm648 = vcmp.gt.f32.partialorder %v580, 0.0
        %vm649 = vcmp.gt.f32.partialorder %v631, 0.0
        %vm650 = vcmp.gt.f32.partialorder %v633, 0.0
        %vm651 = vcmp.gt.f32.partialorder %v582, 0.0
        %vm652 = vcmp.gt.f32.partialorder %v584, 0.0
        %vm653 = vcmp.gt.f32.partialorder %v635, 0.0
        %vm654 = vcmp.gt.f32.partialorder %v637, 0.0
        %v655 = vmul.f32 %v568, 0.01
        %v656 = vmul.f32 %v570, 0.01
        %v657 = vmul.f32 %v621, 0.01
        %v658 = vmul.f32 %v623, 0.01
        %v659 = vmul.f32 %v572, 0.01
        %v660 = vmul.f32 %v574, 0.01
        %v661 = vmul.f32 %v625, 0.01
        %v662 = vmul.f32 %v627, 0.01
        %v663 = vmul.f32 %v578, 0.01
        %v664 = vmul.f32 %v580, 0.01
        %v665 = vmul.f32 %v631, 0.01
        %v666 = vmul.f32 %v633, 0.01
        %v667 = vmul.f32 %v582, 0.01
        %v668 = vmul.f32 %v584, 0.01
        %v669 = vmul.f32 %v635, 0.01
        %v670 = vmul.f32 %v637, 0.01
        %v671 = vsel %vm639, %v568, %v655
        %v672 = vsel %vm640, %v570, %v656
        %v673 = vsel %vm641, %v621, %v657
        %v674 = vsel %vm642, %v623, %v658
        %v675 = vsel %vm643, %v572, %v659
        %v676 = vsel %vm644, %v574, %v660
        %v677 = vsel %vm645, %v625, %v661
        %v678 = vsel %vm646, %v627, %v662
        %v679 = vsel %vm647, %v578, %v663
        %v680 = vsel %vm648, %v580, %v664
        %v681 = vsel %vm649, %v631, %v665
        %v682 = vsel %vm650, %v633, %v666
        %v683 = vsel %vm651, %v582, %v667
        %v684 = vsel %vm652, %v584, %v668
        %v685 = vsel %vm653, %v635, %v669
        %v686 = vsel %vm654, %v637, %v670
        %v687 = vmax.f32 %v671, %v672
        %v688 = vmax.f32 %v675, %v676
        %v689 = vmax.f32 %v679, %v680
        %v690 = vmax.f32 %v683, %v684
        %v691 = vmax.f32 %v673, %v674
        %v692 = vmax.f32 %v677, %v678
        %v693 = vmax.f32 %v681, %v682
        %v694 = vmax.f32 %v685, %v686
        %v695 = vmax.f32 %v687, %v691
        %v696 = vmax.f32 %v688, %v692
        %v697 = vmax.f32 %v689, %v693
        %v698 = vmax.f32 %v690, %v694
        %699 = vst [vmem:[%s261] sm:$0xff] %v695
        %700 = vst [vmem:[%s261 + $0x8] sm:$0xff] %v696
        %701 = vst [vmem:[%s261 + $0x10] sm:$0xff] %v697
        %702 = vst [vmem:[%s261 + $0x18] sm:$0xff] %v698
        %s703 = smul.u32 4, %s14
        %p704 = scmp.lt.s32.totalorder %s703, 7
        %s705 = scalar_select %p704, %s703, 7
        %s706 = smul.addr %s705, 8
        %s707 = scalar_lea.vmem %s3, %s706
        // Predicated region
        $region56: #{picture_net_forward.6} parent=50 // pred_check
          %p708 = pneg %p100
        $region57: #{picture_net_forward.6} parent=50 // pred_check_branch
          %710 = sbr.rel (%p708) target = $region59
        $region58: #{picture_net_forward.6} parent=50 // pred_region
          %s711 = smul.u32 4, %s14
        $region59: #{picture_net_forward.6} parent=50 // pred_fallthru
          _
      $region51: #{picture_net_forward.6} parent=5 // pred_fallthru
        _
      %p712 = scmp.le.s32.totalorder 2, %s9
      // Predicated region
      $region60: #{picture_net_forward.6} parent=5 // pred_check
        %p713 = pneg %p712
      $region61: #{picture_net_forward.6} parent=5 // pred_check_branch
        %715 = sbr.rel (%p713) target = $region63
      $region62: #{picture_net_forward.6} parent=5 // pred_region
        %s716 = ssub.s32 %s9, 2
        // Predicated region
        $region64: #{picture_net_forward.6} parent=62 // pred_check
          %p717 = pneg %p106
        $region65: #{picture_net_forward.6} parent=62 // pred_check_branch
          %719 = sbr.rel (%p717) target = $region67
        $region66: #{picture_net_forward.6} parent=62 // pred_region
          %s720 = smul.u32 4, %s15
          %p721 = scmp.lt.s32.totalorder %s720, 7
          %s722 = scalar_select %p721, %s720, 7
          %s723 = smul.addr %s722, 8
          %s724 = scalar_lea.vmem %s3, %s723
        $region67: #{picture_net_forward.6} parent=62 // pred_fallthru
          _
      $region63: #{picture_net_forward.6} parent=5 // pred_fallthru
        _
    $region6: #{picture_net_forward.6} parent=1 // loop_footer
      %s13 = sadd.s32 1, %s9
    $region7: #{picture_net_forward.6} parent=1 // loop_footer_branch
      %8 = sbr.rel target = $region3
    $region8: #{picture_net_forward.6} parent=1 // loop_exit
      _

// kernel: picture_net_forward.7
$region0: #{picture_net_forward.7}
  #allocation0 [shape = 'u32[]', space=smem, size = 0x4, offset = 0x4, fixed_abs, tag = 'smem constant byte address 0x4 - core index']
  #allocation1 [shape = 'u32[144,128]{1,0:T(1,128)}', space=vmem, size = 0x12000, scoped, tag = 'internal scratch']
  %s0 = inlined_call_operand.vmem [shape: bf16[2,2880], index: 0, kind: input, shape index: {}]
  %s1 = inlined_call_operand.vmem [shape: bf16[2880,64], index: 1, kind: input, shape index: {}]
  %s2 = inlined_call_operand.vmem [shape: f32[1,64], index: 2, kind: input, shape index: {}]
  %s3 = inlined_call_operand.vmem [shape: bf16[64,32], index: 3, kind: input, shape index: {}]
  %s4 = inlined_call_operand.vmem [shape: f32[1,32], index: 4, kind: input, shape index: {}]
  %s5 = inlined_call_operand.vmem [shape: bf16[32,10], index: 5, kind: input, shape index: {}]
  %s6 = inlined_call_operand.vmem [shape: f32[1,10], index: 6, kind: input, shape index: {}]
  %s7 = inlined_call_operand.hbm [shape: f32[2,10], index: 7, kind: output, shape index: {}]
  %s8 = sld [smem:[#allocation0]]
  $region38: #{picture_net_forward.7} parent=0
    _
  %s10 = ssub.s32 1, %s8
  %s11 = scalar_select 0, %s10, %s8
  $region1: #{picture_net_forward.7} parent=0
    #allocation2 [shape = 'u8[1024]{0}', space=vmem, size = 0x400, scoped, tag = 'output window, operand 0, single buffered']
    #allocation3 [shape = 's32[1]{0}', space=sflag, size = 0x4, scoped, tag = 'scoped memory for picture_net_forward.7']
    %12 = vsyncpa [#allocation3], 0
    // Predicated region
    $region2: #{picture_net_forward.7} parent=1 // pred_check
      _
    $region3: #{picture_net_forward.7} parent=1 // pred_check_branch
      %14 = sbr.rel (0) target = $region5
    $region4: #{picture_net_forward.7} parent=1 // pred_region
      _
    $region5: #{picture_net_forward.7} parent=1 // pred_fallthru
      _
    // Predicated region
    $region6: #{picture_net_forward.7} parent=1 // pred_check
      _
    $region7: #{picture_net_forward.7} parent=1 // pred_check_branch
      %16 = sbr.rel (0) target = $region9
    $region8: #{picture_net_forward.7} parent=1 // pred_region
      _
    $region9: #{picture_net_forward.7} parent=1 // pred_fallthru
      _
    // Predicated region
    $region10: #{picture_net_forward.7} parent=1 // pred_check
      _
    $region11: #{picture_net_forward.7} parent=1 // pred_check_branch
      %18 = sbr.rel (0) target = $region13
    $region12: #{picture_net_forward.7} parent=1 // pred_region
      _
    $region13: #{picture_net_forward.7} parent=1 // pred_fallthru
      _
    // Predicated region
    $region14: #{picture_net_forward.7} parent=1 // pred_check
      _
    $region15: #{picture_net_forward.7} parent=1 // pred_check_branch
      %20 = sbr.rel (0) target = $region17
    $region16: #{picture_net_forward.7} parent=1 // pred_region
      _
    $region17: #{picture_net_forward.7} parent=1 // pred_fallthru
      _
    // Predicated region
    $region18: #{picture_net_forward.7} parent=1 // pred_check
      _
    $region19: #{picture_net_forward.7} parent=1 // pred_check_branch
      %22 = sbr.rel (0) target = $region21
    $region20: #{picture_net_forward.7} parent=1 // pred_region
      _
    $region21: #{picture_net_forward.7} parent=1 // pred_fallthru
      _
    // Predicated region
    $region22: #{picture_net_forward.7} parent=1 // pred_check
      _
    $region23: #{picture_net_forward.7} parent=1 // pred_check_branch
      %24 = sbr.rel (0) target = $region25
    $region24: #{picture_net_forward.7} parent=1 // pred_region
      _
    $region25: #{picture_net_forward.7} parent=1 // pred_fallthru
      _
    // Predicated region
    $region26: #{picture_net_forward.7} parent=1 // pred_check
      _
    $region27: #{picture_net_forward.7} parent=1 // pred_check_branch
      %26 = sbr.rel (0) target = $region29
    $region28: #{picture_net_forward.7} parent=1 // pred_region
      _
    $region29: #{picture_net_forward.7} parent=1 // pred_fallthru
      _
    %v28 = vld [vmem:[%s0] sm:$0xff]
    %v29 = vld [vmem:[%s0 + $0x8] sm:$0xff]
    %v30 = vld [vmem:[%s0 + $0x10] sm:$0x7f]
    %v31 = vld [vmem:[%s1] sm:$0xf]
    %v32 = vld [vmem:[%s1 + $0x4] sm:$0xf]
    %v33 = vld [vmem:[%s1 + $0x8] sm:$0xf]
    %v34 = vld [vmem:[%s1 + $0xc] sm:$0xf]
    %v35 = vld [vmem:[%s1 + $0x10] sm:$0xf]
    %v36 = vld [vmem:[%s1 + $0x14] sm:$0xf]
    %v37 = vld [vmem:[%s1 + $0x18] sm:$0xf]
    %v38 = vld [vmem:[%s1 + $0x1c] sm:$0xf]
    %v39 = vld [vmem:[%s1 + $0x20] sm:$0xf]
    %v40 = vld [vmem:[%s1 + $0x24] sm:$0xf]
    %v41 = vld [vmem:[%s1 + $0x28] sm:$0xf]
    %v42 = vld [vmem:[%s1 + $0x2c] sm:$0xf]
    %v43 = vld [vmem:[%s1 + $0x30] sm:$0xf]
    %v44 = vld [vmem:[%s1 + $0x34] sm:$0xf]
    %v45 = vld [vmem:[%s1 + $0x38] sm:$0xf]
    %v46 = vld [vmem:[%s1 + $0x3c] sm:$0xf]
    %v47 = vld [vmem:[%s1 + $0x40] sm:$0xf]
    %v48 = vld [vmem:[%s1 + $0x44] sm:$0xf]
    %v49 = vld [vmem:[%s1 + $0x48] sm:$0xf]
    %v50 = vld [vmem:[%s1 + $0x4c] sm:$0xf]
    %v51 = vld [vmem:[%s1 + $0x50] sm:$0xf]
    %v52 = vld [vmem:[%s1 + $0x54] sm:$0xf]
    %v53 = vld [vmem:[%s1 + $0x58] sm:$0xf]
    %v54 = vld [vmem:[%s1 + $0x5c] sm:$0xf]
    %v55 = vld [vmem:[%s1 + $0x60] sm:$0xf]
    %v56 = vld [vmem:[%s1 + $0x64] sm:$0xf]
    %v57 = vld [vmem:[%s1 + $0x68] sm:$0xf]
    %v58 = vld [vmem:[%s1 + $0x6c] sm:$0xf]
    %v59 = vld [vmem:[%s1 + $0x70] sm:$0xf]
    %v60 = vld [vmem:[%s1 + $0x74] sm:$0xf]
    %v61 = vld [vmem:[%s1 + $0x78] sm:$0xf]
    %v62 = vld [vmem:[%s1 + $0x7c] sm:$0xf]
    %v63 = vld [vmem:[%s1 + $0x80] sm:$0xf]
    %v64 = vld [vmem:[%s1 + $0x84] sm:$0xf]
    %v65 = vld [vmem:[%s1 + $0x88] sm:$0xf]
    %v66 = vld [vmem:[%s1 + $0x8c] sm:$0xf]
    %v67 = vld [vmem:[%s1 + $0x90] sm:$0xf]
    %v68 = vld [vmem:[%s1 + $0x94] sm:$0xf]
    %v69 = vld [vmem:[%s1 + $0x98] sm:$0xf]
    %v70 = vld [vmem:[%s1 + $0x9c] sm:$0xf]
    %v71 = vld [vmem:[%s1 + $0xa0] sm:$0xf]
    %v72 = vld [vmem:[%s1 + $0xa4] sm:$0xf]
    %v73 = vld [vmem:[%s1 + $0xa8] sm:$0xf]
    %v74 = vld [vmem:[%s1 + $0xac] sm:$0xf]
    %v75 = vld [vmem:[%s1 + $0xb0] sm:$0xf]
    %v76 = vld [vmem:[%s1 + $0xb4] sm:$0xf]
    %v77 = vld [vmem:[%s1 + $0xb8] sm:$0xf]
    %v78 = vld [vmem:[%s1 + $0xbc] sm:$0xf]
    %v79 = vld [vmem:[%s1 + $0xc0] sm:$0xf]
    %v80 = vld [vmem:[%s1 + $0xc4] sm:$0xf]
    %v81 = vld [vmem:[%s1 + $0xc8] sm:$0xf]
    %v82 = vld [vmem:[%s1 + $0xcc] sm:$0xf]
    %v83 = vld [vmem:[%s1 + $0xd0] sm:$0xf]
    %v84 = vld [vmem:[%s1 + $0xd4] sm:$0xf]
    %v85 = vld [vmem:[%s1 + $0xd8] sm:$0xf]
    %v86 = vld [vmem:[%s1 + $0xdc] sm:$0xf]
    %v87 = vld [vmem:[%s1 + $0xe0] sm:$0xf]
    %v88 = vld [vmem:[%s1 + $0xe4] sm:$0xf]
    %v89 = vld [vmem:[%s1 + $0xe8] sm:$0xf]
    %v90 = vld [vmem:[%s1 + $0xec] sm:$0xf]
    %v91 = vld [vmem:[%s1 + $0xf0] sm:$0xf]
    %v92 = vld [vmem:[%s1 + $0xf4] sm:$0xf]
    %v93 = vld [vmem:[%s1 + $0xf8] sm:$0xf]
    %v94 = vld [vmem:[%s1 + $0xfc] sm:$0xf]
    %v95 = vld [vmem:[%s1 + $0x100] sm:$0xf]
    %v96 = vld [vmem:[%s1 + $0x104] sm:$0xf]
    %v97 = vld [vmem:[%s1 + $0x108] sm:$0xf]
    %v98 = vld [vmem:[%s1 + $0x10c] sm:$0xf]
    %v99 = vld [vmem:[%s1 + $0x110] sm:$0xf]
    %v100 = vld [vmem:[%s1 + $0x114] sm:$0xf]
    %v101 = vld [vmem:[%s1 + $0x118] sm:$0xf]
    %v102 = vld [vmem:[%s1 + $0x11c] sm:$0xf]
    %v103 = vld [vmem:[%s1 + $0x120] sm:$0xf]
    %v104 = vld [vmem:[%s1 + $0x124] sm:$0xf]
    %v105 = vld [vmem:[%s1 + $0x128] sm:$0xf]
    %v106 = vld [vmem:[%s1 + $0x12c] sm:$0xf]
    %v107 = vld [vmem:[%s1 + $0x130] sm:$0xf]
    %v108 = vld [vmem:[%s1 + $0x134] sm:$0xf]
    %v109 = vld [vmem:[%s1 + $0x138] sm:$0xf]
    %v110 = vld [vmem:[%s1 + $0x13c] sm:$0xf]
    %v111 = vld [vmem:[%s1 + $0x140] sm:$0xf]
    %v112 = vld [vmem:[%s1 + $0x144] sm:$0xf]
    %v113 = vld [vmem:[%s1 + $0x148] sm:$0xf]
    %v114 = vld [vmem:[%s1 + $0x14c] sm:$0xf]
    %v115 = vld [vmem:[%s1 + $0x150] sm:$0xf]
    %v116 = vld [vmem:[%s1 + $0x154] sm:$0xf]
    %v117 = vld [vmem:[%s1 + $0x158] sm:$0xf]
    %v118 = vld [vmem:[%s1 + $0x15c] sm:$0xf]
    %v119 = vld [vmem:[%s1 + $0x160] sm:$0xf]
    %v120 = vld [vmem:[%s1 + $0x164] sm:$0xf]
    %v121 = vld [vmem:[%s1 + $0x168] sm:$0xf]
    %v122 = vld [vmem:[%s1 + $0x16c] sm:$0xf]
    %v123 = vld [vmem:[%s1 + $0x170] sm:$0xf]
    %v124 = vld [vmem:[%s1 + $0x174] sm:$0xf]
    %v125 = vld [vmem:[%s1 + $0x178] sm:$0xf]
    %v126 = vld [vmem:[%s1 + $0x17c] sm:$0xf]
    %v127 = vld [vmem:[%s1 + $0x180] sm:$0xf]
    %v128 = vld [vmem:[%s1 + $0x184] sm:$0xf]
    %v129 = vld [vmem:[%s1 + $0x188] sm:$0xf]
    %v130 = vld [vmem:[%s1 + $0x18c] sm:$0xf]
    %v131 = vld [vmem:[%s1 + $0x190] sm:$0xf]
    %v132 = vld [vmem:[%s1 + $0x194] sm:$0xf]
    %v133 = vld [vmem:[%s1 + $0x198] sm:$0xf]
    %v134 = vld [vmem:[%s1 + $0x19c] sm:$0xf]
    %v135 = vld [vmem:[%s1 + $0x1a0] sm:$0xf]
    %v136 = vld [vmem:[%s1 + $0x1a4] sm:$0xf]
    %v137 = vld [vmem:[%s1 + $0x1a8] sm:$0xf]
    %v138 = vld [vmem:[%s1 + $0x1ac] sm:$0xf]
    %v139 = vld [vmem:[%s1 + $0x1b0] sm:$0xf]
    %v140 = vld [vmem:[%s1 + $0x1b4] sm:$0xf]
    %v141 = vld [vmem:[%s1 + $0x1b8] sm:$0xf]
    %v142 = vld [vmem:[%s1 + $0x1bc] sm:$0xf]
    %v143 = vld [vmem:[%s1 + $0x1c0] sm:$0xf]
    %v144 = vld [vmem:[%s1 + $0x1c4] sm:$0xf]
    %v145 = vld [vmem:[%s1 + $0x1c8] sm:$0xf]
    %v146 = vld [vmem:[%s1 + $0x1cc] sm:$0xf]
    %v147 = vld [vmem:[%s1 + $0x1d0] sm:$0xf]
    %v148 = vld [vmem:[%s1 + $0x1d4] sm:$0xf]
    %v149 = vld [vmem:[%s1 + $0x1d8] sm:$0xf]
    %v150 = vld [vmem:[%s1 + $0x1dc] sm:$0xf]
    %v151 = vld [vmem:[%s1 + $0x1e0] sm:$0xf]
    %v152 = vld [vmem:[%s1 + $0x1e4] sm:$0xf]
    %v153 = vld [vmem:[%s1 + $0x1e8] sm:$0xf]
    %v154 = vld [vmem:[%s1 + $0x1ec] sm:$0xf]
    %v155 = vld [vmem:[%s1 + $0x1f0] sm:$0xf]
    %v156 = vld [vmem:[%s1 + $0x1f4] sm:$0xf]
    %v157 = vld [vmem:[%s1 + $0x1f8] sm:$0xf]
    %v158 = vld [vmem:[%s1 + $0x1fc] sm:$0xf]
    %v159 = vld [vmem:[%s1 + $0x200] sm:$0xf]
    %v160 = vld [vmem:[%s1 + $0x204] sm:$0xf]
    %v161 = vld [vmem:[%s1 + $0x208] sm:$0xf]
    %v162 = vld [vmem:[%s1 + $0x20c] sm:$0xf]
    %v163 = vld [vmem:[%s1 + $0x210] sm:$0xf]
    %v164 = vld [vmem:[%s1 + $0x214] sm:$0xf]
    %v165 = vld [vmem:[%s1 + $0x218] sm:$0xf]
    %v166 = vld [vmem:[%s1 + $0x21c] sm:$0xf]
    %v167 = vld [vmem:[%s1 + $0x220] sm:$0xf]
    %v168 = vld [vmem:[%s1 + $0x224] sm:$0xf]
    %v169 = vld [vmem:[%s1 + $0x228] sm:$0xf]
    %v170 = vld [vmem:[%s1 + $0x22c] sm:$0xf]
    %v171 = vld [vmem:[%s1 + $0x230] sm:$0xf]
    %v172 = vld [vmem:[%s1 + $0x234] sm:$0xf]
    %v173 = vld [vmem:[%s1 + $0x238] sm:$0xf]
    %v174 = vld [vmem:[%s1 + $0x23c] sm:$0xf]
    %v175 = vld [vmem:[%s1 + $0x240] sm:$0xf]
    %v176 = vld [vmem:[%s1 + $0x244] sm:$0xf]
    %v177 = vld [vmem:[%s1 + $0x248] sm:$0xf]
    %v178 = vld [vmem:[%s1 + $0x24c] sm:$0xf]
    %v179 = vld [vmem:[%s1 + $0x250] sm:$0xf]
    %v180 = vld [vmem:[%s1 + $0x254] sm:$0xf]
    %v181 = vld [vmem:[%s1 + $0x258] sm:$0xf]
    %v182 = vld [vmem:[%s1 + $0x25c] sm:$0xf]
    %v183 = vld [vmem:[%s1 + $0x260] sm:$0xf]
    %v184 = vld [vmem:[%s1 + $0x264] sm:$0xf]
    %v185 = vld [vmem:[%s1 + $0x268] sm:$0xf]
    %v186 = vld [vmem:[%s1 + $0x26c] sm:$0xf]
    %v187 = vld [vmem:[%s1 + $0x270] sm:$0xf]
    %v188 = vld [vmem:[%s1 + $0x274] sm:$0xf]
    %v189 = vld [vmem:[%s1 + $0x278] sm:$0xf]
    %v190 = vld [vmem:[%s1 + $0x27c] sm:$0xf]
    %v191 = vld [vmem:[%s1 + $0x280] sm:$0xf]
    %v192 = vld [vmem:[%s1 + $0x284] sm:$0xf]
    %v193 = vld [vmem:[%s1 + $0x288] sm:$0xf]
    %v194 = vld [vmem:[%s1 + $0x28c] sm:$0xf]
    %v195 = vld [vmem:[%s1 + $0x290] sm:$0xf]
    %v196 = vld [vmem:[%s1 + $0x294] sm:$0xf]
    %v197 = vld [vmem:[%s1 + $0x298] sm:$0xf]
    %v198 = vld [vmem:[%s1 + $0x29c] sm:$0xf]
    %v199 = vld [vmem:[%s1 + $0x2a0] sm:$0xf]
    %v200 = vld [vmem:[%s1 + $0x2a4] sm:$0xf]
    %v201 = vld [vmem:[%s1 + $0x2a8] sm:$0xf]
    %v202 = vld [vmem:[%s1 + $0x2ac] sm:$0xf]
    %v203 = vld [vmem:[%s1 + $0x2b0] sm:$0xf]
    %v204 = vld [vmem:[%s1 + $0x2b4] sm:$0xf]
    %v205 = vld [vmem:[%s1 + $0x2b8] sm:$0xf]
    %v206 = vld [vmem:[%s1 + $0x2bc] sm:$0xf]
    %v207 = vld [vmem:[%s1 + $0x2c0] sm:$0xf]
    %v208 = vld [vmem:[%s1 + $0x2c4] sm:$0xf]
    %v209 = vld [vmem:[%s1 + $0x2c8] sm:$0xf]
    %v210 = vld [vmem:[%s1 + $0x2cc] sm:$0xf]
    %v211 = vld [vmem:[%s1 + $0x2d0] sm:$0xf]
    %v212 = vld [vmem:[%s1 + $0x2d4] sm:$0xf]
    %v213 = vld [vmem:[%s1 + $0x2d8] sm:$0xf]
    %v214 = vld [vmem:[%s1 + $0x2dc] sm:$0xf]
    %v215 = vld [vmem:[%s1 + $0x2e0] sm:$0xf]
    %v216 = vld [vmem:[%s1 + $0x2e4] sm:$0xf]
    %v217 = vld [vmem:[%s1 + $0x2e8] sm:$0xf]
    %v218 = vld [vmem:[%s1 + $0x2ec] sm:$0xf]
    %v219 = vld [vmem:[%s1 + $0x2f0] sm:$0xf]
    %v220 = vld [vmem:[%s1 + $0x2f4] sm:$0xf]
    %v221 = vld [vmem:[%s1 + $0x2f8] sm:$0xf]
    %v222 = vld [vmem:[%s1 + $0x2fc] sm:$0xf]
    %v223 = vld [vmem:[%s1 + $0x300] sm:$0xf]
    %v224 = vld [vmem:[%s1 + $0x304] sm:$0xf]
    %v225 = vld [vmem:[%s1 + $0x308] sm:$0xf]
    %v226 = vld [vmem:[%s1 + $0x30c] sm:$0xf]
    %v227 = vld [vmem:[%s1 + $0x310] sm:$0xf]
    %v228 = vld [vmem:[%s1 + $0x314] sm:$0xf]
    %v229 = vld [vmem:[%s1 + $0x318] sm:$0xf]
    %v230 = vld [vmem:[%s1 + $0x31c] sm:$0xf]
    %v231 = vld [vmem:[%s1 + $0x320] sm:$0xf]
    %v232 = vld [vmem:[%s1 + $0x324] sm:$0xf]
    %v233 = vld [vmem:[%s1 + $0x328] sm:$0xf]
    %v234 = vld [vmem:[%s1 + $0x32c] sm:$0xf]
    %v235 = vld [vmem:[%s1 + $0x330] sm:$0xf]
    %v236 = vld [vmem:[%s1 + $0x334] sm:$0xf]
    %v237 = vld [vmem:[%s1 + $0x338] sm:$0xf]
    %v238 = vld [vmem:[%s1 + $0x33c] sm:$0xf]
    %v239 = vld [vmem:[%s1 + $0x340] sm:$0xf]
    %v240 = vld [vmem:[%s1 + $0x344] sm:$0xf]
    %v241 = vld [vmem:[%s1 + $0x348] sm:$0xf]
    %v242 = vld [vmem:[%s1 + $0x34c] sm:$0xf]
    %v243 = vld [vmem:[%s1 + $0x350] sm:$0xf]
    %v244 = vld [vmem:[%s1 + $0x354] sm:$0xf]
    %v245 = vld [vmem:[%s1 + $0x358] sm:$0xf]
    %v246 = vld [vmem:[%s1 + $0x35c] sm:$0xf]
    %v247 = vld [vmem:[%s1 + $0x360] sm:$0xf]
    %v248 = vld [vmem:[%s1 + $0x364] sm:$0xf]
    %v249 = vld [vmem:[%s1 + $0x368] sm:$0xf]
    %v250 = vld [vmem:[%s1 + $0x36c] sm:$0xf]
    %v251 = vld [vmem:[%s1 + $0x370] sm:$0xf]
    %v252 = vld [vmem:[%s1 + $0x374] sm:$0xf]
    %v253 = vld [vmem:[%s1 + $0x378] sm:$0xf]
    %v254 = vld [vmem:[%s1 + $0x37c] sm:$0xf]
    %v255 = vld [vmem:[%s1 + $0x380] sm:$0xf]
    %v256 = vld [vmem:[%s1 + $0x384] sm:$0xf]
    %v257 = vld [vmem:[%s1 + $0x388] sm:$0xf]
    %v258 = vld [vmem:[%s1 + $0x38c] sm:$0xf]
    %v259 = vld [vmem:[%s1 + $0x390] sm:$0xf]
    %v260 = vld [vmem:[%s1 + $0x394] sm:$0xf]
    %v261 = vld [vmem:[%s1 + $0x398] sm:$0xf]
    %v262 = vld [vmem:[%s1 + $0x39c] sm:$0xf]
    %v263 = vld [vmem:[%s1 + $0x3a0] sm:$0xf]
    %v264 = vld [vmem:[%s1 + $0x3a4] sm:$0xf]
    %v265 = vld [vmem:[%s1 + $0x3a8] sm:$0xf]
    %v266 = vld [vmem:[%s1 + $0x3ac] sm:$0xf]
    %v267 = vld [vmem:[%s1 + $0x3b0] sm:$0xf]
    %v268 = vld [vmem:[%s1 + $0x3b4] sm:$0xf]
    %v269 = vld [vmem:[%s1 + $0x3b8] sm:$0xf]
    %v270 = vld [vmem:[%s1 + $0x3bc] sm:$0xf]
    %v271 = vld [vmem:[%s1 + $0x3c0] sm:$0xf]
    %v272 = vld [vmem:[%s1 + $0x3c4] sm:$0xf]
    %v273 = vld [vmem:[%s1 + $0x3c8] sm:$0xf]
    %v274 = vld [vmem:[%s1 + $0x3cc] sm:$0xf]
    %v275 = vld [vmem:[%s1 + $0x3d0] sm:$0xf]
    %v276 = vld [vmem:[%s1 + $0x3d4] sm:$0xf]
    %v277 = vld [vmem:[%s1 + $0x3d8] sm:$0xf]
    %v278 = vld [vmem:[%s1 + $0x3dc] sm:$0xf]
    %v279 = vld [vmem:[%s1 + $0x3e0] sm:$0xf]
    %v280 = vld [vmem:[%s1 + $0x3e4] sm:$0xf]
    %v281 = vld [vmem:[%s1 + $0x3e8] sm:$0xf]
    %v282 = vld [vmem:[%s1 + $0x3ec] sm:$0xf]
    %v283 = vld [vmem:[%s1 + $0x3f0] sm:$0xf]
    %v284 = vld [vmem:[%s1 + $0x3f4] sm:$0xf]
    %v285 = vld [vmem:[%s1 + $0x3f8] sm:$0xf]
    %v286 = vld [vmem:[%s1 + $0x3fc] sm:$0xf]
    %v287 = vld [vmem:[%s1 + $0x400] sm:$0xf]
    %v288 = vld [vmem:[%s1 + $0x404] sm:$0xf]
    %v289 = vld [vmem:[%s1 + $0x408] sm:$0xf]
    %v290 = vld [vmem:[%s1 + $0x40c] sm:$0xf]
    %v291 = vld [vmem:[%s1 + $0x410] sm:$0xf]
    %v292 = vld [vmem:[%s1 + $0x414] sm:$0xf]
    %v293 = vld [vmem:[%s1 + $0x418] sm:$0xf]
    %v294 = vld [vmem:[%s1 + $0x41c] sm:$0xf]
    %v295 = vld [vmem:[%s1 + $0x420] sm:$0xf]
    %v296 = vld [vmem:[%s1 + $0x424] sm:$0xf]
    %v297 = vld [vmem:[%s1 + $0x428] sm:$0xf]
    %v298 = vld [vmem:[%s1 + $0x42c] sm:$0xf]
    %v299 = vld [vmem:[%s1 + $0x430] sm:$0xf]
    %v300 = vld [vmem:[%s1 + $0x434] sm:$0xf]
    %v301 = vld [vmem:[%s1 + $0x438] sm:$0xf]
    %v302 = vld [vmem:[%s1 + $0x43c] sm:$0xf]
    %v303 = vld [vmem:[%s1 + $0x440] sm:$0xf]
    %v304 = vld [vmem:[%s1 + $0x444] sm:$0xf]
    %v305 = vld [vmem:[%s1 + $0x448] sm:$0xf]
    %v306 = vld [vmem:[%s1 + $0x44c] sm:$0xf]
    %v307 = vld [vmem:[%s1 + $0x450] sm:$0xf]
    %v308 = vld [vmem:[%s1 + $0x454] sm:$0xf]
    %v309 = vld [vmem:[%s1 + $0x458] sm:$0xf]
    %v310 = vld [vmem:[%s1 + $0x45c] sm:$0xf]
    %v311 = vld [vmem:[%s1 + $0x460] sm:$0xf]
    %v312 = vld [vmem:[%s1 + $0x464] sm:$0xf]
    %v313 = vld [vmem:[%s1 + $0x468] sm:$0xf]
    %v314 = vld [vmem:[%s1 + $0x46c] sm:$0xf]
    %v315 = vld [vmem:[%s1 + $0x470] sm:$0xf]
    %v316 = vld [vmem:[%s1 + $0x474] sm:$0xf]
    %v317 = vld [vmem:[%s1 + $0x478] sm:$0xf]
    %v318 = vld [vmem:[%s1 + $0x47c] sm:$0xf]
    %v319 = vld [vmem:[%s1 + $0x480] sm:$0xf]
    %v320 = vld [vmem:[%s1 + $0x484] sm:$0xf]
    %v321 = vld [vmem:[%s1 + $0x488] sm:$0xf]
    %v322 = vld [vmem:[%s1 + $0x48c] sm:$0xf]
    %v323 = vld [vmem:[%s1 + $0x490] sm:$0xf]
    %v324 = vld [vmem:[%s1 + $0x494] sm:$0xf]
    %v325 = vld [vmem:[%s1 + $0x498] sm:$0xf]
    %v326 = vld [vmem:[%s1 + $0x49c] sm:$0xf]
    %v327 = vld [vmem:[%s1 + $0x4a0] sm:$0xf]
    %v328 = vld [vmem:[%s1 + $0x4a4] sm:$0xf]
    %v329 = vld [vmem:[%s1 + $0x4a8] sm:$0xf]
    %v330 = vld [vmem:[%s1 + $0x4ac] sm:$0xf]
    %v331 = vld [vmem:[%s1 + $0x4b0] sm:$0xf]
    %v332 = vld [vmem:[%s1 + $0x4b4] sm:$0xf]
    %v333 = vld [vmem:[%s1 + $0x4b8] sm:$0xf]
    %v334 = vld [vmem:[%s1 + $0x4bc] sm:$0xf]
    %v335 = vld [vmem:[%s1 + $0x4c0] sm:$0xf]
    %v336 = vld [vmem:[%s1 + $0x4c4] sm:$0xf]
    %v337 = vld [vmem:[%s1 + $0x4c8] sm:$0xf]
    %v338 = vld [vmem:[%s1 + $0x4cc] sm:$0xf]
    %v339 = vld [vmem:[%s1 + $0x4d0] sm:$0xf]
    %v340 = vld [vmem:[%s1 + $0x4d4] sm:$0xf]
    %v341 = vld [vmem:[%s1 + $0x4d8] sm:$0xf]
    %v342 = vld [vmem:[%s1 + $0x4dc] sm:$0xf]
    %v343 = vld [vmem:[%s1 + $0x4e0] sm:$0xf]
    %v344 = vld [vmem:[%s1 + $0x4e4] sm:$0xf]
    %v345 = vld [vmem:[%s1 + $0x4e8] sm:$0xf]
    %v346 = vld [vmem:[%s1 + $0x4ec] sm:$0xf]
    %v347 = vld [vmem:[%s1 + $0x4f0] sm:$0xf]
    %v348 = vld [vmem:[%s1 + $0x4f4] sm:$0xf]
    %v349 = vld [vmem:[%s1 + $0x4f8] sm:$0xf]
    %v350 = vld [vmem:[%s1 + $0x4fc] sm:$0xf]
    %v351 = vld [vmem:[%s1 + $0x500] sm:$0xf]
    %v352 = vld [vmem:[%s1 + $0x504] sm:$0xf]
    %v353 = vld [vmem:[%s1 + $0x508] sm:$0xf]
    %v354 = vld [vmem:[%s1 + $0x50c] sm:$0xf]
    %v355 = vld [vmem:[%s1 + $0x510] sm:$0xf]
    %v356 = vld [vmem:[%s1 + $0x514] sm:$0xf]
    %v357 = vld [vmem:[%s1 + $0x518] sm:$0xf]
    %v358 = vld [vmem:[%s1 + $0x51c] sm:$0xf]
    %v359 = vld [vmem:[%s1 + $0x520] sm:$0xf]
    %v360 = vld [vmem:[%s1 + $0x524] sm:$0xf]
    %v361 = vld [vmem:[%s1 + $0x528] sm:$0xf]
    %v362 = vld [vmem:[%s1 + $0x52c] sm:$0xf]
    %v363 = vld [vmem:[%s1 + $0x530] sm:$0xf]
    %v364 = vld [vmem:[%s1 + $0x534] sm:$0xf]
    %v365 = vld [vmem:[%s1 + $0x538] sm:$0xf]
    %v366 = vld [vmem:[%s1 + $0x53c] sm:$0xf]
    %v367 = vld [vmem:[%s1 + $0x540] sm:$0xf]
    %v368 = vld [vmem:[%s1 + $0x544] sm:$0xf]
    %v369 = vld [vmem:[%s1 + $0x548] sm:$0xf]
    %v370 = vld [vmem:[%s1 + $0x54c] sm:$0xf]
    %v371 = vld [vmem:[%s1 + $0x550] sm:$0xf]
    %v372 = vld [vmem:[%s1 + $0x554] sm:$0xf]
    %v373 = vld [vmem:[%s1 + $0x558] sm:$0xf]
    %v374 = vld [vmem:[%s1 + $0x55c] sm:$0xf]
    %v375 = vld [vmem:[%s1 + $0x560] sm:$0xf]
    %v376 = vld [vmem:[%s1 + $0x564] sm:$0xf]
    %v377 = vld [vmem:[%s1 + $0x568] sm:$0xf]
    %v378 = vld [vmem:[%s1 + $0x56c] sm:$0xf]
    %v379 = vld [vmem:[%s1 + $0x570] sm:$0xf]
    %v380 = vld [vmem:[%s1 + $0x574] sm:$0xf]
    %v381 = vld [vmem:[%s1 + $0x578] sm:$0xf]
    %v382 = vld [vmem:[%s1 + $0x57c] sm:$0xf]
    %v383 = vld [vmem:[%s1 + $0x580] sm:$0xf]
    %v384 = vld [vmem:[%s1 + $0x584] sm:$0xf]
    %v385 = vld [vmem:[%s1 + $0x588] sm:$0xf]
    %v386 = vld [vmem:[%s1 + $0x58c] sm:$0xf]
    %v387 = vld [vmem:[%s1 + $0x590] sm:$0xf]
    %v388 = vld [vmem:[%s1 + $0x594] sm:$0xf]
    %v389 = vld [vmem:[%s1 + $0x598] sm:$0xf]
    %v390 = vld [vmem:[%s1 + $0x59c] sm:$0xf]
    %v391 = vld [vmem:[%s2] sm:$0x1]
    %v393 = vlaneseq
    %v394 = vshrl.u32 %v393, 7
    %v395 = vsub.s32 0, %v394
    %v396 = vrot.slane %v391, %v395
    %v401 = vcombine.high %v28, %v28
    %v403 = vunpack.c.l.s4 1966171168
    %v404 = vunpack.c.0.s8 %v403
    %v405 = vlaneseq
    %v406 = vshrl.u32 %v405, 7
    %v407 = vsub.s32 %v404, %v406
    %v408 = vrot.slane %v28, %v407
    %v410 = vunpack.c.l.s4 1966171168
    %v411 = vunpack.c.0.s8 %v410
    %v412 = vlaneseq
    %v413 = vshrl.u32 %v412, 7
    %v414 = vsub.s32 %v411, %v413
    %v415 = vrot.slane %v401, %v414
    %v416 = vcombine.high %v408, %v408
    %v417 = vcombine.high %v415, %v415
    %v419 = vunpack.c.l.s4 1966171168
    %v420 = vunpack.c.0.s8 %v419
    %v421 = vlaneseq
    %v422 = vshrl.u32 %v421, 7
    %v423 = vsub.s32 %v420, %v422
    %v424 = vrot.slane %v408, %v423
    %v426 = vunpack.c.l.s4 1966171168
    %v427 = vunpack.c.0.s8 %v426
    %v428 = vlaneseq
    %v429 = vshrl.u32 %v428, 7
    %v430 = vsub.s32 %v427, %v429
    %v431 = vrot.slane %v415, %v430
    %v433 = vunpack.c.l.s4 1966171168
    %v434 = vunpack.c.0.s8 %v433
    %v435 = vlaneseq
    %v436 = vshrl.u32 %v435, 7
    %v437 = vsub.s32 %v434, %v436
    %v438 = vrot.slane %v416, %v437
    %v440 = vunpack.c.l.s4 1966171168
    %v441 = vunpack.c.0.s8 %v440
    %v442 = vlaneseq
    %v443 = vshrl.u32 %v442, 7
    %v444 = vsub.s32 %v441, %v443
    %v445 = vrot.slane %v417, %v444
    %v446 = vcombine.high %v424, %v424
    %v447 = vcombine.high %v431, %v431
    %v448 = vcombine.high %v438, %v438
    %v449 = vcombine.high %v445, %v445
    %v450 = vcombine.high %v29, %v29
    %v452 = vunpack.c.l.s4 1966171168
    %v453 = vunpack.c.0.s8 %v452
    %v454 = vlaneseq
    %v455 = vshrl.u32 %v454, 7
    %v456 = vsub.s32 %v453, %v455
    %v457 = vrot.slane %v29, %v456
    %v459 = vunpack.c.l.s4 1966171168
    %v460 = vunpack.c.0.s8 %v459
    %v461 = vlaneseq
    %v462 = vshrl.u32 %v461, 7
    %v463 = vsub.s32 %v460, %v462
    %v464 = vrot.slane %v450, %v463
    %v465 = vcombine.high %v457, %v457
    %v466 = vcombine.high %v464, %v464
    %v468 = vunpack.c.l.s4 1966171168
    %v469 = vunpack.c.0.s8 %v468
    %v470 = vlaneseq
    %v471 = vshrl.u32 %v470, 7
    %v472 = vsub.s32 %v469, %v471
    %v473 = vrot.slane %v457, %v472
    %v475 = vunpack.c.l.s4 1966171168
    %v476 = vunpack.c.0.s8 %v475
    %v477 = vlaneseq
    %v478 = vshrl.u32 %v477, 7
    %v479 = vsub.s32 %v476, %v478
    %v480 = vrot.slane %v464, %v479
    %v482 = vunpack.c.l.s4 1966171168
    %v483 = vunpack.c.0.s8 %v482
    %v484 = vlaneseq
    %v485 = vshrl.u32 %v484, 7
    %v486 = vsub.s32 %v483, %v485
    %v487 = vrot.slane %v465, %v486
    %v489 = vunpack.c.l.s4 1966171168
    %v490 = vunpack.c.0.s8 %v489
    %v491 = vlaneseq
    %v492 = vshrl.u32 %v491, 7
    %v493 = vsub.s32 %v490, %v492
    %v494 = vrot.slane %v466, %v493
    %v495 = vcombine.high %v473, %v473
    %v496 = vcombine.high %v480, %v480
    %v497 = vcombine.high %v487, %v487
    %v498 = vcombine.high %v494, %v494
    %v499 = vcombine.high %v30, %v30
    %v501 = vunpack.c.l.s4 1966171168
    %v502 = vunpack.c.0.s8 %v501
    %v503 = vlaneseq
    %v504 = vshrl.u32 %v503, 7
    %v505 = vsub.s32 %v502, %v504
    %v506 = vrot.slane %v30, %v505
    %v508 = vunpack.c.l.s4 1966171168
    %v509 = vunpack.c.0.s8 %v508
    %v510 = vlaneseq
    %v511 = vshrl.u32 %v510, 7
    %v512 = vsub.s32 %v509, %v511
    %v513 = vrot.slane %v499, %v512
    %v514 = vcombine.high %v506, %v506
    %v515 = vcombine.high %v513, %v513
    %v517 = vunpack.c.l.s4 1966171168
    %v518 = vunpack.c.0.s8 %v517
    %v519 = vlaneseq
    %v520 = vshrl.u32 %v519, 7
    %v521 = vsub.s32 %v518, %v520
    %v522 = vrot.slane %v506, %v521
    %v524 = vunpack.c.l.s4 1966171168
    %v525 = vunpack.c.0.s8 %v524
    %v526 = vlaneseq
    %v527 = vshrl.u32 %v526, 7
    %v528 = vsub.s32 %v525, %v527
    %v529 = vrot.slane %v513, %v528
    %v531 = vunpack.c.l.s4 1966171168
    %v532 = vunpack.c.0.s8 %v531
    %v533 = vlaneseq
    %v534 = vshrl.u32 %v533, 7
    %v535 = vsub.s32 %v532, %v534
    %v536 = vrot.slane %v514, %v535
    %v538 = vunpack.c.l.s4 1966171168
    %v539 = vunpack.c.0.s8 %v538
    %v540 = vlaneseq
    %v541 = vshrl.u32 %v540, 7
    %v542 = vsub.s32 %v539, %v541
    %v543 = vrot.slane %v515, %v542
    %v544 = vcombine.high %v522, %v522
    %v545 = vcombine.high %v529, %v529
    %v546 = vcombine.high %v536, %v536
    %v929 = vunpack.c.l.b16 %v31
    %v930 = vunpack.c.l.b16 %v32
    %v931 = vunpack.c.l.b16 %v33
    %v932 = vunpack.c.l.b16 %v34
    %v933 = vunpack.c.l.b16 %v35
    %v934 = vunpack.c.l.b16 %v36
    %v935 = vunpack.c.l.b16 %v37
    %v936 = vunpack.c.l.b16 %v38
    %v937 = vunpack.c.l.b16 %v39
    %v938 = vunpack.c.l.b16 %v40
    %v939 = vunpack.c.l.b16 %v41
    %v940 = vunpack.c.l.b16 %v42
    %v941 = vunpack.c.l.b16 %v43
    %v942 = vunpack.c.l.b16 %v44
    %v943 = vunpack.c.l.b16 %v45
    %v944 = vunpack.c.l.b16 %v46
    %v945 = vunpack.c.l.b16 %v47
    %v946 = vunpack.c.l.b16 %v48
    %v947 = vunpack.c.l.b16 %v49
    %v948 = vunpack.c.l.b16 %v50
    %v949 = vunpack.c.l.b16 %v51
    %v950 = vunpack.c.l.b16 %v52
    %v951 = vunpack.c.l.b16 %v53
    %v952 = vunpack.c.l.b16 %v54
    %v953 = vunpack.c.l.b16 %v55
    %v954 = vunpack.c.l.b16 %v56
    %v955 = vunpack.c.l.b16 %v57
    %v956 = vunpack.c.l.b16 %v58
    %v957 = vunpack.c.l.b16 %v59
    %v958 = vunpack.c.l.b16 %v60
    %v959 = vunpack.c.l.b16 %v61
    %v960 = vunpack.c.l.b16 %v62
    %v961 = vunpack.c.l.b16 %v63
    %v962 = vunpack.c.l.b16 %v64
    %v963 = vunpack.c.l.b16 %v65
    %v964 = vunpack.c.l.b16 %v66
    %v965 = vunpack.c.l.b16 %v67
    %v966 = vunpack.c.l.b16 %v68
    %v967 = vunpack.c.l.b16 %v69
    %v968 = vunpack.c.l.b16 %v70
    %v969 = vunpack.c.l.b16 %v71
    %v970 = vunpack.c.l.b16 %v72
    %v971 = vunpack.c.l.b16 %v73
    %v972 = vunpack.c.l.b16 %v74
    %v973 = vunpack.c.l.b16 %v75
    %v974 = vunpack.c.l.b16 %v76
    %v975 = vunpack.c.l.b16 %v77
    %v976 = vunpack.c.l.b16 %v78
    %v977 = vunpack.c.l.b16 %v79
    %v978 = vunpack.c.l.b16 %v80
    %v979 = vunpack.c.l.b16 %v81
    %v980 = vunpack.c.l.b16 %v82
    %v981 = vunpack.c.l.b16 %v83
    %v982 = vunpack.c.l.b16 %v84
    %v983 = vunpack.c.l.b16 %v85
    %v984 = vunpack.c.l.b16 %v86
    %v985 = vunpack.c.l.b16 %v87
    %v986 = vunpack.c.l.b16 %v88
    %v987 = vunpack.c.l.b16 %v89
    %v988 = vunpack.c.l.b16 %v90
    %v989 = vunpack.c.l.b16 %v91
    %v990 = vunpack.c.l.b16 %v92
    %v991 = vunpack.c.l.b16 %v93
    %v992 = vunpack.c.l.b16 %v94
    %v993 = vunpack.c.l.b16 %v95
    %v994 = vunpack.c.l.b16 %v96
    %v995 = vunpack.c.l.b16 %v97
    %v996 = vunpack.c.l.b16 %v98
    %v997 = vunpack.c.l.b16 %v99
    %v998 = vunpack.c.l.b16 %v100
    %v999 = vunpack.c.l.b16 %v101
    %v1000 = vunpack.c.l.b16 %v102
    %v1001 = vunpack.c.l.b16 %v103
    %v1002 = vunpack.c.l.b16 %v104
    %v1003 = vunpack.c.l.b16 %v105
    %v1004 = vunpack.c.l.b16 %v106
    %v1005 = vunpack.c.l.b16 %v107
    %v1006 = vunpack.c.l.b16 %v108
    %v1007 = vunpack.c.l.b16 %v109
    %v1008 = vunpack.c.l.b16 %v110
    %v1009 = vunpack.c.l.b16 %v111
    %v1010 = vunpack.c.l.b16 %v112
    %v1011 = vunpack.c.l.b16 %v113
    %v1012 = vunpack.c.l.b16 %v114
    %v1013 = vunpack.c.l.b16 %v115
    %v1014 = vunpack.c.l.b16 %v116
    %v1015 = vunpack.c.l.b16 %v117
    %v1016 = vunpack.c.l.b16 %v118
    %v1017 = vunpack.c.l.b16 %v119
    %v1018 = vunpack.c.l.b16 %v120
    %v1019 = vunpack.c.l.b16 %v121
    %v1020 = vunpack.c.l.b16 %v122
    %v1021 = vunpack.c.l.b16 %v123
    %v1022 = vunpack.c.l.b16 %v124
    %v1023 = vunpack.c.l.b16 %v125
    %v1024 = vunpack.c.l.b16 %v126
    %v1025 = vunpack.c.l.b16 %v127
    %v1026 = vunpack.c.l.b16 %v128
    %v1027 = vunpack.c.l.b16 %v129
    %v1028 = vunpack.c.l.b16 %v130
    %v1029 = vunpack.c.l.b16 %v131
    %v1030 = vunpack.c.l.b16 %v132
    %v1031 = vunpack.c.l.b16 %v133
    %v1032 = vunpack.c.l.b16 %v134
    %v1033 = vunpack.c.l.b16 %v135
    %v1034 = vunpack.c.l.b16 %v136
    %v1035 = vunpack.c.l.b16 %v137
    %v1036 = vunpack.c.l.b16 %v138
    %v1037 = vunpack.c.l.b16 %v139
    %v1038 = vunpack.c.l.b16 %v140
    %v1039 = vunpack.c.l.b16 %v141
    %v1040 = vunpack.c.l.b16 %v142
    %v1041 = vunpack.c.l.b16 %v143
    %v1042 = vunpack.c.l.b16 %v144
    %v1043 = vunpack.c.l.b16 %v145
    %v1044 = vunpack.c.l.b16 %v146
    %v1045 = vunpack.c.l.b16 %v147
    %v1046 = vunpack.c.l.b16 %v148
    %v1047 = vunpack.c.l.b16 %v149
    %v1048 = vunpack.c.l.b16 %v150
    %v1049 = vunpack.c.l.b16 %v151
    %v1050 = vunpack.c.l.b16 %v152
    %v1051 = vunpack.c.l.b16 %v153
    %v1052 = vunpack.c.l.b16 %v154
    %v1053 = vunpack.c.l.b16 %v155
    %v1054 = vunpack.c.l.b16 %v156
    %v1055 = vunpack.c.l.b16 %v157
    %v1056 = vunpack.c.l.b16 %v158
    %v1057 = vunpack.c.l.b16 %v159
    %v1058 = vunpack.c.l.b16 %v160
    %v1059 = vunpack.c.l.b16 %v161
    %v1060 = vunpack.c.l.b16 %v162
    %v1061 = vunpack.c.l.b16 %v163
    %v1062 = vunpack.c.l.b16 %v164
    %v1063 = vunpack.c.l.b16 %v165
    %v1064 = vunpack.c.l.b16 %v166
    %v1065 = vunpack.c.l.b16 %v167
    %v1066 = vunpack.c.l.b16 %v168
    %v1067 = vunpack.c.l.b16 %v169
    %v1068 = vunpack.c.l.b16 %v170
    %v1069 = vunpack.c.l.b16 %v171
    %v1070 = vunpack.c.l.b16 %v172
    %v1071 = vunpack.c.l.b16 %v173
    %v1072 = vunpack.c.l.b16 %v174
    %v1073 = vunpack.c.l.b16 %v175
    %v1074 = vunpack.c.l.b16 %v176
    %v1075 = vunpack.c.l.b16 %v177
    %v1076 = vunpack.c.l.b16 %v178
    %v1077 = vunpack.c.l.b16 %v179
    %v1078 = vunpack.c.l.b16 %v180
    %v1079 = vunpack.c.l.b16 %v181
    %v1080 = vunpack.c.l.b16 %v182
    %v1081 = vunpack.c.l.b16 %v183
    %v1082 = vunpack.c.l.b16 %v184
    %v1083 = vunpack.c.l.b16 %v185
    %v1084 = vunpack.c.l.b16 %v186
    %v1085 = vunpack.c.l.b16 %v187
    %v1086 = vunpack.c.l.b16 %v188
    %v1087 = vunpack.c.l.b16 %v189
    %v1088 = vunpack.c.l.b16 %v190
    %v1089 = vunpack.c.l.b16 %v191
    %v1090 = vunpack.c.l.b16 %v192
    %v1091 = vunpack.c.l.b16 %v193
    %v1092 = vunpack.c.l.b16 %v194
    %v1093 = vunpack.c.l.b16 %v195
    %v1094 = vunpack.c.l.b16 %v196
    %v1095 = vunpack.c.l.b16 %v197
    %v1096 = vunpack.c.l.b16 %v198
    %v1097 = vunpack.c.l.b16 %v199
    %v1098 = vunpack.c.l.b16 %v200
    %v1099 = vunpack.c.l.b16 %v201
    %v1100 = vunpack.c.l.b16 %v202
    %v1101 = vunpack.c.l.b16 %v203
    %v1102 = vunpack.c.l.b16 %v204
    %v1103 = vunpack.c.l.b16 %v205
    %v1104 = vunpack.c.l.b16 %v206
    %v1105 = vunpack.c.l.b16 %v207
    %v1106 = vunpack.c.l.b16 %v208
    %v1107 = vunpack.c.l.b16 %v209
    %v1108 = vunpack.c.l.b16 %v210
    %v1109 = vunpack.c.l.b16 %v211
    %v1110 = vunpack.c.l.b16 %v212
    %v1111 = vunpack.c.l.b16 %v213
    %v1112 = vunpack.c.l.b16 %v214
    %v1113 = vunpack.c.l.b16 %v215
    %v1114 = vunpack.c.l.b16 %v216
    %v1115 = vunpack.c.l.b16 %v217
    %v1116 = vunpack.c.l.b16 %v218
    %v1117 = vunpack.c.l.b16 %v219
    %v1118 = vunpack.c.l.b16 %v220
    %v1119 = vunpack.c.l.b16 %v221
    %v1120 = vunpack.c.l.b16 %v222
    %v1121 = vunpack.c.l.b16 %v223
    %v1122 = vunpack.c.l.b16 %v224
    %v1123 = vunpack.c.l.b16 %v225
    %v1124 = vunpack.c.l.b16 %v226
    %v1125 = vunpack.c.l.b16 %v227
    %v1126 = vunpack.c.l.b16 %v228
    %v1127 = vunpack.c.l.b16 %v229
    %v1128 = vunpack.c.l.b16 %v230
    %v1129 = vunpack.c.l.b16 %v231
    %v1130 = vunpack.c.l.b16 %v232
    %v1131 = vunpack.c.l.b16 %v233
    %v1132 = vunpack.c.l.b16 %v234
    %v1133 = vunpack.c.l.b16 %v235
    %v1134 = vunpack.c.l.b16 %v236
    %v1135 = vunpack.c.l.b16 %v237
    %v1136 = vunpack.c.l.b16 %v238
    %v1137 = vunpack.c.l.b16 %v239
    %v1138 = vunpack.c.l.b16 %v240
    %v1139 = vunpack.c.l.b16 %v241
    %v1140 = vunpack.c.l.b16 %v242
    %v1141 = vunpack.c.l.b16 %v243
    %v1142 = vunpack.c.l.b16 %v244
    %v1143 = vunpack.c.l.b16 %v245
    %v1144 = vunpack.c.l.b16 %v246
    %v1145 = vunpack.c.l.b16 %v247
    %v1146 = vunpack.c.l.b16 %v248
    %v1147 = vunpack.c.l.b16 %v249
    %v1148 = vunpack.c.l.b16 %v250
    %v1149 = vunpack.c.l.b16 %v251
    %v1150 = vunpack.c.l.b16 %v252
    %v1151 = vunpack.c.l.b16 %v253
    %v1152 = vunpack.c.l.b16 %v254
    %v1153 = vunpack.c.l.b16 %v255
    %v1154 = vunpack.c.l.b16 %v256
    %v1155 = vunpack.c.l.b16 %v257
    %v1156 = vunpack.c.l.b16 %v258
    %v1157 = vunpack.c.l.b16 %v259
    %v1158 = vunpack.c.l.b16 %v260
    %v1159 = vunpack.c.l.b16 %v261
    %v1160 = vunpack.c.l.b16 %v262
    %v1161 = vunpack.c.l.b16 %v263
    %v1162 = vunpack.c.l.b16 %v264
    %v1163 = vunpack.c.l.b16 %v265
    %v1164 = vunpack.c.l.b16 %v266
    %v1165 = vunpack.c.l.b16 %v267
    %v1166 = vunpack.c.l.b16 %v268
    %v1167 = vunpack.c.l.b16 %v269
    %v1168 = vunpack.c.l.b16 %v270
    %v1169 = vunpack.c.l.b16 %v271
    %v1170 = vunpack.c.l.b16 %v272
    %v1171 = vunpack.c.l.b16 %v273
    %v1172 = vunpack.c.l.b16 %v274
    %v1173 = vunpack.c.l.b16 %v275
    %v1174 = vunpack.c.l.b16 %v276
    %v1175 = vunpack.c.l.b16 %v277
    %v1176 = vunpack.c.l.b16 %v278
    %v1177 = vunpack.c.l.b16 %v279
    %v1178 = vunpack.c.l.b16 %v280
    %v1179 = vunpack.c.l.b16 %v281
    %v1180 = vunpack.c.l.b16 %v282
    %v1181 = vunpack.c.l.b16 %v283
    %v1182 = vunpack.c.l.b16 %v284
    %v1183 = vunpack.c.l.b16 %v285
    %v1184 = vunpack.c.l.b16 %v286
    %v1185 = vunpack.c.l.b16 %v287
    %v1186 = vunpack.c.l.b16 %v288
    %v1187 = vunpack.c.l.b16 %v289
    %v1188 = vunpack.c.l.b16 %v290
    %v1189 = vunpack.c.l.b16 %v291
    %v1190 = vunpack.c.l.b16 %v292
    %v1191 = vunpack.c.l.b16 %v293
    %v1192 = vunpack.c.l.b16 %v294
    %v1193 = vunpack.c.l.b16 %v295
    %v1194 = vunpack.c.l.b16 %v296
    %v1195 = vunpack.c.l.b16 %v297
    %v1196 = vunpack.c.l.b16 %v298
    %v1197 = vunpack.c.l.b16 %v299
    %v1198 = vunpack.c.l.b16 %v300
    %v1199 = vunpack.c.l.b16 %v301
    %v1200 = vunpack.c.l.b16 %v302
    %v1201 = vunpack.c.l.b16 %v303
    %v1202 = vunpack.c.l.b16 %v304
    %v1203 = vunpack.c.l.b16 %v305
    %v1204 = vunpack.c.l.b16 %v306
    %v1205 = vunpack.c.l.b16 %v307
    %v1206 = vunpack.c.l.b16 %v308
    %v1207 = vunpack.c.l.b16 %v309
    %v1208 = vunpack.c.l.b16 %v310
    %v1209 = vunpack.c.l.b16 %v311
    %v1210 = vunpack.c.l.b16 %v312
    %v1211 = vunpack.c.l.b16 %v313
    %v1212 = vunpack.c.l.b16 %v314
    %v1213 = vunpack.c.l.b16 %v315
    %v1214 = vunpack.c.l.b16 %v316
    %v1215 = vunpack.c.l.b16 %v317
    %v1216 = vunpack.c.l.b16 %v318
    %v1217 = vunpack.c.l.b16 %v319
    %v1218 = vunpack.c.l.b16 %v320
    %v1219 = vunpack.c.l.b16 %v321
    %v1220 = vunpack.c.l.b16 %v322
    %v1221 = vunpack.c.l.b16 %v323
    %v1222 = vunpack.c.l.b16 %v324
    %v1223 = vunpack.c.l.b16 %v325
    %v1224 = vunpack.c.l.b16 %v326
    %v1225 = vunpack.c.l.b16 %v327
    %v1226 = vunpack.c.l.b16 %v328
    %v1227 = vunpack.c.l.b16 %v329
    %v1228 = vunpack.c.l.b16 %v330
    %v1229 = vunpack.c.l.b16 %v331
    %v1230 = vunpack.c.l.b16 %v332
    %v1231 = vunpack.c.l.b16 %v333
    %v1232 = vunpack.c.l.b16 %v334
    %v1233 = vunpack.c.l.b16 %v335
    %v1234 = vunpack.c.l.b16 %v336
    %v1235 = vunpack.c.l.b16 %v337
    %v1236 = vunpack.c.l.b16 %v338
    %v1237 = vunpack.c.l.b16 %v339
    %v1238 = vunpack.c.l.b16 %v340
    %v1239 = vunpack.c.l.b16 %v341
    %v1240 = vunpack.c.l.b16 %v342
    %v1241 = vunpack.c.l.b16 %v343
    %v1242 = vunpack.c.l.b16 %v344
    %v1243 = vunpack.c.l.b16 %v345
    %v1244 = vunpack.c.l.b16 %v346
    %v1245 = vunpack.c.l.b16 %v347
    %v1246 = vunpack.c.l.b16 %v348
    %v1247 = vunpack.c.l.b16 %v349
    %v1248 = vunpack.c.l.b16 %v350
    %v1249 = vunpack.c.l.b16 %v351
    %v1250 = vunpack.c.l.b16 %v352
    %v1251 = vunpack.c.l.b16 %v353
    %v1252 = vunpack.c.l.b16 %v354
    %v1253 = vunpack.c.l.b16 %v355
    %v1254 = vunpack.c.l.b16 %v356
    %v1255 = vunpack.c.l.b16 %v357
    %v1256 = vunpack.c.l.b16 %v358
    %v1257 = vunpack.c.l.b16 %v359
    %v1258 = vunpack.c.l.b16 %v360
    %v1259 = vunpack.c.l.b16 %v361
    %v1260 = vunpack.c.l.b16 %v362
    %v1261 = vunpack.c.l.b16 %v363
    %v1262 = vunpack.c.l.b16 %v364
    %v1263 = vunpack.c.l.b16 %v365
    %v1264 = vunpack.c.l.b16 %v366
    %v1265 = vunpack.c.l.b16 %v367
    %v1266 = vunpack.c.l.b16 %v368
    %v1267 = vunpack.c.l.b16 %v369
    %v1268 = vunpack.c.l.b16 %v370
    %v1269 = vunpack.c.l.b16 %v371
    %v1270 = vunpack.c.l.b16 %v372
    %v1271 = vunpack.c.l.b16 %v373
    %v1272 = vunpack.c.l.b16 %v374
    %v1273 = vunpack.c.l.b16 %v375
    %v1274 = vunpack.c.l.b16 %v376
    %v1275 = vunpack.c.l.b16 %v377
    %v1276 = vunpack.c.l.b16 %v378
    %v1277 = vunpack.c.l.b16 %v379
    %v1278 = vunpack.c.l.b16 %v380
    %v1279 = vunpack.c.l.b16 %v381
    %v1280 = vunpack.c.l.b16 %v382
    %v1281 = vunpack.c.l.b16 %v383
    %v1282 = vunpack.c.l.b16 %v384
    %v1283 = vunpack.c.l.b16 %v385
    %v1284 = vunpack.c.l.b16 %v386
    %v1285 = vunpack.c.l.b16 %v387
    %v1286 = vunpack.c.l.b16 %v388
    %v1287 = vunpack.c.l.b16 %v389
    %v1288 = vunpack.c.l.b16 %v390
    %v1289 = vpack.c.b16 %v930, %v929
    %v1290 = vpack.c.b16 %v932, %v931
    %v1291 = vpack.c.b16 %v934, %v933
    %v1292 = vpack.c.b16 %v936, %v935
    %v1293 = vpack.c.b16 %v938, %v937
    %v1294 = vpack.c.b16 %v940, %v939
    %v1295 = vpack.c.b16 %v942, %v941
    %v1296 = vpack.c.b16 %v944, %v943
    %v1297 = vpack.c.b16 %v946, %v945
    %v1298 = vpack.c.b16 %v948, %v947
    %v1299 = vpack.c.b16 %v950, %v949
    %v1300 = vpack.c.b16 %v952, %v951
    %v1301 = vpack.c.b16 %v954, %v953
    %v1302 = vpack.c.b16 %v956, %v955
    %v1303 = vpack.c.b16 %v958, %v957
    %v1304 = vpack.c.b16 %v960, %v959
    %v1305 = vpack.c.b16 %v962, %v961
    %v1306 = vpack.c.b16 %v964, %v963
    %v1307 = vpack.c.b16 %v966, %v965
    %v1308 = vpack.c.b16 %v968, %v967
    %v1309 = vpack.c.b16 %v970, %v969
    %v1310 = vpack.c.b16 %v972, %v971
    %v1311 = vpack.c.b16 %v974, %v973
    %v1312 = vpack.c.b16 %v976, %v975
    %v1313 = vpack.c.b16 %v978, %v977
    %v1314 = vpack.c.b16 %v980, %v979
    %v1315 = vpack.c.b16 %v982, %v981
    %v1316 = vpack.c.b16 %v984, %v983
    %v1317 = vpack.c.b16 %v986, %v985
    %v1318 = vpack.c.b16 %v988, %v987
    %v1319 = vpack.c.b16 %v990, %v989
    %v1320 = vpack.c.b16 %v992, %v991
    %v1321 = vpack.c.b16 %v994, %v993
    %v1322 = vpack.c.b16 %v996, %v995
    %v1323 = vpack.c.b16 %v998, %v997
    %v1324 = vpack.c.b16 %v1000, %v999
    %v1325 = vpack.c.b16 %v1002, %v1001
    %v1326 = vpack.c.b16 %v1004, %v1003
    %v1327 = vpack.c.b16 %v1006, %v1005
    %v1328 = vpack.c.b16 %v1008, %v1007
    %v1329 = vpack.c.b16 %v1010, %v1009
    %v1330 = vpack.c.b16 %v1012, %v1011
    %v1331 = vpack.c.b16 %v1014, %v1013
    %v1332 = vpack.c.b16 %v1016, %v1015
    %v1333 = vpack.c.b16 %v1018, %v1017
    %v1334 = vpack.c.b16 %v1020, %v1019
    %v1335 = vpack.c.b16 %v1022, %v1021
    %v1336 = vpack.c.b16 %v1024, %v1023
    %v1337 = vpack.c.b16 %v1026, %v1025
    %v1338 = vpack.c.b16 %v1028, %v1027
    %v1339 = vpack.c.b16 %v1030, %v1029
    %v1340 = vpack.c.b16 %v1032, %v1031
    %v1341 = vpack.c.b16 %v1034, %v1033
    %v1342 = vpack.c.b16 %v1036, %v1035
    %v1343 = vpack.c.b16 %v1038, %v1037
    %v1344 = vpack.c.b16 %v1040, %v1039
    %v1345 = vpack.c.b16 %v1042, %v1041
    %v1346 = vpack.c.b16 %v1044, %v1043
    %v1347 = vpack.c.b16 %v1046, %v1045
    %v1348 = vpack.c.b16 %v1048, %v1047
    %v1349 = vpack.c.b16 %v1050, %v1049
    %v1350 = vpack.c.b16 %v1052, %v1051
    %v1351 = vpack.c.b16 %v1054, %v1053
    %v1352 = vpack.c.b16 %v1056, %v1055
    %v1353 = vpack.c.b16 %v1058, %v1057
    %v1354 = vpack.c.b16 %v1060, %v1059
    %v1355 = vpack.c.b16 %v1062, %v1061
    %v1356 = vpack.c.b16 %v1064, %v1063
    %v1357 = vpack.c.b16 %v1066, %v1065
    %v1358 = vpack.c.b16 %v1068, %v1067
    %v1359 = vpack.c.b16 %v1070, %v1069
    %v1360 = vpack.c.b16 %v1072, %v1071
    %v1361 = vpack.c.b16 %v1074, %v1073
    %v1362 = vpack.c.b16 %v1076, %v1075
    %v1363 = vpack.c.b16 %v1078, %v1077
    %v1364 = vpack.c.b16 %v1080, %v1079
    %v1365 = vpack.c.b16 %v1082, %v1081
    %v1366 = vpack.c.b16 %v1084, %v1083
    %v1367 = vpack.c.b16 %v1086, %v1085
    %v1368 = vpack.c.b16 %v1088, %v1087
    %v1369 = vpack.c.b16 %v1090, %v1089
    %v1370 = vpack.c.b16 %v1092, %v1091
    %v1371 = vpack.c.b16 %v1094, %v1093
    %v1372 = vpack.c.b16 %v1096, %v1095
    %v1373 = vpack.c.b16 %v1098, %v1097
    %v1374 = vpack.c.b16 %v1100, %v1099
    %v1375 = vpack.c.b16 %v1102, %v1101
    %v1376 = vpack.c.b16 %v1104, %v1103
    %v1377 = vpack.c.b16 %v1106, %v1105
    %v1378 = vpack.c.b16 %v1108, %v1107
    %v1379 = vpack.c.b16 %v1110, %v1109
    %v1380 = vpack.c.b16 %v1112, %v1111
    %v1381 = vpack.c.b16 %v1114, %v1113
    %v1382 = vpack.c.b16 %v1116, %v1115
    %v1383 = vpack.c.b16 %v1118, %v1117
    %v1384 = vpack.c.b16 %v1120, %v1119
    %v1385 = vpack.c.b16 %v1122, %v1121
    %v1386 = vpack.c.b16 %v1124, %v1123
    %v1387 = vpack.c.b16 %v1126, %v1125
    %v1388 = vpack.c.b16 %v1128, %v1127
    %v1389 = vpack.c.b16 %v1130, %v1129
    %v1390 = vpack.c.b16 %v1132, %v1131
    %v1391 = vpack.c.b16 %v1134, %v1133
    %v1392 = vpack.c.b16 %v1136, %v1135
    %v1393 = vpack.c.b16 %v1138, %v1137
    %v1394 = vpack.c.b16 %v1140, %v1139
    %v1395 = vpack.c.b16 %v1142, %v1141
    %v1396 = vpack.c.b16 %v1144, %v1143
    %v1397 = vpack.c.b16 %v1146, %v1145
    %v1398 = vpack.c.b16 %v1148, %v1147
    %v1399 = vpack.c.b16 %v1150, %v1149
    %v1400 = vpack.c.b16 %v1152, %v1151
    %v1401 = vpack.c.b16 %v1154, %v1153
    %v1402 = vpack.c.b16 %v1156, %v1155
    %v1403 = vpack.c.b16 %v1158, %v1157
    %v1404 = vpack.c.b16 %v1160, %v1159
    %v1405 = vpack.c.b16 %v1162, %v1161
    %v1406 = vpack.c.b16 %v1164, %v1163
    %v1407 = vpack.c.b16 %v1166, %v1165
    %v1408 = vpack.c.b16 %v1168, %v1167
    %v1409 = vpack.c.b16 %v1170, %v1169
    %v1410 = vpack.c.b16 %v1172, %v1171
    %v1411 = vpack.c.b16 %v1174, %v1173
    %v1412 = vpack.c.b16 %v1176, %v1175
    %v1413 = vpack.c.b16 %v1178, %v1177
    %v1414 = vpack.c.b16 %v1180, %v1179
    %v1415 = vpack.c.b16 %v1182, %v1181
    %v1416 = vpack.c.b16 %v1184, %v1183
    %v1417 = vpack.c.b16 %v1186, %v1185
    %v1418 = vpack.c.b16 %v1188, %v1187
    %v1419 = vpack.c.b16 %v1190, %v1189
    %v1420 = vpack.c.b16 %v1192, %v1191
    %v1421 = vpack.c.b16 %v1194, %v1193
    %v1422 = vpack.c.b16 %v1196, %v1195
    %v1423 = vpack.c.b16 %v1198, %v1197
    %v1424 = vpack.c.b16 %v1200, %v1199
    %v1425 = vpack.c.b16 %v1202, %v1201
    %v1426 = vpack.c.b16 %v1204, %v1203
    %v1427 = vpack.c.b16 %v1206, %v1205
    %v1428 = vpack.c.b16 %v1208, %v1207
    %v1429 = vpack.c.b16 %v1210, %v1209
    %v1430 = vpack.c.b16 %v1212, %v1211
    %v1431 = vpack.c.b16 %v1214, %v1213
    %v1432 = vpack.c.b16 %v1216, %v1215
    %v1433 = vpack.c.b16 %v1218, %v1217
    %v1434 = vpack.c.b16 %v1220, %v1219
    %v1435 = vpack.c.b16 %v1222, %v1221
    %v1436 = vpack.c.b16 %v1224, %v1223
    %v1437 = vpack.c.b16 %v1226, %v1225
    %v1438 = vpack.c.b16 %v1228, %v1227
    %v1439 = vpack.c.b16 %v1230, %v1229
    %v1440 = vpack.c.b16 %v1232, %v1231
    %v1441 = vpack.c.b16 %v1234, %v1233
    %v1442 = vpack.c.b16 %v1236, %v1235
    %v1443 = vpack.c.b16 %v1238, %v1237
    %v1444 = vpack.c.b16 %v1240, %v1239
    %v1445 = vpack.c.b16 %v1242, %v1241
    %v1446 = vpack.c.b16 %v1244, %v1243
    %v1447 = vpack.c.b16 %v1246, %v1245
    %v1448 = vpack.c.b16 %v1248, %v1247
    %v1449 = vpack.c.b16 %v1250, %v1249
    %v1450 = vpack.c.b16 %v1252, %v1251
    %v1451 = vpack.c.b16 %v1254, %v1253
    %v1452 = vpack.c.b16 %v1256, %v1255
    %v1453 = vpack.c.b16 %v1258, %v1257
    %v1454 = vpack.c.b16 %v1260, %v1259
    %v1455 = vpack.c.b16 %v1262, %v1261
    %v1456 = vpack.c.b16 %v1264, %v1263
    %v1457 = vpack.c.b16 %v1266, %v1265
    %v1458 = vpack.c.b16 %v1268, %v1267
    %v1459 = vpack.c.b16 %v1270, %v1269
    %v1460 = vpack.c.b16 %v1272, %v1271
    %v1461 = vpack.c.b16 %v1274, %v1273
    %v1462 = vpack.c.b16 %v1276, %v1275
    %v1463 = vpack.c.b16 %v1278, %v1277
    %v1464 = vpack.c.b16 %v1280, %v1279
    %v1465 = vpack.c.b16 %v1282, %v1281
    %v1466 = vpack.c.b16 %v1284, %v1283
    %v1467 = vpack.c.b16 %v1286, %v1285
    %v1468 = vpack.c.b16 %v1288, %v1287
    %vm1649 = vcmask 523264
    %v1651 = vsel %vm1649, %v545, 0
    %1653 = vmatprep.subr.bf16.mxu0 0
    %1654 = vmatpush1.bf16.msra.mxu0 %v1296
    %1655 = vmatprep.subr.bf16.mxu0 0
    %1656 = vmatpush1.bf16.msra.mxu0 %v1295
    %1657 = vmatprep.subr.bf16.mxu0 0
    %1658 = vmatpush1.bf16.msra.mxu0 %v1294
    %1659 = vmatprep.subr.bf16.mxu0 0
    %1660 = vmatpush1.bf16.msra.mxu0 %v1293
    %1661 = vmatprep.subr.bf16.mxu0 0
    %1662 = vmatpush1.bf16.msra.mxu0 %v1292
    %1663 = vmatprep.subr.bf16.mxu0 0
    %1664 = vmatpush1.bf16.msra.mxu0 %v1291
    %1665 = vmatprep.subr.bf16.mxu0 0
    %1666 = vmatpush1.bf16.msra.mxu0 %v1290
    %1667 = vmatprep.subr.bf16.mxu0 0
    %1668 = vmatpush1.bf16.msra.mxu0 %v1289
    %1669 = vmatprep.subr.bf16.mxu0 0
    %1670 = vmatpush2.bf16.msra.mxu0 %v1304
    %1671 = vmatprep.subr.bf16.mxu0 0
    %1672 = vmatpush2.bf16.msra.mxu0 %v1303
    %1673 = vmatprep.subr.bf16.mxu0 0
    %1674 = vmatpush2.bf16.msra.mxu0 %v1302
    %1675 = vmatprep.subr.bf16.mxu0 0
    %1676 = vmatpush2.bf16.msra.mxu0 %v1301
    %1677 = vmatprep.subr.bf16.mxu0 0
    %1678 = vmatpush2.bf16.msra.mxu0 %v1300
    %1679 = vmatprep.subr.bf16.mxu0 0
    %1680 = vmatpush2.bf16.msra.mxu0 %v1299
    %1681 = vmatprep.subr.bf16.mxu0 0
    %1682 = vmatpush2.bf16.msra.mxu0 %v1298
    %1683 = vmatprep.subr.bf16.mxu0 0
    %1684 = vmatpush2.bf16.msra.mxu0 %v1297
    %1685 = vmatprep.mubr.bf16.mxu0 %v438
    %1686 = vmatmul.mubr.bf16.gmra.mxu0 %v424
    %v1687 = vpop.f32.mrf.mxu0
    %v1688 = vadd.f32 %v396, %v1687
    %v1689 = vpop.f32.mrf.mxu0
    %v1690 = vpop.f32.mrf.mxu0
    %v1691 = vpop.f32.mrf.mxu0
    %1692 = vdwg.mxu0
    %1693 = vmatprep.subr.bf16.mxu0 0
    %1694 = vmatpush1.bf16.msra.mxu0 %v1312
    %1695 = vmatprep.subr.bf16.mxu0 0
    %1696 = vmatpush1.bf16.msra.mxu0 %v1311
    %1697 = vmatprep.subr.bf16.mxu0 0
    %1698 = vmatpush1.bf16.msra.mxu0 %v1310
    %1699 = vmatprep.subr.bf16.mxu0 0
    %1700 = vmatpush1.bf16.msra.mxu0 %v1309
    %1701 = vmatprep.subr.bf16.mxu0 0
    %1702 = vmatpush1.bf16.msra.mxu0 %v1308
    %1703 = vmatprep.subr.bf16.mxu0 0
    %1704 = vmatpush1.bf16.msra.mxu0 %v1307
    %1705 = vmatprep.subr.bf16.mxu0 0
    %1706 = vmatpush1.bf16.msra.mxu0 %v1306
    %1707 = vmatprep.subr.bf16.mxu0 0
    %1708 = vmatpush1.bf16.msra.mxu0 %v1305
    %1709 = vmatprep.subr.bf16.mxu0 0
    %1710 = vmatpush2.bf16.msra.mxu0 %v1320
    %1711 = vmatprep.subr.bf16.mxu0 0
    %1712 = vmatpush2.bf16.msra.mxu0 %v1319
    %1713 = vmatprep.subr.bf16.mxu0 0
    %1714 = vmatpush2.bf16.msra.mxu0 %v1318
    %1715 = vmatprep.subr.bf16.mxu0 0
    %1716 = vmatpush2.bf16.msra.mxu0 %v1317
    %1717 = vmatprep.subr.bf16.mxu0 0
    %1718 = vmatpush2.bf16.msra.mxu0 %v1316
    %1719 = vmatprep.subr.bf16.mxu0 0
    %1720 = vmatpush2.bf16.msra.mxu0 %v1315
    %1721 = vmatprep.subr.bf16.mxu0 0
    %1722 = vmatpush2.bf16.msra.mxu0 %v1314
    %1723 = vmatprep.subr.bf16.mxu0 0
    %1724 = vmatpush2.bf16.msra.mxu0 %v1313
    %1725 = vmatprep.mubr.bf16.mxu0 %v448
    %1726 = vmatmul.mubr.bf16.gmra.mxu0 %v446
    %v1727 = vpop.f32.mrf.mxu0
    %v1728 = vadd.f32 %v1688, %v1727
    %v1729 = vpop.f32.mrf.mxu0
    %v1730 = vpop.f32.mrf.mxu0
    %v1731 = vpop.f32.mrf.mxu0
    %1732 = vdwg.mxu0
    %1733 = vmatprep.subr.bf16.mxu0 0
    %1734 = vmatpush1.bf16.msra.mxu0 %v1328
    %1735 = vmatprep.subr.bf16.mxu0 0
    %1736 = vmatpush1.bf16.msra.mxu0 %v1327
    %1737 = vmatprep.subr.bf16.mxu0 0
    %1738 = vmatpush1.bf16.msra.mxu0 %v1326
    %1739 = vmatprep.subr.bf16.mxu0 0
    %1740 = vmatpush1.bf16.msra.mxu0 %v1325
    %1741 = vmatprep.subr.bf16.mxu0 0
    %1742 = vmatpush1.bf16.msra.mxu0 %v1324
    %1743 = vmatprep.subr.bf16.mxu0 0
    %1744 = vmatpush1.bf16.msra.mxu0 %v1323
    %1745 = vmatprep.subr.bf16.mxu0 0
    %1746 = vmatpush1.bf16.msra.mxu0 %v1322
    %1747 = vmatprep.subr.bf16.mxu0 0
    %1748 = vmatpush1.bf16.msra.mxu0 %v1321
    %1749 = vmatprep.subr.bf16.mxu0 0
    %1750 = vmatpush2.bf16.msra.mxu0 %v1336
    %1751 = vmatprep.subr.bf16.mxu0 0
    %1752 = vmatpush2.bf16.msra.mxu0 %v1335
    %1753 = vmatprep.subr.bf16.mxu0 0
    %1754 = vmatpush2.bf16.msra.mxu0 %v1334
    %1755 = vmatprep.subr.bf16.mxu0 0
    %1756 = vmatpush2.bf16.msra.mxu0 %v1333
    %1757 = vmatprep.subr.bf16.mxu0 0
    %1758 = vmatpush2.bf16.msra.mxu0 %v1332
    %1759 = vmatprep.subr.bf16.mxu0 0
    %1760 = vmatpush2.bf16.msra.mxu0 %v1331
    %1761 = vmatprep.subr.bf16.mxu0 0
    %1762 = vmatpush2.bf16.msra.mxu0 %v1330
    %1763 = vmatprep.subr.bf16.mxu0 0
    %1764 = vmatpush2.bf16.msra.mxu0 %v1329
    %1765 = vmatprep.mubr.bf16.mxu0 %v445
    %1766 = vmatmul.mubr.bf16.gmra.mxu0 %v431
    %v1767 = vpop.f32.mrf.mxu0
    %v1768 = vadd.f32 %v1728, %v1767
    %v1769 = vpop.f32.mrf.mxu0
    %v1770 = vpop.f32.mrf.mxu0
    %v1771 = vpop.f32.mrf.mxu0
    %1772 = vdwg.mxu0
    %1773 = vmatprep.subr.bf16.mxu0 0
    %1774 = vmatpush1.bf16.msra.mxu0 %v1344
    %1775 = vmatprep.subr.bf16.mxu0 0
    %1776 = vmatpush1.bf16.msra.mxu0 %v1343
    %1777 = vmatprep.subr.bf16.mxu0 0
    %1778 = vmatpush1.bf16.msra.mxu0 %v1342
    %1779 = vmatprep.subr.bf16.mxu0 0
    %1780 = vmatpush1.bf16.msra.mxu0 %v1341
    %1781 = vmatprep.subr.bf16.mxu0 0
    %1782 = vmatpush1.bf16.msra.mxu0 %v1340
    %1783 = vmatprep.subr.bf16.mxu0 0
    %1784 = vmatpush1.bf16.msra.mxu0 %v1339
    %1785 = vmatprep.subr.bf16.mxu0 0
    %1786 = vmatpush1.bf16.msra.mxu0 %v1338
    %1787 = vmatprep.subr.bf16.mxu0 0
    %1788 = vmatpush1.bf16.msra.mxu0 %v1337
    %1789 = vmatprep.subr.bf16.mxu0 0
    %1790 = vmatpush2.bf16.msra.mxu0 %v1352
    %1791 = vmatprep.subr.bf16.mxu0 0
    %1792 = vmatpush2.bf16.msra.mxu0 %v1351
    %1793 = vmatprep.subr.bf16.mxu0 0
    %1794 = vmatpush2.bf16.msra.mxu0 %v1350
    %1795 = vmatprep.subr.bf16.mxu0 0
    %1796 = vmatpush2.bf16.msra.mxu0 %v1349
    %1797 = vmatprep.subr.bf16.mxu0 0
    %1798 = vmatpush2.bf16.msra.mxu0 %v1348
    %1799 = vmatprep.subr.bf16.mxu0 0
    %1800 = vmatpush2.bf16.msra.mxu0 %v1347
    %1801 = vmatprep.subr.bf16.mxu0 0
    %1802 = vmatpush2.bf16.msra.mxu0 %v1346
    %1803 = vmatprep.subr.bf16.mxu0 0
    %1804 = vmatpush2.bf16.msra.mxu0 %v1345
    %1805 = vmatprep.mubr.bf16.mxu0 %v449
    %1806 = vmatmul.mubr.bf16.gmra.mxu0 %v447
    %v1807 = vpop.f32.mrf.mxu0
    %v1808 = vadd.f32 %v1768, %v1807
    %v1809 = vpop.f32.mrf.mxu0
    %v1810 = vpop.f32.mrf.mxu0
    %v1811 = vpop.f32.mrf.mxu0
    %1812 = vdwg.mxu0
    %1813 = vmatprep.subr.bf16.mxu0 0
    %1814 = vmatpush1.bf16.msra.mxu0 %v1360
    %1815 = vmatprep.subr.bf16.mxu0 0
    %1816 = vmatpush1.bf16.msra.mxu0 %v1359
    %1817 = vmatprep.subr.bf16.mxu0 0
    %1818 = vmatpush1.bf16.msra.mxu0 %v1358
    %1819 = vmatprep.subr.bf16.mxu0 0
    %1820 = vmatpush1.bf16.msra.mxu0 %v1357
    %1821 = vmatprep.subr.bf16.mxu0 0
    %1822 = vmatpush1.bf16.msra.mxu0 %v1356
    %1823 = vmatprep.subr.bf16.mxu0 0
    %1824 = vmatpush1.bf16.msra.mxu0 %v1355
    %1825 = vmatprep.subr.bf16.mxu0 0
    %1826 = vmatpush1.bf16.msra.mxu0 %v1354
    %1827 = vmatprep.subr.bf16.mxu0 0
    %1828 = vmatpush1.bf16.msra.mxu0 %v1353
    %1829 = vmatprep.subr.bf16.mxu0 0
    %1830 = vmatpush2.bf16.msra.mxu0 %v1368
    %1831 = vmatprep.subr.bf16.mxu0 0
    %1832 = vmatpush2.bf16.msra.mxu0 %v1367
    %1833 = vmatprep.subr.bf16.mxu0 0
    %1834 = vmatpush2.bf16.msra.mxu0 %v1366
    %1835 = vmatprep.subr.bf16.mxu0 0
    %1836 = vmatpush2.bf16.msra.mxu0 %v1365
    %1837 = vmatprep.subr.bf16.mxu0 0
    %1838 = vmatpush2.bf16.msra.mxu0 %v1364
    %1839 = vmatprep.subr.bf16.mxu0 0
    %1840 = vmatpush2.bf16.msra.mxu0 %v1363
    %1841 = vmatprep.subr.bf16.mxu0 0
    %1842 = vmatpush2.bf16.msra.mxu0 %v1362
    %1843 = vmatprep.subr.bf16.mxu0 0
    %1844 = vmatpush2.bf16.msra.mxu0 %v1361
    %1845 = vmatprep.mubr.bf16.mxu0 %v487
    %1846 = vmatmul.mubr.bf16.gmra.mxu0 %v473
    %v1847 = vpop.f32.mrf.mxu0
    %v1848 = vadd.f32 %v1808, %v1847
    %v1849 = vpop.f32.mrf.mxu0
    %v1850 = vpop.f32.mrf.mxu0
    %v1851 = vpop.f32.mrf.mxu0
    %1852 = vdwg.mxu0
    %1853 = vmatprep.subr.bf16.mxu0 0
    %1854 = vmatpush1.bf16.msra.mxu0 %v1376
    %1855 = vmatprep.subr.bf16.mxu0 0
    %1856 = vmatpush1.bf16.msra.mxu0 %v1375
    %1857 = vmatprep.subr.bf16.mxu0 0
    %1858 = vmatpush1.bf16.msra.mxu0 %v1374
    %1859 = vmatprep.subr.bf16.mxu0 0
    %1860 = vmatpush1.bf16.msra.mxu0 %v1373
    %1861 = vmatprep.subr.bf16.mxu0 0
    %1862 = vmatpush1.bf16.msra.mxu0 %v1372
    %1863 = vmatprep.subr.bf16.mxu0 0
    %1864 = vmatpush1.bf16.msra.mxu0 %v1371
    %1865 = vmatprep.subr.bf16.mxu0 0
    %1866 = vmatpush1.bf16.msra.mxu0 %v1370
    %1867 = vmatprep.subr.bf16.mxu0 0
    %1868 = vmatpush1.bf16.msra.mxu0 %v1369
    %1869 = vmatprep.subr.bf16.mxu0 0
    %1870 = vmatpush2.bf16.msra.mxu0 %v1384
    %1871 = vmatprep.subr.bf16.mxu0 0
    %1872 = vmatpush2.bf16.msra.mxu0 %v1383
    %1873 = vmatprep.subr.bf16.mxu0 0
    %1874 = vmatpush2.bf16.msra.mxu0 %v1382
    %1875 = vmatprep.subr.bf16.mxu0 0
    %1876 = vmatpush2.bf16.msra.mxu0 %v1381
    %1877 = vmatprep.subr.bf16.mxu0 0
    %1878 = vmatpush2.bf16.msra.mxu0 %v1380
    %1879 = vmatprep.subr.bf16.mxu0 0
    %1880 = vmatpush2.bf16.msra.mxu0 %v1379
    %1881 = vmatprep.subr.bf16.mxu0 0
    %1882 = vmatpush2.bf16.msra.mxu0 %v1378
    %1883 = vmatprep.subr.bf16.mxu0 0
    %1884 = vmatpush2.bf16.msra.mxu0 %v1377
    %1885 = vmatprep.mubr.bf16.mxu0 %v497
    %1886 = vmatmul.mubr.bf16.gmra.mxu0 %v495
    %v1887 = vpop.f32.mrf.mxu0
    %v1888 = vadd.f32 %v1848, %v1887
    %v1889 = vpop.f32.mrf.mxu0
    %v1890 = vpop.f32.mrf.mxu0
    %v1891 = vpop.f32.mrf.mxu0
    %1892 = vdwg.mxu0
    %1893 = vmatprep.subr.bf16.mxu0 0
    %1894 = vmatpush1.bf16.msra.mxu0 %v1392
    %1895 = vmatprep.subr.bf16.mxu0 0
    %1896 = vmatpush1.bf16.msra.mxu0 %v1391
    %1897 = vmatprep.subr.bf16.mxu0 0
    %1898 = vmatpush1.bf16.msra.mxu0 %v1390
    %1899 = vmatprep.subr.bf16.mxu0 0
    %1900 = vmatpush1.bf16.msra.mxu0 %v1389
    %1901 = vmatprep.subr.bf16.mxu0 0
    %1902 = vmatpush1.bf16.msra.mxu0 %v1388
    %1903 = vmatprep.subr.bf16.mxu0 0
    %1904 = vmatpush1.bf16.msra.mxu0 %v1387
    %1905 = vmatprep.subr.bf16.mxu0 0
    %1906 = vmatpush1.bf16.msra.mxu0 %v1386
    %1907 = vmatprep.subr.bf16.mxu0 0
    %1908 = vmatpush1.bf16.msra.mxu0 %v1385
    %1909 = vmatprep.subr.bf16.mxu0 0
    %1910 = vmatpush2.bf16.msra.mxu0 %v1400
    %1911 = vmatprep.subr.bf16.mxu0 0
    %1912 = vmatpush2.bf16.msra.mxu0 %v1399
    %1913 = vmatprep.subr.bf16.mxu0 0
    %1914 = vmatpush2.bf16.msra.mxu0 %v1398
    %1915 = vmatprep.subr.bf16.mxu0 0
    %1916 = vmatpush2.bf16.msra.mxu0 %v1397
    %1917 = vmatprep.subr.bf16.mxu0 0
    %1918 = vmatpush2.bf16.msra.mxu0 %v1396
    %1919 = vmatprep.subr.bf16.mxu0 0
    %1920 = vmatpush2.bf16.msra.mxu0 %v1395
    %1921 = vmatprep.subr.bf16.mxu0 0
    %1922 = vmatpush2.bf16.msra.mxu0 %v1394
    %1923 = vmatprep.subr.bf16.mxu0 0
    %1924 = vmatpush2.bf16.msra.mxu0 %v1393
    %1925 = vmatprep.mubr.bf16.mxu0 %v494
    %1926 = vmatmul.mubr.bf16.gmra.mxu0 %v480
    %v1927 = vpop.f32.mrf.mxu0
    %v1928 = vadd.f32 %v1888, %v1927
    %v1929 = vpop.f32.mrf.mxu0
    %v1930 = vpop.f32.mrf.mxu0
    %v1931 = vpop.f32.mrf.mxu0
    %1932 = vdwg.mxu0
    %1933 = vmatprep.subr.bf16.mxu0 0
    %1934 = vmatpush1.bf16.msra.mxu0 %v1408
    %1935 = vmatprep.subr.bf16.mxu0 0
    %1936 = vmatpush1.bf16.msra.mxu0 %v1407
    %1937 = vmatprep.subr.bf16.mxu0 0
    %1938 = vmatpush1.bf16.msra.mxu0 %v1406
    %1939 = vmatprep.subr.bf16.mxu0 0
    %1940 = vmatpush1.bf16.msra.mxu0 %v1405
    %1941 = vmatprep.subr.bf16.mxu0 0
    %1942 = vmatpush1.bf16.msra.mxu0 %v1404
    %1943 = vmatprep.subr.bf16.mxu0 0
    %1944 = vmatpush1.bf16.msra.mxu0 %v1403
    %1945 = vmatprep.subr.bf16.mxu0 0
    %1946 = vmatpush1.bf16.msra.mxu0 %v1402
    %1947 = vmatprep.subr.bf16.mxu0 0
    %1948 = vmatpush1.bf16.msra.mxu0 %v1401
    %1949 = vmatprep.subr.bf16.mxu0 0
    %1950 = vmatpush2.bf16.msra.mxu0 %v1416
    %1951 = vmatprep.subr.bf16.mxu0 0
    %1952 = vmatpush2.bf16.msra.mxu0 %v1415
    %1953 = vmatprep.subr.bf16.mxu0 0
    %1954 = vmatpush2.bf16.msra.mxu0 %v1414
    %1955 = vmatprep.subr.bf16.mxu0 0
    %1956 = vmatpush2.bf16.msra.mxu0 %v1413
    %1957 = vmatprep.subr.bf16.mxu0 0
    %1958 = vmatpush2.bf16.msra.mxu0 %v1412
    %1959 = vmatprep.subr.bf16.mxu0 0
    %1960 = vmatpush2.bf16.msra.mxu0 %v1411
    %1961 = vmatprep.subr.bf16.mxu0 0
    %1962 = vmatpush2.bf16.msra.mxu0 %v1410
    %1963 = vmatprep.subr.bf16.mxu0 0
    %1964 = vmatpush2.bf16.msra.mxu0 %v1409
    %1965 = vmatprep.mubr.bf16.mxu0 %v498
    %1966 = vmatmul.mubr.bf16.gmra.mxu0 %v496
    %v1967 = vpop.f32.mrf.mxu0
    %v1968 = vadd.f32 %v1928, %v1967
    %v1969 = vpop.f32.mrf.mxu0
    %v1970 = vpop.f32.mrf.mxu0
    %v1971 = vpop.f32.mrf.mxu0
    %1972 = vdwg.mxu0
    %1973 = vmatprep.subr.bf16.mxu0 0
    %1974 = vmatpush1.bf16.msra.mxu0 %v1424
    %1975 = vmatprep.subr.bf16.mxu0 0
    %1976 = vmatpush1.bf16.msra.mxu0 %v1423
    %1977 = vmatprep.subr.bf16.mxu0 0
    %1978 = vmatpush1.bf16.msra.mxu0 %v1422
    %1979 = vmatprep.subr.bf16.mxu0 0
    %1980 = vmatpush1.bf16.msra.mxu0 %v1421
    %1981 = vmatprep.subr.bf16.mxu0 0
    %1982 = vmatpush1.bf16.msra.mxu0 %v1420
    %1983 = vmatprep.subr.bf16.mxu0 0
    %1984 = vmatpush1.bf16.msra.mxu0 %v1419
    %1985 = vmatprep.subr.bf16.mxu0 0
    %1986 = vmatpush1.bf16.msra.mxu0 %v1418
    %1987 = vmatprep.subr.bf16.mxu0 0
    %1988 = vmatpush1.bf16.msra.mxu0 %v1417
    %1989 = vmatprep.subr.bf16.mxu0 0
    %1990 = vmatpush2.bf16.msra.mxu0 %v1432
    %1991 = vmatprep.subr.bf16.mxu0 0
    %1992 = vmatpush2.bf16.msra.mxu0 %v1431
    %1993 = vmatprep.subr.bf16.mxu0 0
    %1994 = vmatpush2.bf16.msra.mxu0 %v1430
    %1995 = vmatprep.subr.bf16.mxu0 0
    %1996 = vmatpush2.bf16.msra.mxu0 %v1429
    %1997 = vmatprep.subr.bf16.mxu0 0
    %1998 = vmatpush2.bf16.msra.mxu0 %v1428
    %1999 = vmatprep.subr.bf16.mxu0 0
    %2000 = vmatpush2.bf16.msra.mxu0 %v1427
    %2001 = vmatprep.subr.bf16.mxu0 0
    %2002 = vmatpush2.bf16.msra.mxu0 %v1426
    %2003 = vmatprep.subr.bf16.mxu0 0
    %2004 = vmatpush2.bf16.msra.mxu0 %v1425
    %2005 = vmatprep.mubr.bf16.mxu0 %v536
    %2006 = vmatmul.mubr.bf16.gmra.mxu0 %v522
    %v2007 = vpop.f32.mrf.mxu0
    %v2008 = vadd.f32 %v1968, %v2007
    %v2009 = vpop.f32.mrf.mxu0
    %v2010 = vpop.f32.mrf.mxu0
    %v2011 = vpop.f32.mrf.mxu0
    %2012 = vdwg.mxu0
    %2013 = vmatprep.subr.bf16.mxu0 0
    %2014 = vmatpush1.bf16.msra.mxu0 %v1440
    %2015 = vmatprep.subr.bf16.mxu0 0
    %2016 = vmatpush1.bf16.msra.mxu0 %v1439
    %2017 = vmatprep.subr.bf16.mxu0 0
    %2018 = vmatpush1.bf16.msra.mxu0 %v1438
    %2019 = vmatprep.subr.bf16.mxu0 0
    %2020 = vmatpush1.bf16.msra.mxu0 %v1437
    %2021 = vmatprep.subr.bf16.mxu0 0
    %2022 = vmatpush1.bf16.msra.mxu0 %v1436
    %2023 = vmatprep.subr.bf16.mxu0 0
    %2024 = vmatpush1.bf16.msra.mxu0 %v1435
    %2025 = vmatprep.subr.bf16.mxu0 0
    %2026 = vmatpush1.bf16.msra.mxu0 %v1434
    %2027 = vmatprep.subr.bf16.mxu0 0
    %2028 = vmatpush1.bf16.msra.mxu0 %v1433
    %2029 = vmatprep.subr.bf16.mxu0 0
    %2030 = vmatpush2.bf16.msra.mxu0 %v1448
    %2031 = vmatprep.subr.bf16.mxu0 0
    %2032 = vmatpush2.bf16.msra.mxu0 %v1447
    %2033 = vmatprep.subr.bf16.mxu0 0
    %2034 = vmatpush2.bf16.msra.mxu0 %v1446
    %2035 = vmatprep.subr.bf16.mxu0 0
    %2036 = vmatpush2.bf16.msra.mxu0 %v1445
    %2037 = vmatprep.subr.bf16.mxu0 0
    %2038 = vmatpush2.bf16.msra.mxu0 %v1444
    %2039 = vmatprep.subr.bf16.mxu0 0
    %2040 = vmatpush2.bf16.msra.mxu0 %v1443
    %2041 = vmatprep.subr.bf16.mxu0 0
    %2042 = vmatpush2.bf16.msra.mxu0 %v1442
    %2043 = vmatprep.subr.bf16.mxu0 0
    %2044 = vmatpush2.bf16.msra.mxu0 %v1441
    %2045 = vmatprep.mubr.bf16.mxu0 %v546
    %2046 = vmatmul.mubr.bf16.gmra.mxu0 %v544
    %v2047 = vpop.f32.mrf.mxu0
    %v2048 = vadd.f32 %v2008, %v2047
    %v2049 = vpop.f32.mrf.mxu0
    %v2050 = vpop.f32.mrf.mxu0
    %v2051 = vpop.f32.mrf.mxu0
    %2052 = vdwg.mxu0
    %2053 = vmatprep.subr.bf16.mxu0 0
    %2054 = vmatpush1.bf16.msra.mxu0 %v1456
    %2055 = vmatprep.subr.bf16.mxu0 0
    %2056 = vmatpush1.bf16.msra.mxu0 %v1455
    %2057 = vmatprep.subr.bf16.mxu0 0
    %2058 = vmatpush1.bf16.msra.mxu0 %v1454
    %2059 = vmatprep.subr.bf16.mxu0 0
    %2060 = vmatpush1.bf16.msra.mxu0 %v1453
    %2061 = vmatprep.subr.bf16.mxu0 0
    %2062 = vmatpush1.bf16.msra.mxu0 %v1452
    %2063 = vmatprep.subr.bf16.mxu0 0
    %2064 = vmatpush1.bf16.msra.mxu0 %v1451
    %2065 = vmatprep.subr.bf16.mxu0 0
    %2066 = vmatpush1.bf16.msra.mxu0 %v1450
    %2067 = vmatprep.subr.bf16.mxu0 0
    %2068 = vmatpush1.bf16.msra.mxu0 %v1449
    %2069 = vmatprep.subr.bf16.mxu0 0
    %2070 = vmatpush2.bf16.msra.mxu0 %v1464
    %2071 = vmatprep.subr.bf16.mxu0 0
    %2072 = vmatpush2.bf16.msra.mxu0 %v1463
    %2073 = vmatprep.subr.bf16.mxu0 0
    %2074 = vmatpush2.bf16.msra.mxu0 %v1462
    %2075 = vmatprep.subr.bf16.mxu0 0
    %2076 = vmatpush2.bf16.msra.mxu0 %v1461
    %2077 = vmatprep.subr.bf16.mxu0 0
    %2078 = vmatpush2.bf16.msra.mxu0 %v1460
    %2079 = vmatprep.subr.bf16.mxu0 0
    %2080 = vmatpush2.bf16.msra.mxu0 %v1459
    %2081 = vmatprep.subr.bf16.mxu0 0
    %2082 = vmatpush2.bf16.msra.mxu0 %v1458
    %2083 = vmatprep.subr.bf16.mxu0 0
    %2084 = vmatpush2.bf16.msra.mxu0 %v1457
    %2085 = vmatprep.mubr.bf16.mxu0 %v543
    %2086 = vmatmul.mubr.bf16.gmra.mxu0 %v529
    %v2087 = vpop.f32.mrf.mxu0
    %v2088 = vadd.f32 %v2048, %v2087
    %v2089 = vpop.f32.mrf.mxu0
    %v2090 = vpop.f32.mrf.mxu0
    %v2091 = vpop.f32.mrf.mxu0
    %2092 = vdwg.mxu0
    %2093 = vmatprep.subr.bf16.mxu0 0
    %2094 = vmatpush1.bf16.msra.mxu0 0
    %2095 = vmatprep.subr.bf16.mxu0 0
    %2096 = vmatpush1.bf16.msra.mxu0 0
    %2097 = vmatprep.subr.bf16.mxu0 0
    %2098 = vmatpush1.bf16.msra.mxu0 0
    %2099 = vmatprep.subr.bf16.mxu0 0
    %2100 = vmatpush1.bf16.msra.mxu0 0
    %2101 = vmatprep.subr.bf16.mxu0 0
    %2102 = vmatpush1.bf16.msra.mxu0 %v1468
    %2103 = vmatprep.subr.bf16.mxu0 0
    %2104 = vmatpush1.bf16.msra.mxu0 %v1467
    %2105 = vmatprep.subr.bf16.mxu0 0
    %2106 = vmatpush1.bf16.msra.mxu0 %v1466
    %2107 = vmatprep.subr.bf16.mxu0 0
    %2108 = vmatpush1.bf16.msra.mxu0 %v1465
    %2109 = vmatprep.subr.bf16.mxu0 0
    %2110 = vmatpush2.bf16.msra.mxu0 0
    %2111 = vmatprep.subr.bf16.mxu0 0
    %2112 = vmatpush2.bf16.msra.mxu0 0
    %2113 = vmatprep.subr.bf16.mxu0 0
    %2114 = vmatpush2.bf16.msra.mxu0 0
    %2115 = vmatprep.subr.bf16.mxu0 0
    %2116 = vmatpush2.bf16.msra.mxu0 0
    %2117 = vmatprep.subr.bf16.mxu0 0
    %2118 = vmatpush2.bf16.msra.mxu0 0
    %2119 = vmatprep.subr.bf16.mxu0 0
    %2120 = vmatpush2.bf16.msra.mxu0 0
    %2121 = vmatprep.subr.bf16.mxu0 0
    %2122 = vmatpush2.bf16.msra.mxu0 0
    %2123 = vmatprep.subr.bf16.mxu0 0
    %2124 = vmatpush2.bf16.msra.mxu0 0
    %2125 = vmatprep.mubr.bf16.mxu0 0
    %2126 = vmatmul.mubr.bf16.gmra.mxu0 %v1651
    %v2127 = vpop.f32.mrf.mxu0
    %v2128 = vadd.f32 %v2088, %v2127
    %v2129 = vpop.f32.mrf.mxu0
    %v2130 = vpop.f32.mrf.mxu0
    %v2131 = vpop.f32.mrf.mxu0
    %2132 = vdwg.mxu0
    %v2133 = vpack.c.bf16 %v2128, %v2128
    %v2134 = vld [vmem:[%s3] sm:$0xf]
    %v2135 = vld [vmem:[%s3 + $0x4] sm:$0xf]
    %v2136 = vld [vmem:[%s3 + $0x8] sm:$0xf]
    %v2137 = vld [vmem:[%s3 + $0xc] sm:$0xf]
    %v2138 = vld [vmem:[%s3 + $0x10] sm:$0xf]
    %v2139 = vld [vmem:[%s3 + $0x14] sm:$0xf]
    %v2140 = vld [vmem:[%s3 + $0x18] sm:$0xf]
    %v2141 = vld [vmem:[%s3 + $0x1c] sm:$0xf]
    %v2142 = vld [vmem:[%s4] sm:$0x1]
    %v2144 = vlaneseq
    %v2145 = vshrl.u32 %v2144, 7
    %v2146 = vsub.s32 0, %v2145
    %v2147 = vrot.slane %v2142, %v2146
    %v2157 = vunpack.c.l.b16 %v2134
    %v2158 = vunpack.c.l.b16 %v2135
    %v2159 = vunpack.c.l.b16 %v2136
    %v2160 = vunpack.c.l.b16 %v2137
    %v2161 = vunpack.c.l.b16 %v2138
    %v2162 = vunpack.c.l.b16 %v2139
    %v2163 = vunpack.c.l.b16 %v2140
    %v2164 = vunpack.c.l.b16 %v2141
    %v2165 = vpack.c.b16 %v2158, %v2157
    %v2166 = vpack.c.b16 %v2160, %v2159
    %v2167 = vpack.c.b16 %v2162, %v2161
    %v2168 = vpack.c.b16 %v2164, %v2163
    %v2174 = vsel %vm1649, %v2133, 0
    %2176 = vmatprep.subr.bf16.mxu0 0
    %2177 = vmatpush1.bf16.msra.mxu0 0
    %2178 = vmatprep.subr.bf16.mxu0 0
    %2179 = vmatpush1.bf16.msra.mxu0 0
    %2180 = vmatprep.subr.bf16.mxu0 0
    %2181 = vmatpush1.bf16.msra.mxu0 0
    %2182 = vmatprep.subr.bf16.mxu0 0
    %2183 = vmatpush1.bf16.msra.mxu0 0
    %2184 = vmatprep.subr.bf16.mxu0 0
    %2185 = vmatpush1.bf16.msra.mxu0 %v2168
    %2186 = vmatprep.subr.bf16.mxu0 0
    %2187 = vmatpush1.bf16.msra.mxu0 %v2167
    %2188 = vmatprep.subr.bf16.mxu0 0
    %2189 = vmatpush1.bf16.msra.mxu0 %v2166
    %2190 = vmatprep.subr.bf16.mxu0 0
    %2191 = vmatpush1.bf16.msra.mxu0 %v2165
    %2192 = vmatprep.subr.bf16.mxu0 0
    %2193 = vmatpush2.bf16.msra.mxu0 0
    %2194 = vmatprep.subr.bf16.mxu0 0
    %2195 = vmatpush2.bf16.msra.mxu0 0
    %2196 = vmatprep.subr.bf16.mxu0 0
    %2197 = vmatpush2.bf16.msra.mxu0 0
    %2198 = vmatprep.subr.bf16.mxu0 0
    %2199 = vmatpush2.bf16.msra.mxu0 0
    %2200 = vmatprep.subr.bf16.mxu0 0
    %2201 = vmatpush2.bf16.msra.mxu0 0
    %2202 = vmatprep.subr.bf16.mxu0 0
    %2203 = vmatpush2.bf16.msra.mxu0 0
    %2204 = vmatprep.subr.bf16.mxu0 0
    %2205 = vmatpush2.bf16.msra.mxu0 0
    %2206 = vmatprep.subr.bf16.mxu0 0
    %2207 = vmatpush2.bf16.msra.mxu0 0
    %2208 = vmatprep.mubr.bf16.mxu0 0
    %2209 = vmatmul.mubr.bf16.gmra.mxu0 %v2174
    %v2210 = vpop.f32.mrf.mxu0
    %v2211 = vadd.f32 %v2147, %v2210
    %v2212 = vpop.f32.mrf.mxu0
    %v2213 = vpop.f32.mrf.mxu0
    %v2214 = vpop.f32.mrf.mxu0
    %2215 = vdwg.mxu0
    %v2216 = vpack.c.bf16 %v2211, %v2211
    %v2217 = vld [vmem:[%s5] sm:$0xf]
    %v2218 = vld [vmem:[%s5 + $0x4] sm:$0xf]
    %v2219 = vld [vmem:[%s5 + $0x8] sm:$0xf]
    %v2220 = vld [vmem:[%s5 + $0xc] sm:$0xf]
    %v2221 = vld [vmem:[%s6] sm:$0x1]
    %v2223 = vlaneseq
    %v2224 = vshrl.u32 %v2223, 7
    %v2225 = vsub.s32 0, %v2224
    %v2226 = vrot.slane %v2221, %v2225
    %v2232 = vunpack.c.l.b16 %v2217
    %v2233 = vunpack.c.l.b16 %v2218
    %v2234 = vunpack.c.l.b16 %v2219
    %v2235 = vunpack.c.l.b16 %v2220
    %v2236 = vpack.c.b16 %v2233, %v2232
    %v2237 = vpack.c.b16 %v2235, %v2234
    %vm2240 = vcmask 261120
    %v2242 = vsel %vm2240, %v2216, 0
    %2244 = vmatprep.subr.bf16.mxu0 0
    %2245 = vmatpush1.bf16.msra.mxu0 0
    %2246 = vmatprep.subr.bf16.mxu0 0
    %2247 = vmatpush1.bf16.msra.mxu0 0
    %2248 = vmatprep.subr.bf16.mxu0 0
    %2249 = vmatpush1.bf16.msra.mxu0 0
    %2250 = vmatprep.subr.bf16.mxu0 0
    %2251 = vmatpush1.bf16.msra.mxu0 0
    %2252 = vmatprep.subr.bf16.mxu0 0
    %2253 = vmatpush1.bf16.msra.mxu0 0
    %2254 = vmatprep.subr.bf16.mxu0 0
    %2255 = vmatpush1.bf16.msra.mxu0 0
    %2256 = vmatprep.subr.bf16.mxu0 0
    %2257 = vmatpush1.bf16.msra.mxu0 %v2237
    %2258 = vmatprep.subr.bf16.mxu0 0
    %2259 = vmatpush1.bf16.msra.mxu0 %v2236
    %2260 = vmatprep.subr.bf16.mxu0 0
    %2261 = vmatpush2.bf16.msra.mxu0 0
    %2262 = vmatprep.subr.bf16.mxu0 0
    %2263 = vmatpush2.bf16.msra.mxu0 0
    %2264 = vmatprep.subr.bf16.mxu0 0
    %2265 = vmatpush2.bf16.msra.mxu0 0
    %2266 = vmatprep.subr.bf16.mxu0 0
    %2267 = vmatpush2.bf16.msra.mxu0 0
    %2268 = vmatprep.subr.bf16.mxu0 0
    %2269 = vmatpush2.bf16.msra.mxu0 0
    %2270 = vmatprep.subr.bf16.mxu0 0
    %2271 = vmatpush2.bf16.msra.mxu0 0
    %2272 = vmatprep.subr.bf16.mxu0 0
    %2273 = vmatpush2.bf16.msra.mxu0 0
    %2274 = vmatprep.subr.bf16.mxu0 0
    %2275 = vmatpush2.bf16.msra.mxu0 0
    %2276 = vmatprep.mubr.bf16.mxu0 0
    %2277 = vmatmul.mubr.bf16.gmra.mxu0 %v2242
    %v2278 = vpop.f32.mrf.mxu0
    %v2279 = vadd.f32 %v2226, %v2278
    %v2280 = vpop.f32.mrf.mxu0
    %v2281 = vpop.f32.mrf.mxu0
    %v2282 = vpop.f32.mrf.mxu0
    %2283 = vdwg.mxu0
    %vm2284 = vcmask 74752
    %2285 = vst.msk [vmem:[#allocation2] sm:$0x3] %vm2284, %v2279
    // Predicated region
    $region30: #{picture_net_forward.7} parent=1 // pred_check
      _
    $region31: #{picture_net_forward.7} parent=1 // pred_check_branch
      %2287 = sbr.rel (0) target = $region33
    $region32: #{picture_net_forward.7} parent=1 // pred_region
      %s2289 = ssub.s32 32, 32
      %2290 = vsyncadd [#allocation3], %s2289
      %s2292 = sshll.u32 [#allocation2], 4
      %s2293 = int_to_ptr.vmem [resolvable:$true] %s2292
      %2295 = dma.vmem_to_hbm [thread:$0]  %s2293, 32, %s7, [#allocation3]
    $region33: #{picture_net_forward.7} parent=1 // pred_fallthru
      _
    // Predicated region
    $region34: #{picture_net_forward.7} parent=1 // pred_check
      _
    $region35: #{picture_net_forward.7} parent=1 // pred_check_branch
      %2297 = sbr.rel (0) target = $region37
    $region36: #{picture_net_forward.7} parent=1 // pred_region
      %2298 = dma.done [#allocation3], 32
    $region37: #{picture_net_forward.7} parent=1 // pred_fallthru
      _
    %2299 = vsyncpa [#allocation3], 1

</llo_original>
